<compile_context>
chip_gen: v5e
topology: v5e:2x2
jax: 0.10.0
libtpu: 0.0.40
codegen_flags: <defaults>
</compile_context>

<pallas_src>
import functools

import jax
import jax.numpy as jnp
from jax.experimental import pallas as pl
from jax.experimental.pallas import tpu as pltpu


# ----------------------------------------------------------------------------
# helpers
# ----------------------------------------------------------------------------
def _round_up(x, m):
    return ((x + m - 1) // m) * m


def _pad_channels(c):
    """Pad the input-channel count to a power of two (<=128 it divides 128, so
    per-tap lane slices of the packed patch never straddle a vreg lane tile)."""
    if c >= 128:
        return _round_up(c, 128)
    p = 1
    while p < c:
        p *= 2
    return p


def _pick_row_tile(ho, wo, target_rows):
    """Largest divisor `th` of `ho` with th*wo a multiple of 8 (or th == ho) and
    th*wo <= target_rows (big M tiles amortise per-grid-step overhead)."""
    cands = [t for t in range(1, ho + 1)
             if ho % t == 0 and ((t * wo) % 8 == 0 or t == ho)]
    fits = [t for t in cands if t * wo <= target_rows]
    return max(fits) if fits else min(cands)


def _vmem_limit_bytes(s, hq, wq, cin_p, kp, np_, hw, thw):
    """VMEM budget from the actual (tiled) buffer sizes, capped at 56 MiB (v7x
    has 64 MiB of physical VMEM)."""
    in_blk = s * s * hq * _round_up(wq, 16) * _round_up(cin_p, 128) * 2   # bf16
    w_blk = _round_up(kp, 16) * np_ * 2
    out_blk = _round_up(hw, 8) * np_ * 4                                  # f32
    patch = _round_up(thw, 16) * _round_up(kp, 128) * 2
    params = 4 * 8 * np_ * 4
    est = 2 * in_blk + 2 * w_blk + 2 * out_blk + patch + params + (2 << 20)
    return min(56 * 1024 * 1024, max(est, 32 * 1024 * 1024))


# ----------------------------------------------------------------------------
# fused kernel: conv (+bias) -> per-channel sum-of-squares -> FRN + TLU epilogue
# ----------------------------------------------------------------------------
def _conv_frn_tlu_kernel(x_ref, w_ref, b_ref, g_ref, bt_ref, t_ref,
                         o_ref, patch_ref, ssq_ref,
                         *, k, stride, th, wo, cin_p, n_m, inv_hw, eps):
    m = pl.program_id(1)
    thw = th * wo

    @pl.when(m == 0)
    def _():
        ssq_ref[...] = jnp.zeros_like(ssq_ref)

    row0 = pl.multiple_of(m * th, th)

    # ---- im2col into VMEM: fold the k*k taps into the contraction dim. ----
    for ki in range(k):
        qi, pi = divmod(ki, stride)
        for kj in range(k):
            qj, pj = divmod(kj, stride)
            p = pi * stride + pj
            tap = ki * k + kj
            # (th, wo, cin_p) bf16 window; unit stride regardless of conv stride.
            win = x_ref[0, p, pl.ds(row0 + qi, th), qj:qj + wo, :]
            patch_ref[:, tap * cin_p:(tap + 1) * cin_p] = win.reshape(thw, cin_p)

    # ---- one MXU matmul over K = k*k*cin_p, f32 accumulation, bias fused. ----
    acc = jnp.dot(patch_ref[...], w_ref[...],
                  preferred_element_type=jnp.float32) + b_ref[...]

    r_out = pl.multiple_of(m * thw, thw)
    o_ref[0, pl.ds(r_out, thw), :] = acc
    # Fused FRN reduction (per-channel sum of squares), accumulated across m.
    ssq_ref[...] += jnp.sum(acc * acc, axis=0, keepdims=True)

    # ---- FRN + TLU, applied in place on the resident VMEM output block. ----
    @pl.when(m == n_m - 1)
    def _():
        scale = g_ref[...] * jax.lax.rsqrt(ssq_ref[...] * inv_hw + eps)
        beta = bt_ref[...]
        tau = t_ref[...]
        for ti in range(n_m):           # n_m is small (whole block fits VMEM)
            y = o_ref[0, ti * thw:(ti + 1) * thw, :]
            o_ref[0, ti * thw:(ti + 1) * thw, :] = jnp.maximum(y * scale + beta, tau)


# ----------------------------------------------------------------------------
# ConvInstRelu forward (reflection pad + conv + FRN + TLU)
# ----------------------------------------------------------------------------
def conv_inst_relu(x, w, b, gamma, beta, tau, *, stride=1, eps=1e-6):
    """x: (B, Cin, H, W) f32 NCHW. Returns (B, Cout, Ho, Wo) f32 NCHW."""
    B, Cin, H, W = x.shape
    Cout = w.shape[0]
    k = w.shape[-1]
    pad = k // 2
    s = int(stride)

    # ---- Wrapper-side layout glue (one fused XLA copy of the input):
    # NCHW->NHWC, reflection pad, stride-phase split, channel pad, bf16 cast.
    # TODO(synk): fold the reflection pad / phase split into in-kernel DMA index
    # handling to drop this prelude copy entirely.
    xh = jnp.transpose(x, (0, 2, 3, 1))
    if pad > 0:
        xh = jnp.pad(xh, ((0, 0), (pad, pad), (pad, pad), (0, 0)), mode="reflect")
    Hp, Wp = xh.shape[1], xh.shape[2]
    Ho = (Hp - k) // s + 1
    Wo = (Wp - k) // s + 1
    Hq = -(-Hp // s)
    Wq = -(-Wp // s)
    Cin_p = _pad_channels(Cin)
    xh = jnp.pad(xh, ((0, 0), (0, Hq * s - Hp), (0, Wq * s - Wp), (0, Cin_p - Cin)))
    # (B, s*s, Hq, Wq, Cin_p) with phase p = (ki % s)*s + (kj % s).
    xr = (xh.reshape(B, Hq, s, Wq, s, Cin_p)
             .transpose(0, 2, 4, 1, 3, 5)
             .reshape(B, s * s, Hq, Wq, Cin_p)
             .astype(jnp.bfloat16))

    # ---- Weights / params: taps folded into K; Cout padded to 128 lanes. ----
    Np = _round_up(Cout, 128)
    Kp = k * k * Cin_p
    wt = jnp.transpose(w, (2, 3, 1, 0))                        # (k, k, Cin, Cout)
    wt = jnp.pad(wt, ((0, 0), (0, 0), (0, Cin_p - Cin), (0, Np - Cout)))
    wt = wt.reshape(Kp, Np).astype(jnp.bfloat16)
    bp = jnp.pad(b, (0, Np - Cout)).reshape(1, Np).astype(jnp.float32)
    gp = jnp.pad(gamma, (0, Np - Cout)).reshape(1, Np).astype(jnp.float32)
    btp = jnp.pad(beta, (0, Np - Cout)).reshape(1, Np).astype(jnp.float32)
    tp = jnp.pad(tau, (0, Np - Cout)).reshape(1, Np).astype(jnp.float32)

    # ---- Tiling: large M tiles, bounded by the patch-scratch budget. ----
    patch_row_bytes = _round_up(Kp, 128) * 2
    target_rows = min(2048, max(8, (6 * 1024 * 1024) // patch_row_bytes))
    TH = _pick_row_tile(Ho, Wo, target_rows)
    THW = TH * Wo
    HW = Ho * Wo
    n_m = Ho // TH

    # TODO(synk): for images whose (HW, Np) activation exceeds the VMEM budget,
    # fall back to a two-pass (conv+ssq, then FRN+TLU) pipeline with halo-tiled
    # input DMA instead of the resident output block.
    # TODO(synk): for B == 1 on 2-TensorCore chips, split the row axis across
    # cores with per-core partial ssq reduced before the epilogue.
    vmem_limit = _vmem_limit_bytes(s, Hq, Wq, Cin_p, Kp, Np, HW, THW)

    out = pl.pallas_call(
        functools.partial(_conv_frn_tlu_kernel, k=k, stride=s, th=TH, wo=Wo,
                          cin_p=Cin_p, n_m=n_m, inv_hw=1.0 / float(HW),
                          eps=abs(float(eps))),
        out_shape=jax.ShapeDtypeStruct((B, HW, Np), jnp.float32),
        grid_spec=pltpu.PrefetchScalarGridSpec(
            num_scalar_prefetch=0,
            grid=(B, n_m),
            in_specs=[
                # Whole padded image per batch element; constant over the m axis
                # -> DMA'd from HBM once per batch element and reused.
                pl.BlockSpec((1, s * s, Hq, Wq, Cin_p),
                             lambda bi, mi: (bi, 0, 0, 0, 0)),
                pl.BlockSpec((Kp, Np), lambda bi, mi: (0, 0)),
                pl.BlockSpec((1, Np), lambda bi, mi: (0, 0)),
                pl.BlockSpec((1, Np), lambda bi, mi: (0, 0)),
                pl.BlockSpec((1, Np), lambda bi, mi: (0, 0)),
                pl.BlockSpec((1, Np), lambda bi, mi: (0, 0)),
            ],
            # Whole per-image output stays resident in VMEM across the m axis.
            out_specs=pl.BlockSpec((1, HW, Np), lambda bi, mi: (bi, 0, 0)),
            scratch_shapes=[
                pltpu.VMEM((THW, Kp), jnp.bfloat16),   # packed im2col patch
                pltpu.VMEM((1, Np), jnp.float32),      # per-channel sum of squares
            ]),
        compiler_params=pltpu.CompilerParams(
            dimension_semantics=("parallel", "arbitrary"),
            vmem_limit_bytes=vmem_limit),
    )(xr, wt, bp, gp, btp, tp)

    # One fused XLA copy: drop padded channels, back to NCHW.
    # TODO(synk): emit NCHW directly from the kernel epilogue (in-kernel
    # transpose) to remove this trailing copy as well.
    return out[:, :, :Cout].reshape(B, Ho, Wo, Cout).transpose(0, 3, 1, 2)


# ----------------------------------------------------------------------------
# Pure-JAX reference (validation only)
# ----------------------------------------------------------------------------
def conv_inst_relu_reference(x, w, b, gamma, beta, tau, *, stride=1, eps=1e-6):
    pad = w.shape[-1] // 2
    xp = x
    if pad > 0:
        xp = jnp.pad(x, ((0, 0), (0, 0), (pad, pad), (pad, pad)), mode="reflect")
    y = jax.lax.conv_general_dilated(
        xp, w, (stride, stride), "VALID",
        dimension_numbers=("NCHW", "OIHW", "NCHW"),
        precision=jax.lax.Precision.HIGHEST)
    y = y + b.reshape(1, -1, 1, 1)
    nu2 = jnp.mean(y * y, axis=(2, 3), keepdims=True)
    y = y * jax.lax.rsqrt(nu2 + abs(eps))
    y = gamma.reshape(1, -1, 1, 1) * y + beta.reshape(1, -1, 1, 1)
    return jnp.maximum(y, tau.reshape(1, -1, 1, 1))


def make_params(key, cin, cout, k):
    kw, kb, kg, kbt, kt = jax.random.split(key, 5)
    bound = 1.0 / float(cin * k * k) ** 0.5
    w = jax.random.uniform(kw, (cout, cin, k, k), jnp.float32, -bound, bound)
    b = jax.random.uniform(kb, (cout,), jnp.float32, -bound, bound)
    gamma = 1.0 + 0.1 * jax.random.normal(kg, (cout,), jnp.float32)
    beta = 0.1 * jax.random.normal(kbt, (cout,), jnp.float32)
    tau = 0.1 * jax.random.normal(kt, (cout,), jnp.float32)
    return w, b, gamma, beta, tau


# ----------------------------------------------------------------------------
if __name__ == "__main__":
    key = jax.random.PRNGKey(0)
    configs = [
        # (B, Cin, H, W, Cout, k, stride)
        (2, 4, 16, 16, 32, 3, 1),      # generic ConvInstRelu
        (2, 3, 16, 16, 32, 9, 1),      # 9x9 encoder-style conv
        (2, 8, 16, 16, 48, 3, 2),      # strided (downsampling) conv
    ]
    for (B, Cin, H, W, Cout, k, s) in configs:
        kx, kp, key = jax.random.split(key, 3)
        x = jax.random.uniform(kx, (B, Cin, H, W), jnp.float32, 0.0, 1.0)
        w, b, gamma, beta, tau = make_params(kp, Cin, Cout, k)

        fwd = jax.jit(functools.partial(conv_inst_relu, stride=s))
        y = fwd(x, w, b, gamma, beta, tau)
        jax.block_until_ready(y)

        Ho = (H + 2 * (k // 2) - k) // s + 1
        Wo = (W + 2 * (k // 2) - k) // s + 1
        assert y.shape == (B, Cout, Ho, Wo), (y.shape, (B, Cout, Ho, Wo))
        assert bool(jnp.all(jnp.isfinite(y)))

        y_ref = conv_inst_relu_reference(x, w, b, gamma, beta, tau, stride=s)
        err = float(jnp.max(jnp.abs(y - y_ref)))
        assert err < 0.15, err   # bf16 MXU operands -> loose abs tolerance

    print("KERNEL_OK")
</pallas_src>

<mosaic_0001>
module attributes {stable_mosaic.version = 11 : i64} {
  func.func @_conv_frn_tlu_kernel(%arg0: i32, %arg1: i32, %arg2: memref<1x1x18x18x4xbf16, #tpu.memory_space<vmem>>, %arg3: memref<36x128xbf16, #tpu.memory_space<vmem>>, %arg4: memref<1x128xf32, #tpu.memory_space<vmem>>, %arg5: memref<1x128xf32, #tpu.memory_space<vmem>>, %arg6: memref<1x128xf32, #tpu.memory_space<vmem>>, %arg7: memref<1x128xf32, #tpu.memory_space<vmem>>, %arg8: memref<1x256x128xf32, #tpu.memory_space<vmem>>, %arg9: memref<256x36xbf16, #tpu.memory_space<vmem>>, %arg10: memref<1x128xf32, #tpu.memory_space<vmem>>) attributes {dimension_semantics = [#tpu.dimension_semantics<parallel>, #tpu.dimension_semantics<arbitrary>], iteration_bounds = array<i64: 2, 1>, scalar_prefetch = 0 : i64, scratch_operands = 2 : i64, tpu.core_type = #tpu.core_type<tc>, window_params = [{transform_indices = @transform_0, window_bounds = array<i64: 1, 1, 18, 18, 4>}, {pipeline_mode = #tpu.pipeline_mode<synchronous>, transform_indices = @transform_1, window_bounds = array<i64: 36, 128>}, {pipeline_mode = #tpu.pipeline_mode<synchronous>, transform_indices = @transform_2, window_bounds = array<i64: 1, 128>}, {pipeline_mode = #tpu.pipeline_mode<synchronous>, transform_indices = @transform_3, window_bounds = array<i64: 1, 128>}, {pipeline_mode = #tpu.pipeline_mode<synchronous>, transform_indices = @transform_4, window_bounds = array<i64: 1, 128>}, {pipeline_mode = #tpu.pipeline_mode<synchronous>, transform_indices = @transform_5, window_bounds = array<i64: 1, 128>}, {transform_indices = @transform_6, window_bounds = array<i64: 1, 256, 128>}]} {
    %c0_i32 = arith.constant 0 : i32
    %0 = arith.cmpi eq, %arg1, %c0_i32 : i32
    %1 = arith.extui %0 : i1 to i32
    %c0_i32_0 = arith.constant 0 : i32
    %2 = arith.cmpi ne, %1, %c0_i32_0 : i32
    scf.if %2 {
      %cst_66 = arith.constant 0.000000e+00 : f32
      %80 = vector.broadcast %cst_66 : f32 to vector<1x128xf32>
      %c0_67 = arith.constant 0 : index
      %c0_68 = arith.constant 0 : index
      %81 = vector.load %arg10[%c0_67, %c0_68] : memref<1x128xf32, #tpu.memory_space<vmem>>, vector<1x128xf32>
      tpu.vector_store %arg10[%c0_67, %c0_68], %80 {strides = array<i32>} : memref<1x128xf32, #tpu.memory_space<vmem>>, vector<1x128xf32>,
    } else {
    }
    %c16_i32 = arith.constant 16 : i32
    %3 = arith.muli %arg1, %c16_i32 : i32
    %4 = tpu.assume_multiple %3, 16 : i32
    %c0_i32_1 = arith.constant 0 : i32
    %5 = arith.addi %4, %c0_i32_1 : i32
    %c0 = arith.constant 0 : index
    %c0_2 = arith.constant 0 : index
    %6 = arith.index_cast %5 : i32 to index
    %c0_3 = arith.constant 0 : index
    %c0_4 = arith.constant 0 : index
    %7 = vector.load %arg2[%c0, %c0_2, %6, %c0_3, %c0_4] : memref<1x1x18x18x4xbf16, #tpu.memory_space<vmem>>, vector<1x1x16x16x4xbf16>
    %8 = vector.shape_cast %7 : vector<1x1x16x16x4xbf16> to vector<16x16x4xbf16>
    %9 = vector.shape_cast %8 : vector<16x16x4xbf16> to vector<256x4xbf16>
    %c0_5 = arith.constant 0 : index
    %c0_6 = arith.constant 0 : index
    %10 = vector.load %arg9[%c0_5, %c0_6] : memref<256x36xbf16, #tpu.memory_space<vmem>>, vector<256x4xbf16>
    tpu.vector_store %arg9[%c0_5, %c0_6], %9 {strides = array<i32>} : memref<256x36xbf16, #tpu.memory_space<vmem>>, vector<256x4xbf16>,
    %c0_i32_7 = arith.constant 0 : i32
    %11 = arith.addi %4, %c0_i32_7 : i32
    %c0_8 = arith.constant 0 : index
    %c0_9 = arith.constant 0 : index
    %12 = arith.index_cast %11 : i32 to index
    %c1 = arith.constant 1 : index
    %c0_10 = arith.constant 0 : index
    %13 = vector.load %arg2[%c0_8, %c0_9, %12, %c1, %c0_10] : memref<1x1x18x18x4xbf16, #tpu.memory_space<vmem>>, vector<1x1x16x16x4xbf16>
    %14 = vector.shape_cast %13 : vector<1x1x16x16x4xbf16> to vector<16x16x4xbf16>
    %15 = vector.shape_cast %14 : vector<16x16x4xbf16> to vector<256x4xbf16>
    %c0_11 = arith.constant 0 : index
    %c4 = arith.constant 4 : index
    %16 = vector.load %arg9[%c0_11, %c4] : memref<256x36xbf16, #tpu.memory_space<vmem>>, vector<256x4xbf16>
    tpu.vector_store %arg9[%c0_11, %c4], %15 {strides = array<i32>} : memref<256x36xbf16, #tpu.memory_space<vmem>>, vector<256x4xbf16>,
    %c0_i32_12 = arith.constant 0 : i32
    %17 = arith.addi %4, %c0_i32_12 : i32
    %c0_13 = arith.constant 0 : index
    %c0_14 = arith.constant 0 : index
    %18 = arith.index_cast %17 : i32 to index
    %c2 = arith.constant 2 : index
    %c0_15 = arith.constant 0 : index
    %19 = vector.load %arg2[%c0_13, %c0_14, %18, %c2, %c0_15] : memref<1x1x18x18x4xbf16, #tpu.memory_space<vmem>>, vector<1x1x16x16x4xbf16>
    %20 = vector.shape_cast %19 : vector<1x1x16x16x4xbf16> to vector<16x16x4xbf16>
    %21 = vector.shape_cast %20 : vector<16x16x4xbf16> to vector<256x4xbf16>
    %c0_16 = arith.constant 0 : index
    %c8 = arith.constant 8 : index
    %22 = vector.load %arg9[%c0_16, %c8] : memref<256x36xbf16, #tpu.memory_space<vmem>>, vector<256x4xbf16>
    tpu.vector_store %arg9[%c0_16, %c8], %21 {strides = array<i32>} : memref<256x36xbf16, #tpu.memory_space<vmem>>, vector<256x4xbf16>,
    %c1_i32 = arith.constant 1 : i32
    %23 = arith.addi %4, %c1_i32 : i32
    %c0_17 = arith.constant 0 : index
    %c0_18 = arith.constant 0 : index
    %24 = arith.index_cast %23 : i32 to index
    %c0_19 = arith.constant 0 : index
    %c0_20 = arith.constant 0 : index
    %25 = vector.load %arg2[%c0_17, %c0_18, %24, %c0_19, %c0_20] : memref<1x1x18x18x4xbf16, #tpu.memory_space<vmem>>, vector<1x1x16x16x4xbf16>
    %26 = vector.shape_cast %25 : vector<1x1x16x16x4xbf16> to vector<16x16x4xbf16>
    %27 = vector.shape_cast %26 : vector<16x16x4xbf16> to vector<256x4xbf16>
    %c0_21 = arith.constant 0 : index
    %c12 = arith.constant 12 : index
    %28 = vector.load %arg9[%c0_21, %c12] : memref<256x36xbf16, #tpu.memory_space<vmem>>, vector<256x4xbf16>
    tpu.vector_store %arg9[%c0_21, %c12], %27 {strides = array<i32>} : memref<256x36xbf16, #tpu.memory_space<vmem>>, vector<256x4xbf16>,
    %c1_i32_22 = arith.constant 1 : i32
    %29 = arith.addi %4, %c1_i32_22 : i32
    %c0_23 = arith.constant 0 : index
    %c0_24 = arith.constant 0 : index
    %30 = arith.index_cast %29 : i32 to index
    %c1_25 = arith.constant 1 : index
    %c0_26 = arith.constant 0 : index
    %31 = vector.load %arg2[%c0_23, %c0_24, %30, %c1_25, %c0_26] : memref<1x1x18x18x4xbf16, #tpu.memory_space<vmem>>, vector<1x1x16x16x4xbf16>
    %32 = vector.shape_cast %31 : vector<1x1x16x16x4xbf16> to vector<16x16x4xbf16>
    %33 = vector.shape_cast %32 : vector<16x16x4xbf16> to vector<256x4xbf16>
    %c0_27 = arith.constant 0 : index
    %c16 = arith.constant 16 : index
    %34 = vector.load %arg9[%c0_27, %c16] : memref<256x36xbf16, #tpu.memory_space<vmem>>, vector<256x4xbf16>
    tpu.vector_store %arg9[%c0_27, %c16], %33 {strides = array<i32>} : memref<256x36xbf16, #tpu.memory_space<vmem>>, vector<256x4xbf16>,
    %c1_i32_28 = arith.constant 1 : i32
    %35 = arith.addi %4, %c1_i32_28 : i32
    %c0_29 = arith.constant 0 : index
    %c0_30 = arith.constant 0 : index
    %36 = arith.index_cast %35 : i32 to index
    %c2_31 = arith.constant 2 : index
    %c0_32 = arith.constant 0 : index
    %37 = vector.load %arg2[%c0_29, %c0_30, %36, %c2_31, %c0_32] : memref<1x1x18x18x4xbf16, #tpu.memory_space<vmem>>, vector<1x1x16x16x4xbf16>
    %38 = vector.shape_cast %37 : vector<1x1x16x16x4xbf16> to vector<16x16x4xbf16>
    %39 = vector.shape_cast %38 : vector<16x16x4xbf16> to vector<256x4xbf16>
    %c0_33 = arith.constant 0 : index
    %c20 = arith.constant 20 : index
    %40 = vector.load %arg9[%c0_33, %c20] : memref<256x36xbf16, #tpu.memory_space<vmem>>, vector<256x4xbf16>
    tpu.vector_store %arg9[%c0_33, %c20], %39 {strides = array<i32>} : memref<256x36xbf16, #tpu.memory_space<vmem>>, vector<256x4xbf16>,
    %c2_i32 = arith.constant 2 : i32
    %41 = arith.addi %4, %c2_i32 : i32
    %c0_34 = arith.constant 0 : index
    %c0_35 = arith.constant 0 : index
    %42 = arith.index_cast %41 : i32 to index
    %c0_36 = arith.constant 0 : index
    %c0_37 = arith.constant 0 : index
    %43 = vector.load %arg2[%c0_34, %c0_35, %42, %c0_36, %c0_37] : memref<1x1x18x18x4xbf16, #tpu.memory_space<vmem>>, vector<1x1x16x16x4xbf16>
    %44 = vector.shape_cast %43 : vector<1x1x16x16x4xbf16> to vector<16x16x4xbf16>
    %45 = vector.shape_cast %44 : vector<16x16x4xbf16> to vector<256x4xbf16>
    %c0_38 = arith.constant 0 : index
    %c24 = arith.constant 24 : index
    %46 = vector.load %arg9[%c0_38, %c24] : memref<256x36xbf16, #tpu.memory_space<vmem>>, vector<256x4xbf16>
    tpu.vector_store %arg9[%c0_38, %c24], %45 {strides = array<i32>} : memref<256x36xbf16, #tpu.memory_space<vmem>>, vector<256x4xbf16>,
    %c2_i32_39 = arith.constant 2 : i32
    %47 = arith.addi %4, %c2_i32_39 : i32
    %c0_40 = arith.constant 0 : index
    %c0_41 = arith.constant 0 : index
    %48 = arith.index_cast %47 : i32 to index
    %c1_42 = arith.constant 1 : index
    %c0_43 = arith.constant 0 : index
    %49 = vector.load %arg2[%c0_40, %c0_41, %48, %c1_42, %c0_43] : memref<1x1x18x18x4xbf16, #tpu.memory_space<vmem>>, vector<1x1x16x16x4xbf16>
    %50 = vector.shape_cast %49 : vector<1x1x16x16x4xbf16> to vector<16x16x4xbf16>
    %51 = vector.shape_cast %50 : vector<16x16x4xbf16> to vector<256x4xbf16>
    %c0_44 = arith.constant 0 : index
    %c28 = arith.constant 28 : index
    %52 = vector.load %arg9[%c0_44, %c28] : memref<256x36xbf16, #tpu.memory_space<vmem>>, vector<256x4xbf16>
    tpu.vector_store %arg9[%c0_44, %c28], %51 {strides = array<i32>} : memref<256x36xbf16, #tpu.memory_space<vmem>>, vector<256x4xbf16>,
    %c2_i32_45 = arith.constant 2 : i32
    %53 = arith.addi %4, %c2_i32_45 : i32
    %c0_46 = arith.constant 0 : index
    %c0_47 = arith.constant 0 : index
    %54 = arith.index_cast %53 : i32 to index
    %c2_48 = arith.constant 2 : index
    %c0_49 = arith.constant 0 : index
    %55 = vector.load %arg2[%c0_46, %c0_47, %54, %c2_48, %c0_49] : memref<1x1x18x18x4xbf16, #tpu.memory_space<vmem>>, vector<1x1x16x16x4xbf16>
    %56 = vector.shape_cast %55 : vector<1x1x16x16x4xbf16> to vector<16x16x4xbf16>
    %57 = vector.shape_cast %56 : vector<16x16x4xbf16> to vector<256x4xbf16>
    %c0_50 = arith.constant 0 : index
    %c32 = arith.constant 32 : index
    %58 = vector.load %arg9[%c0_50, %c32] : memref<256x36xbf16, #tpu.memory_space<vmem>>, vector<256x4xbf16>
    tpu.vector_store %arg9[%c0_50, %c32], %57 {strides = array<i32>} : memref<256x36xbf16, #tpu.memory_space<vmem>>, vector<256x4xbf16>,
    %c0_51 = arith.constant 0 : index
    %c0_52 = arith.constant 0 : index
    %59 = vector.load %arg9[%c0_51, %c0_52] : memref<256x36xbf16, #tpu.memory_space<vmem>>, vector<256x36xbf16>
    %c0_53 = arith.constant 0 : index
    %c0_54 = arith.constant 0 : index
    %60 = vector.load %arg3[%c0_53, %c0_54] : memref<36x128xbf16, #tpu.memory_space<vmem>>, vector<36x128xbf16>
    %cst = arith.constant dense<0.000000e+00> : vector<256x128xf32>
    %61 = tpu.matmul %59, %60, %cst {dimension_numbers = #tpu.dot_dimension_numbers<[1], [0], [0], [1], [0, 0, 1, 1], [], []>} : vector<256x36xbf16>, vector<36x128xbf16>, vector<256x128xf32> -> vector<256x128xf32>
    %c0_55 = arith.constant 0 : index
    %c0_56 = arith.constant 0 : index
    %62 = vector.load %arg4[%c0_55, %c0_56] : memref<1x128xf32, #tpu.memory_space<vmem>>, vector<1x128xf32>
    %63 = vector.broadcast %62 : vector<1x128xf32> to vector<256x128xf32>
    %64 = arith.addf %61, %63 : vector<256x128xf32>
    %c256_i32 = arith.constant 256 : i32
    %65 = arith.muli %arg1, %c256_i32 : i32
    %66 = tpu.assume_multiple %65, 256 : i32
    %c0_57 = arith.constant 0 : index
    %67 = arith.index_cast %66 : i32 to index
    %c0_58 = arith.constant 0 : index
    %68 = vector.load %arg8[%c0_57, %67, %c0_58] : memref<1x256x128xf32, #tpu.memory_space<vmem>>, vector<1x256x128xf32>
    %69 = vector.shape_cast %68 : vector<1x256x128xf32> to vector<256x128xf32>
    %70 = vector.shape_cast %64 : vector<256x128xf32> to vector<1x256x128xf32>
    tpu.vector_store %arg8[%c0_57, %67, %c0_58], %70 {strides = array<i32>} : memref<1x256x128xf32, #tpu.memory_space<vmem>>, vector<1x256x128xf32>,
    %c0_59 = arith.constant 0 : index
    %c0_60 = arith.constant 0 : index
    %71 = vector.load %arg10[%c0_59, %c0_60] : memref<1x128xf32, #tpu.memory_space<vmem>>, vector<1x128xf32>
    %72 = arith.mulf %64, %64 : vector<256x128xf32>
    %cst_61 = arith.constant dense<0.000000e+00> : vector<128xf32>
    %73 = vector.multi_reduction <add>, %72, %cst_61 [0] : vector<256x128xf32> to vector<128xf32>
    %74 = vector.shape_cast %73 : vector<128xf32> to vector<1x128xf32>
    %75 = arith.addf %71, %74 : vector<1x128xf32>
    %c0_62 = arith.constant 0 : index
    %c0_63 = arith.constant 0 : index
    %76 = vector.load %arg10[%c0_62, %c0_63] : memref<1x128xf32, #tpu.memory_space<vmem>>, vector<1x128xf32>
    tpu.vector_store %arg10[%c0_62, %c0_63], %75 {strides = array<i32>} : memref<1x128xf32, #tpu.memory_space<vmem>>, vector<1x128xf32>,
    %c0_i32_64 = arith.constant 0 : i32
    %77 = arith.cmpi eq, %arg1, %c0_i32_64 : i32
    %78 = arith.extui %77 : i1 to i32
    %c0_i32_65 = arith.constant 0 : i32
    %79 = arith.cmpi ne, %78, %c0_i32_65 : i32
    scf.if %79 {
      %c0_66 = arith.constant 0 : index
      %c0_67 = arith.constant 0 : index
      %80 = vector.load %arg5[%c0_66, %c0_67] : memref<1x128xf32, #tpu.memory_space<vmem>>, vector<1x128xf32>
      %c0_68 = arith.constant 0 : index
      %c0_69 = arith.constant 0 : index
      %81 = vector.load %arg10[%c0_68, %c0_69] : memref<1x128xf32, #tpu.memory_space<vmem>>, vector<1x128xf32>
      %cst_70 = arith.constant 3.906250e-03 : f32
      %82 = vector.broadcast %cst_70 : f32 to vector<1x128xf32>
      %83 = arith.mulf %81, %82 : vector<1x128xf32>
      %cst_71 = arith.constant 9.99999997E-7 : f32
      %84 = vector.broadcast %cst_71 : f32 to vector<1x128xf32>
      %85 = arith.addf %83, %84 : vector<1x128xf32>
      %86 = math.rsqrt %85 : vector<1x128xf32>
      %87 = arith.mulf %80, %86 : vector<1x128xf32>
      %c0_72 = arith.constant 0 : index
      %c0_73 = arith.constant 0 : index
      %88 = vector.load %arg6[%c0_72, %c0_73] : memref<1x128xf32, #tpu.memory_space<vmem>>, vector<1x128xf32>
      %c0_74 = arith.constant 0 : index
      %c0_75 = arith.constant 0 : index
      %89 = vector.load %arg7[%c0_74, %c0_75] : memref<1x128xf32, #tpu.memory_space<vmem>>, vector<1x128xf32>
      %c0_76 = arith.constant 0 : index
      %c0_77 = arith.constant 0 : index
      %c0_78 = arith.constant 0 : index
      %90 = vector.load %arg8[%c0_76, %c0_77, %c0_78] : memref<1x256x128xf32, #tpu.memory_space<vmem>>, vector<1x256x128xf32>
      %91 = vector.shape_cast %90 : vector<1x256x128xf32> to vector<256x128xf32>
      %92 = vector.broadcast %87 : vector<1x128xf32> to vector<256x128xf32>
      %93 = arith.mulf %91, %92 : vector<256x128xf32>
      %94 = vector.broadcast %88 : vector<1x128xf32> to vector<256x128xf32>
      %95 = arith.addf %93, %94 : vector<256x128xf32>
      %96 = vector.broadcast %89 : vector<1x128xf32> to vector<256x128xf32>
      %97 = arith.maximumf %95, %96 : vector<256x128xf32>
      %c0_79 = arith.constant 0 : index
      %c0_80 = arith.constant 0 : index
      %c0_81 = arith.constant 0 : index
      %98 = vector.load %arg8[%c0_79, %c0_80, %c0_81] : memref<1x256x128xf32, #tpu.memory_space<vmem>>, vector<1x256x128xf32>
      %99 = vector.shape_cast %98 : vector<1x256x128xf32> to vector<256x128xf32>
      %100 = vector.shape_cast %97 : vector<256x128xf32> to vector<1x256x128xf32>
      tpu.vector_store %arg8[%c0_79, %c0_80, %c0_81], %100 {strides = array<i32>} : memref<1x256x128xf32, #tpu.memory_space<vmem>>, vector<1x256x128xf32>,
    } else {
    }
    return
  }
  func.func @transform_0(%arg0: i32, %arg1: i32) -> (i32, i32, i32, i32, i32) {
    %c0_i32 = arith.constant 0 : i32
    %c0_i32_0 = arith.constant 0 : i32
    %c0_i32_1 = arith.constant 0 : i32
    %c0_i32_2 = arith.constant 0 : i32
    %c0_i32_3 = arith.constant 0 : i32
    return %arg0, %c0_i32, %c0_i32_0, %c0_i32_1, %c0_i32_2 : i32, i32, i32, i32, i32
  }
  func.func @transform_1(%arg0: i32, %arg1: i32) -> (i32, i32) {
    %c0_i32 = arith.constant 0 : i32
    %c0_i32_0 = arith.constant 0 : i32
    %c0_i32_1 = arith.constant 0 : i32
    return %c0_i32, %c0_i32_0 : i32, i32
  }
  func.func @transform_2(%arg0: i32, %arg1: i32) -> (i32, i32) {
    %c0_i32 = arith.constant 0 : i32
    %c0_i32_0 = arith.constant 0 : i32
    %c0_i32_1 = arith.constant 0 : i32
    return %c0_i32, %c0_i32_0 : i32, i32
  }
  func.func @transform_3(%arg0: i32, %arg1: i32) -> (i32, i32) {
    %c0_i32 = arith.constant 0 : i32
    %c0_i32_0 = arith.constant 0 : i32
    %c0_i32_1 = arith.constant 0 : i32
    return %c0_i32, %c0_i32_0 : i32, i32
  }
  func.func @transform_4(%arg0: i32, %arg1: i32) -> (i32, i32) {
    %c0_i32 = arith.constant 0 : i32
    %c0_i32_0 = arith.constant 0 : i32
    %c0_i32_1 = arith.constant 0 : i32
    return %c0_i32, %c0_i32_0 : i32, i32
  }
  func.func @transform_5(%arg0: i32, %arg1: i32) -> (i32, i32) {
    %c0_i32 = arith.constant 0 : i32
    %c0_i32_0 = arith.constant 0 : i32
    %c0_i32_1 = arith.constant 0 : i32
    return %c0_i32, %c0_i32_0 : i32, i32
  }
  func.func @transform_6(%arg0: i32, %arg1: i32) -> (i32, i32, i32) {
    %c0_i32 = arith.constant 0 : i32
    %c0_i32_0 = arith.constant 0 : i32
    %c0_i32_1 = arith.constant 0 : i32
    return %arg0, %c0_i32, %c0_i32_0 : i32, i32, i32
  }
}

</mosaic_0001>

<llo_original>
// kernel: conv_inst_relu.1
$region0: #{conv_inst_relu.1}
  #allocation0 [shape = 'u32[]', space=smem, size = 0x4, offset = 0x4, fixed_abs, tag = 'smem constant byte address 0x4 - core index']
  #allocation1 [shape = 'u32[72,128]{1,0:T(1,128)}', space=vmem, size = 0x9000, scoped, tag = 'internal scratch']
  #allocation2 [shape = 'bf16[256,36]{1,0:T(8,128)(2,1)}', space=vmem, size = 0x10000, scoped, tag = 'scratch operand']
  #allocation3 [shape = 'f32[1,128]{1,0:T(1,128)}', space=vmem, size = 0x200, scoped, tag = 'scratch operand']
  %s0 = inlined_call_operand.vmem [shape: bf16[2,1,18,18,4], index: 0, kind: input, shape index: {}]
  %s1 = inlined_call_operand.vmem [shape: bf16[36,128], index: 1, kind: input, shape index: {}]
  %s2 = inlined_call_operand.vmem [shape: f32[1,128], index: 2, kind: input, shape index: {}]
  %s3 = inlined_call_operand.vmem [shape: f32[1,128], index: 3, kind: input, shape index: {}]
  %s4 = inlined_call_operand.vmem [shape: f32[1,128], index: 4, kind: input, shape index: {}]
  %s5 = inlined_call_operand.vmem [shape: f32[1,128], index: 5, kind: input, shape index: {}]
  %s6 = inlined_call_operand.hbm [shape: f32[2,256,128], index: 6, kind: output, shape index: {}]
  %s7 = sld [smem:[#allocation0]]
  $region65: #{conv_inst_relu.1} parent=0
    _
  %s9 = ssub.s32 1, %s7
  %s10 = scalar_select 0, %s9, %s7
  $region1: #{conv_inst_relu.1} parent=0
    #allocation4 [shape = 'u8[262144]{0}', space=vmem, size = 0x40000, scoped, tag = 'output window, operand 0']
    #allocation5 [shape = 's32[2]{0}', space=sflag, size = 0x8, scoped, tag = 'scoped memory for conv_inst_relu.1']
    %11 = vsyncpa [#allocation5], 0
    %s12 = scalar_lea.sflag [#allocation5], 1
    %13 = vsyncpa %s12, 0
    loop: start=0, step=1, limit=4
    $region2: #{conv_inst_relu.1} parent=1 // loop_pre_header
      _
    $region3: #{conv_inst_relu.1} parent=1 // loop_header
      %s15 = sphi 0, %s19
      %p16 = scmp.ge.s32.totalorder %s15, 4
      %s22 = sphi 0, %s34
      %s23 = sphi 0, %s30
      %s24 = sphi 0, %s22
      %s25 = sphi 0, %s23
      %s26 = sphi 0, %s24
      %s27 = sphi 0, %s25
      %s37 = sphi 0, %s39
      %s40 = sphi 0, %s37
      %s41 = sphi 0, %s40
      %s57 = sphi 0, %s41
      %s61 = sphi 0, %s61
      %s63 = sphi 0, %s61
      %s64 = sphi 0, %s63
      %s78 = sphi 0, %s64
      %s82 = sphi 0, %s82
      %s84 = sphi 0, %s82
      %s85 = sphi 0, %s84
      %s99 = sphi 0, %s85
      %s103 = sphi 0, %s103
      %s105 = sphi 0, %s103
      %s106 = sphi 0, %s105
      %s120 = sphi 0, %s106
      %s124 = sphi 0, %s124
      %s126 = sphi 0, %s124
      %s127 = sphi 0, %s126
      %s141 = sphi 0, %s127
      %s145 = sphi 0, %s145
      %s147 = sphi 0, %s145
      %s148 = sphi 0, %s147
      %s162 = sphi 0, %s148
      %s168 = sphi 0, %s170
      %s171 = sphi 0, %s168
      %s172 = sphi 0, %s171
      %s188 = sphi 0, %s172
    $region4: #{conv_inst_relu.1} parent=1 // loop_header_branch
      %18 = sbr.rel (%p16) target = $region8
    $region5: #{conv_inst_relu.1} parent=1 // loop_body
      %s20 = ssub.s32 %s15, 1
      %s21 = ssub.s32 %s15, 2
      %s28 = sadd.s32 1, %s23
      %p29 = scmp.ge.s32.totalorder %s28, 1
      %s30 = scalar_select %p29, 0, %s28
      %s31 = sadd.s32 1, %s22
      %s32 = scalar_select %p29, %s31, %s22
      %p33 = scmp.ge.s32.totalorder %s32, 2
      %s34 = scalar_select %p33, 0, %s32
      %s35 = ssub.s32 %s22, %s34
      %p36 = scmp.eq.s32.totalorder %s35, 0
      %s38 = sadd.s32 %s37, 1
      %s39 = scalar_select %p36, %s37, %s38
      %p42 = pneg %p36
      %p43 = scmp.eq.s32.totalorder %s15, 1
      %p44 = por %p42, %p43
      %p45 = scmp.ne.s32.totalorder %s37, %s40
      %p46 = scmp.eq.s32.totalorder %s15, 0
      %p47 = por %p45, %p46
      %p48 = scmp.ne.s32.totalorder %s37, %s40
      %p49 = scmp.eq.s32.totalorder %s20, 1
      %p50 = por %p48, %p49
      %p51 = scmp.ne.s32.totalorder %s40, %s41
      %p52 = scmp.eq.s32.totalorder %s20, 0
      %p53 = por %p51, %p52
      %p54 = scmp.ne.s32.totalorder %s40, %s41
      %p55 = scmp.eq.s32.totalorder %s21, 1
      %p56 = por %p54, %p55
      %p58 = scmp.ne.s32.totalorder %s41, %s57
      %p59 = scmp.eq.s32.totalorder %s21, 0
      %p60 = por %p58, %p59
      %s62 = sadd.s32 %s61, 1
      %p65 = scmp.eq.s32.totalorder %s15, 1
      %p66 = scmp.ne.s32.totalorder %s61, %s63
      %p67 = scmp.eq.s32.totalorder %s15, 0
      %p68 = por %p66, %p67
      %p69 = scmp.ne.s32.totalorder %s61, %s63
      %p70 = scmp.eq.s32.totalorder %s20, 1
      %p71 = por %p69, %p70
      %p72 = scmp.ne.s32.totalorder %s63, %s64
      %p73 = scmp.eq.s32.totalorder %s20, 0
      %p74 = por %p72, %p73
      %p75 = scmp.ne.s32.totalorder %s63, %s64
      %p76 = scmp.eq.s32.totalorder %s21, 1
      %p77 = por %p75, %p76
      %p79 = scmp.ne.s32.totalorder %s64, %s78
      %p80 = scmp.eq.s32.totalorder %s21, 0
      %p81 = por %p79, %p80
      %s83 = sadd.s32 %s82, 1
      %p86 = scmp.eq.s32.totalorder %s15, 1
      %p87 = scmp.ne.s32.totalorder %s82, %s84
      %p88 = scmp.eq.s32.totalorder %s15, 0
      %p89 = por %p87, %p88
      %p90 = scmp.ne.s32.totalorder %s82, %s84
      %p91 = scmp.eq.s32.totalorder %s20, 1
      %p92 = por %p90, %p91
      %p93 = scmp.ne.s32.totalorder %s84, %s85
      %p94 = scmp.eq.s32.totalorder %s20, 0
      %p95 = por %p93, %p94
      %p96 = scmp.ne.s32.totalorder %s84, %s85
      %p97 = scmp.eq.s32.totalorder %s21, 1
      %p98 = por %p96, %p97
      %p100 = scmp.ne.s32.totalorder %s85, %s99
      %p101 = scmp.eq.s32.totalorder %s21, 0
      %p102 = por %p100, %p101
      %s104 = sadd.s32 %s103, 1
      %p107 = scmp.eq.s32.totalorder %s15, 1
      %p108 = scmp.ne.s32.totalorder %s103, %s105
      %p109 = scmp.eq.s32.totalorder %s15, 0
      %p110 = por %p108, %p109
      %p111 = scmp.ne.s32.totalorder %s103, %s105
      %p112 = scmp.eq.s32.totalorder %s20, 1
      %p113 = por %p111, %p112
      %p114 = scmp.ne.s32.totalorder %s105, %s106
      %p115 = scmp.eq.s32.totalorder %s20, 0
      %p116 = por %p114, %p115
      %p117 = scmp.ne.s32.totalorder %s105, %s106
      %p118 = scmp.eq.s32.totalorder %s21, 1
      %p119 = por %p117, %p118
      %p121 = scmp.ne.s32.totalorder %s106, %s120
      %p122 = scmp.eq.s32.totalorder %s21, 0
      %p123 = por %p121, %p122
      %s125 = sadd.s32 %s124, 1
      %p128 = scmp.eq.s32.totalorder %s15, 1
      %p129 = scmp.ne.s32.totalorder %s124, %s126
      %p130 = scmp.eq.s32.totalorder %s15, 0
      %p131 = por %p129, %p130
      %p132 = scmp.ne.s32.totalorder %s124, %s126
      %p133 = scmp.eq.s32.totalorder %s20, 1
      %p134 = por %p132, %p133
      %p135 = scmp.ne.s32.totalorder %s126, %s127
      %p136 = scmp.eq.s32.totalorder %s20, 0
      %p137 = por %p135, %p136
      %p138 = scmp.ne.s32.totalorder %s126, %s127
      %p139 = scmp.eq.s32.totalorder %s21, 1
      %p140 = por %p138, %p139
      %p142 = scmp.ne.s32.totalorder %s127, %s141
      %p143 = scmp.eq.s32.totalorder %s21, 0
      %p144 = por %p142, %p143
      %s146 = sadd.s32 %s145, 1
      %p149 = scmp.eq.s32.totalorder %s15, 1
      %p150 = scmp.ne.s32.totalorder %s145, %s147
      %p151 = scmp.eq.s32.totalorder %s15, 0
      %p152 = por %p150, %p151
      %p153 = scmp.ne.s32.totalorder %s145, %s147
      %p154 = scmp.eq.s32.totalorder %s20, 1
      %p155 = por %p153, %p154
      %p156 = scmp.ne.s32.totalorder %s147, %s148
      %p157 = scmp.eq.s32.totalorder %s20, 0
      %p158 = por %p156, %p157
      %p159 = scmp.ne.s32.totalorder %s147, %s148
      %p160 = scmp.eq.s32.totalorder %s21, 1
      %p161 = por %p159, %p160
      %p163 = scmp.ne.s32.totalorder %s148, %s162
      %p164 = scmp.eq.s32.totalorder %s21, 0
      %p165 = por %p163, %p164
      %s166 = ssub.s32 %s22, %s34
      %p167 = scmp.eq.s32.totalorder %s166, 0
      %s169 = sadd.s32 %s168, 1
      %s170 = scalar_select %p167, %s168, %s169
      %p173 = pneg %p167
      %p174 = scmp.eq.s32.totalorder %s15, 1
      %p175 = por %p173, %p174
      %p176 = scmp.ne.s32.totalorder %s168, %s171
      %p177 = scmp.eq.s32.totalorder %s15, 0
      %p178 = por %p176, %p177
      %p179 = scmp.ne.s32.totalorder %s168, %s171
      %p180 = scmp.eq.s32.totalorder %s20, 1
      %p181 = por %p179, %p180
      %p182 = scmp.ne.s32.totalorder %s171, %s172
      %p183 = scmp.eq.s32.totalorder %s20, 0
      %p184 = por %p182, %p183
      %p185 = scmp.ne.s32.totalorder %s171, %s172
      %p186 = scmp.eq.s32.totalorder %s21, 1
      %p187 = por %p185, %p186
      %p189 = scmp.ne.s32.totalorder %s172, %s188
      %p190 = scmp.eq.s32.totalorder %s21, 0
      %p191 = por %p189, %p190
      %p192 = scmp.le.s32.totalorder 1, %s15
      %p193 = scmp.lt.s32.totalorder %s15, 3
      %p194 = pnand %p192, %p193
      %p195 = pneg %p194
      // Predicated region
      $region9: #{conv_inst_relu.1} parent=5 // pred_check
        _
      $region10: #{conv_inst_relu.1} parent=5 // pred_check_branch
        %197 = sbr.rel (%p194) target = $region12
      $region11: #{conv_inst_relu.1} parent=5 // pred_region
        %s198 = ssub.s32 %s15, 1
        // Predicated region
        $region13: #{conv_inst_relu.1} parent=11 // pred_check
          %p199 = pneg %p74
        $region14: #{conv_inst_relu.1} parent=11 // pred_check_branch
          %201 = sbr.rel (%p199) target = $region16
        $region15: #{conv_inst_relu.1} parent=11 // pred_region
          _
        $region16: #{conv_inst_relu.1} parent=11 // pred_fallthru
          _
        // Predicated region
        $region17: #{conv_inst_relu.1} parent=11 // pred_check
          %p202 = pneg %p95
        $region18: #{conv_inst_relu.1} parent=11 // pred_check_branch
          %204 = sbr.rel (%p202) target = $region20
        $region19: #{conv_inst_relu.1} parent=11 // pred_region
          _
        $region20: #{conv_inst_relu.1} parent=11 // pred_fallthru
          _
        // Predicated region
        $region21: #{conv_inst_relu.1} parent=11 // pred_check
          %p205 = pneg %p116
        $region22: #{conv_inst_relu.1} parent=11 // pred_check_branch
          %207 = sbr.rel (%p205) target = $region24
        $region23: #{conv_inst_relu.1} parent=11 // pred_region
          _
        $region24: #{conv_inst_relu.1} parent=11 // pred_fallthru
          _
        // Predicated region
        $region25: #{conv_inst_relu.1} parent=11 // pred_check
          %p208 = pneg %p137
        $region26: #{conv_inst_relu.1} parent=11 // pred_check_branch
          %210 = sbr.rel (%p208) target = $region28
        $region27: #{conv_inst_relu.1} parent=11 // pred_region
          _
        $region28: #{conv_inst_relu.1} parent=11 // pred_fallthru
          _
        // Predicated region
        $region29: #{conv_inst_relu.1} parent=11 // pred_check
          %p211 = pneg %p158
        $region30: #{conv_inst_relu.1} parent=11 // pred_check_branch
          %213 = sbr.rel (%p211) target = $region32
        $region31: #{conv_inst_relu.1} parent=11 // pred_region
          _
        $region32: #{conv_inst_relu.1} parent=11 // pred_fallthru
          _
      $region12: #{conv_inst_relu.1} parent=5 // pred_fallthru
        _
      %p214 = scmp.lt.s32.totalorder %s15, 2
      // Predicated region
      $region33: #{conv_inst_relu.1} parent=5 // pred_check
        %p215 = pneg %p214
      $region34: #{conv_inst_relu.1} parent=5 // pred_check_branch
        %217 = sbr.rel (%p215) target = $region36
      $region35: #{conv_inst_relu.1} parent=5 // pred_region
        // Predicated region
        $region37: #{conv_inst_relu.1} parent=35 // pred_check
          %p218 = pneg %p47
        $region38: #{conv_inst_relu.1} parent=35 // pred_check_branch
          %220 = sbr.rel (%p218) target = $region40
        $region39: #{conv_inst_relu.1} parent=35 // pred_region
          %p221 = scmp.lt.s32.totalorder %s22, 1
          %s222 = scalar_select %p221, %s22, 1
          %s223 = smul.addr %s222, 54
          %s224 = smul.addr %s223, 4
          %s225 = scalar_lea.vmem %s0, %s224
        $region40: #{conv_inst_relu.1} parent=35 // pred_fallthru
          _
      $region36: #{conv_inst_relu.1} parent=5 // pred_fallthru
        _
      %p226 = scmp.le.s32.totalorder 1, %s15
      %p227 = scmp.lt.s32.totalorder %s15, 3
      %p228 = pnand %p226, %p227
      %p229 = pneg %p228
      // Predicated region
      $region41: #{conv_inst_relu.1} parent=5 // pred_check
        _
      $region42: #{conv_inst_relu.1} parent=5 // pred_check_branch
        %231 = sbr.rel (%p228) target = $region44
      $region43: #{conv_inst_relu.1} parent=5 // pred_region
        %s232 = ssub.s32 %s15, 1
        %p233 = scmp.lt.s32.totalorder %s24, 1
        %s234 = scalar_select %p233, %s24, 1
        %s235 = smul.addr %s234, 54
        %s236 = smul.addr %s235, 4
        %s237 = scalar_lea.vmem %s0, %s236
        %p238 = pneg %p53
        %p239 = pneg %p50
        %p240 = pneg %p74
        %p241 = pneg %p71
        %p242 = pneg %p95
        %p243 = pneg %p92
        %p244 = pneg %p116
        %p245 = pneg %p113
        %p246 = pneg %p137
        %p247 = pneg %p134
        %p248 = pneg %p158
        %p249 = pneg %p155
        %p250 = pneg %p184
        %p251 = pneg %p181
        %s252 = sand.u32 %s171, 1
        %s253 = scalar_lea.sflag [#allocation5], %s252
        %s254 = sand.u32 %s171, 1
        %s255 = smul.addr %s254, 256
        %s256 = scalar_lea.vmem [#allocation4], %s255
        %p257 = scmp.lt.s32.totalorder %s24, 1
        %s258 = scalar_select %p257, %s24, 1
        %s259 = smul.addr %s258, 54
        %s260 = smul.addr %s259, 4
        %s261 = scalar_lea.vmem %s0, %s260
        %p263 = scmp.eq.s32.totalorder %s25, 0
        // Predicated region
        $region45: #{conv_inst_relu.1} parent=43 // pred_check
          %p264 = pneg %p263
        $region46: #{conv_inst_relu.1} parent=43 // pred_check_branch
          %266 = sbr.rel (%p264) target = $region48
        $region47: #{conv_inst_relu.1} parent=43 // pred_region
          %267 = vst [vmem:[#allocation3] sm:$0x1] 0.0
        $region48: #{conv_inst_relu.1} parent=43 // pred_fallthru
          _
        %s268 = smul.u32 %s25, 16
        %s269 = smul.u32 %s268, 3
        %s270 = smul.addr %s269, 4
        %s271 = scalar_lea.vmem %s261, %s270
        %v272 = vld [vmem:[%s271] sm:$0xf]
        %v273 = vld [vmem:[%s271 + $0x4] sm:$0xf]
        %v274 = vld [vmem:[%s271 + $0xc] sm:$0xf]
        %v275 = vld [vmem:[%s271 + $0x10] sm:$0xf]
        %v276 = vld [vmem:[%s271 + $0x18] sm:$0xf]
        %v277 = vld [vmem:[%s271 + $0x1c] sm:$0xf]
        %v278 = vld [vmem:[%s271 + $0x24] sm:$0xf]
        %v279 = vld [vmem:[%s271 + $0x28] sm:$0xf]
        %v280 = vld [vmem:[%s271 + $0x30] sm:$0xf]
        %v281 = vld [vmem:[%s271 + $0x34] sm:$0xf]
        %v282 = vld [vmem:[%s271 + $0x3c] sm:$0xf]
        %v283 = vld [vmem:[%s271 + $0x40] sm:$0xf]
        %v284 = vld [vmem:[%s271 + $0x48] sm:$0xf]
        %v285 = vld [vmem:[%s271 + $0x4c] sm:$0xf]
        %v286 = vld [vmem:[%s271 + $0x54] sm:$0xf]
        %v287 = vld [vmem:[%s271 + $0x58] sm:$0xf]
        %v288 = vld [vmem:[%s271 + $0x60] sm:$0xf]
        %v289 = vld [vmem:[%s271 + $0x64] sm:$0xf]
        %v290 = vld [vmem:[%s271 + $0x6c] sm:$0xf]
        %v291 = vld [vmem:[%s271 + $0x70] sm:$0xf]
        %v292 = vld [vmem:[%s271 + $0x78] sm:$0xf]
        %v293 = vld [vmem:[%s271 + $0x7c] sm:$0xf]
        %v294 = vld [vmem:[%s271 + $0x84] sm:$0xf]
        %v295 = vld [vmem:[%s271 + $0x88] sm:$0xf]
        %v296 = vld [vmem:[%s271 + $0x90] sm:$0xf]
        %v297 = vld [vmem:[%s271 + $0x94] sm:$0xf]
        %v298 = vld [vmem:[%s271 + $0x9c] sm:$0xf]
        %v299 = vld [vmem:[%s271 + $0xa0] sm:$0xf]
        %v300 = vld [vmem:[%s271 + $0xa8] sm:$0xf]
        %v301 = vld [vmem:[%s271 + $0xac] sm:$0xf]
        %v302 = vld [vmem:[%s271 + $0xb4] sm:$0xf]
        %v303 = vld [vmem:[%s271 + $0xb8] sm:$0xf]
        %vm304 = vcmask 27648
        %305 = vst.msk [vmem:[#allocation2] sm:$0xf] %vm304, %v272
        %306 = vst.msk [vmem:[#allocation2 + $0x4] sm:$0xf] %vm304, %v273
        %307 = vst.msk [vmem:[#allocation2 + $0x8] sm:$0xf] %vm304, %v274
        %308 = vst.msk [vmem:[#allocation2 + $0xc] sm:$0xf] %vm304, %v275
        %309 = vst.msk [vmem:[#allocation2 + $0x10] sm:$0xf] %vm304, %v276
        %310 = vst.msk [vmem:[#allocation2 + $0x14] sm:$0xf] %vm304, %v277
        %311 = vst.msk [vmem:[#allocation2 + $0x18] sm:$0xf] %vm304, %v278
        %312 = vst.msk [vmem:[#allocation2 + $0x1c] sm:$0xf] %vm304, %v279
        %313 = vst.msk [vmem:[#allocation2 + $0x20] sm:$0xf] %vm304, %v280
        %314 = vst.msk [vmem:[#allocation2 + $0x24] sm:$0xf] %vm304, %v281
        %315 = vst.msk [vmem:[#allocation2 + $0x28] sm:$0xf] %vm304, %v282
        %316 = vst.msk [vmem:[#allocation2 + $0x2c] sm:$0xf] %vm304, %v283
        %317 = vst.msk [vmem:[#allocation2 + $0x30] sm:$0xf] %vm304, %v284
        %318 = vst.msk [vmem:[#allocation2 + $0x34] sm:$0xf] %vm304, %v285
        %319 = vst.msk [vmem:[#allocation2 + $0x38] sm:$0xf] %vm304, %v286
        %320 = vst.msk [vmem:[#allocation2 + $0x3c] sm:$0xf] %vm304, %v287
        %321 = vst.msk [vmem:[#allocation2 + $0x40] sm:$0xf] %vm304, %v288
        %322 = vst.msk [vmem:[#allocation2 + $0x44] sm:$0xf] %vm304, %v289
        %323 = vst.msk [vmem:[#allocation2 + $0x48] sm:$0xf] %vm304, %v290
        %324 = vst.msk [vmem:[#allocation2 + $0x4c] sm:$0xf] %vm304, %v291
        %325 = vst.msk [vmem:[#allocation2 + $0x50] sm:$0xf] %vm304, %v292
        %326 = vst.msk [vmem:[#allocation2 + $0x54] sm:$0xf] %vm304, %v293
        %327 = vst.msk [vmem:[#allocation2 + $0x58] sm:$0xf] %vm304, %v294
        %328 = vst.msk [vmem:[#allocation2 + $0x5c] sm:$0xf] %vm304, %v295
        %329 = vst.msk [vmem:[#allocation2 + $0x60] sm:$0xf] %vm304, %v296
        %330 = vst.msk [vmem:[#allocation2 + $0x64] sm:$0xf] %vm304, %v297
        %331 = vst.msk [vmem:[#allocation2 + $0x68] sm:$0xf] %vm304, %v298
        %332 = vst.msk [vmem:[#allocation2 + $0x6c] sm:$0xf] %vm304, %v299
        %333 = vst.msk [vmem:[#allocation2 + $0x70] sm:$0xf] %vm304, %v300
        %334 = vst.msk [vmem:[#allocation2 + $0x74] sm:$0xf] %vm304, %v301
        %335 = vst.msk [vmem:[#allocation2 + $0x78] sm:$0xf] %vm304, %v302
        %336 = vst.msk [vmem:[#allocation2 + $0x7c] sm:$0xf] %vm304, %v303
        %v337 = vld [vmem:[%s271] sm:$0xf]
        %v338 = vld [vmem:[%s271 + $0x4] sm:$0xf]
        %v339 = vld [vmem:[%s271 + $0x8] sm:$0x1]
        %v340 = vld [vmem:[%s271 + $0xc] sm:$0xf]
        %v341 = vld [vmem:[%s271 + $0x10] sm:$0xf]
        %v342 = vld [vmem:[%s271 + $0x14] sm:$0x1]
        %v343 = vld [vmem:[%s271 + $0x18] sm:$0xf]
        %v344 = vld [vmem:[%s271 + $0x1c] sm:$0xf]
        %v345 = vld [vmem:[%s271 + $0x20] sm:$0x1]
        %v346 = vld [vmem:[%s271 + $0x24] sm:$0xf]
        %v347 = vld [vmem:[%s271 + $0x28] sm:$0xf]
        %v348 = vld [vmem:[%s271 + $0x2c] sm:$0x1]
        %v349 = vld [vmem:[%s271 + $0x30] sm:$0xf]
        %v350 = vld [vmem:[%s271 + $0x34] sm:$0xf]
        %v351 = vld [vmem:[%s271 + $0x38] sm:$0x1]
        %v352 = vld [vmem:[%s271 + $0x3c] sm:$0xf]
        %v353 = vld [vmem:[%s271 + $0x40] sm:$0xf]
        %v354 = vld [vmem:[%s271 + $0x44] sm:$0x1]
        %v355 = vld [vmem:[%s271 + $0x48] sm:$0xf]
        %v356 = vld [vmem:[%s271 + $0x4c] sm:$0xf]
        %v357 = vld [vmem:[%s271 + $0x50] sm:$0x1]
        %v358 = vld [vmem:[%s271 + $0x54] sm:$0xf]
        %v359 = vld [vmem:[%s271 + $0x58] sm:$0xf]
        %v360 = vld [vmem:[%s271 + $0x5c] sm:$0x1]
        %v361 = vld [vmem:[%s271 + $0x60] sm:$0xf]
        %v362 = vld [vmem:[%s271 + $0x64] sm:$0xf]
        %v363 = vld [vmem:[%s271 + $0x68] sm:$0x1]
        %v364 = vld [vmem:[%s271 + $0x6c] sm:$0xf]
        %v365 = vld [vmem:[%s271 + $0x70] sm:$0xf]
        %v366 = vld [vmem:[%s271 + $0x74] sm:$0x1]
        %v367 = vld [vmem:[%s271 + $0x78] sm:$0xf]
        %v368 = vld [vmem:[%s271 + $0x7c] sm:$0xf]
        %v369 = vld [vmem:[%s271 + $0x80] sm:$0x1]
        %v370 = vld [vmem:[%s271 + $0x84] sm:$0xf]
        %v371 = vld [vmem:[%s271 + $0x88] sm:$0xf]
        %v372 = vld [vmem:[%s271 + $0x8c] sm:$0x1]
        %v373 = vld [vmem:[%s271 + $0x90] sm:$0xf]
        %v374 = vld [vmem:[%s271 + $0x94] sm:$0xf]
        %v375 = vld [vmem:[%s271 + $0x98] sm:$0x1]
        %v376 = vld [vmem:[%s271 + $0x9c] sm:$0xf]
        %v377 = vld [vmem:[%s271 + $0xa0] sm:$0xf]
        %v378 = vld [vmem:[%s271 + $0xa4] sm:$0x1]
        %v379 = vld [vmem:[%s271 + $0xa8] sm:$0xf]
        %v380 = vld [vmem:[%s271 + $0xac] sm:$0xf]
        %v381 = vld [vmem:[%s271 + $0xb0] sm:$0x1]
        %v382 = vld [vmem:[%s271 + $0xb4] sm:$0xf]
        %v383 = vld [vmem:[%s271 + $0xb8] sm:$0xf]
        %v384 = vld [vmem:[%s271 + $0xbc] sm:$0x1]
        %vm385 = vsmask.f32 3328
        %vm386 = vsmask.f32 7440
        %vm387 = vmor %vm385, %vm386
        %v389 = vshrl.u32 %v337, 16
        %v391 = vrot.slane %v389, 4
        %v392 = vshll.u32 %v337, 16
        %v394 = vrot.slane %v392, 5
        %v395 = vor.u32 %v391, %v394
        %v396 = vrot.slane %v395, 4
        %v398 = vshll.u32 %v338, 16
        %v400 = vrot.slane %v398, 5
        %v401 = vsel %vm387, %v396, %v400
        %v402 = vshrl.u32 %v338, 16
        %v404 = vrot.slane %v402, 4
        %v405 = vor.u32 %v404, %v400
        %v406 = vrot.slane %v405, 4
        %v408 = vshll.u32 %v339, 16
        %v410 = vrot.slane %v408, 5
        %v411 = vsel %vm387, %v406, %v410
        %v413 = vshrl.u32 %v340, 16
        %v415 = vrot.slane %v413, 4
        %v416 = vshll.u32 %v340, 16
        %v418 = vrot.slane %v416, 5
        %v419 = vor.u32 %v415, %v418
        %v420 = vrot.slane %v419, 4
        %v422 = vshll.u32 %v341, 16
        %v424 = vrot.slane %v422, 5
        %v425 = vsel %vm387, %v420, %v424
        %v426 = vshrl.u32 %v341, 16
        %v428 = vrot.slane %v426, 4
        %v429 = vor.u32 %v428, %v424
        %v430 = vrot.slane %v429, 4
        %v432 = vshll.u32 %v342, 16
        %v434 = vrot.slane %v432, 5
        %v435 = vsel %vm387, %v430, %v434
        %v437 = vshrl.u32 %v343, 16
        %v439 = vrot.slane %v437, 4
        %v440 = vshll.u32 %v343, 16
        %v442 = vrot.slane %v440, 5
        %v443 = vor.u32 %v439, %v442
        %v444 = vrot.slane %v443, 4
        %v446 = vshll.u32 %v344, 16
        %v448 = vrot.slane %v446, 5
        %v449 = vsel %vm387, %v444, %v448
        %v450 = vshrl.u32 %v344, 16
        %v452 = vrot.slane %v450, 4
        %v453 = vor.u32 %v452, %v448
        %v454 = vrot.slane %v453, 4
        %v456 = vshll.u32 %v345, 16
        %v458 = vrot.slane %v456, 5
        %v459 = vsel %vm387, %v454, %v458
        %v461 = vshrl.u32 %v346, 16
        %v463 = vrot.slane %v461, 4
        %v464 = vshll.u32 %v346, 16
        %v466 = vrot.slane %v464, 5
        %v467 = vor.u32 %v463, %v466
        %v468 = vrot.slane %v467, 4
        %v470 = vshll.u32 %v347, 16
        %v472 = vrot.slane %v470, 5
        %v473 = vsel %vm387, %v468, %v472
        %v474 = vshrl.u32 %v347, 16
        %v476 = vrot.slane %v474, 4
        %v477 = vor.u32 %v476, %v472
        %v478 = vrot.slane %v477, 4
        %v480 = vshll.u32 %v348, 16
        %v482 = vrot.slane %v480, 5
        %v483 = vsel %vm387, %v478, %v482
        %v485 = vshrl.u32 %v349, 16
        %v487 = vrot.slane %v485, 4
        %v488 = vshll.u32 %v349, 16
        %v490 = vrot.slane %v488, 5
        %v491 = vor.u32 %v487, %v490
        %v492 = vrot.slane %v491, 4
        %v494 = vshll.u32 %v350, 16
        %v496 = vrot.slane %v494, 5
        %v497 = vsel %vm387, %v492, %v496
        %v498 = vshrl.u32 %v350, 16
        %v500 = vrot.slane %v498, 4
        %v501 = vor.u32 %v500, %v496
        %v502 = vrot.slane %v501, 4
        %v504 = vshll.u32 %v351, 16
        %v506 = vrot.slane %v504, 5
        %v507 = vsel %vm387, %v502, %v506
        %v509 = vshrl.u32 %v352, 16
        %v511 = vrot.slane %v509, 4
        %v512 = vshll.u32 %v352, 16
        %v514 = vrot.slane %v512, 5
        %v515 = vor.u32 %v511, %v514
        %v516 = vrot.slane %v515, 4
        %v518 = vshll.u32 %v353, 16
        %v520 = vrot.slane %v518, 5
        %v521 = vsel %vm387, %v516, %v520
        %v522 = vshrl.u32 %v353, 16
        %v524 = vrot.slane %v522, 4
        %v525 = vor.u32 %v524, %v520
        %v526 = vrot.slane %v525, 4
        %v528 = vshll.u32 %v354, 16
        %v530 = vrot.slane %v528, 5
        %v531 = vsel %vm387, %v526, %v530
        %v533 = vshrl.u32 %v355, 16
        %v535 = vrot.slane %v533, 4
        %v536 = vshll.u32 %v355, 16
        %v538 = vrot.slane %v536, 5
        %v539 = vor.u32 %v535, %v538
        %v540 = vrot.slane %v539, 4
        %v542 = vshll.u32 %v356, 16
        %v544 = vrot.slane %v542, 5
        %v545 = vsel %vm387, %v540, %v544
        %v546 = vshrl.u32 %v356, 16
        %v548 = vrot.slane %v546, 4
        %v549 = vor.u32 %v548, %v544
        %v550 = vrot.slane %v549, 4
        %v552 = vshll.u32 %v357, 16
        %v554 = vrot.slane %v552, 5
        %v555 = vsel %vm387, %v550, %v554
        %v557 = vshrl.u32 %v358, 16
        %v559 = vrot.slane %v557, 4
        %v560 = vshll.u32 %v358, 16
        %v562 = vrot.slane %v560, 5
        %v563 = vor.u32 %v559, %v562
        %v564 = vrot.slane %v563, 4
        %v566 = vshll.u32 %v359, 16
        %v568 = vrot.slane %v566, 5
        %v569 = vsel %vm387, %v564, %v568
        %v570 = vshrl.u32 %v359, 16
        %v572 = vrot.slane %v570, 4
        %v573 = vor.u32 %v572, %v568
        %v574 = vrot.slane %v573, 4
        %v576 = vshll.u32 %v360, 16
        %v578 = vrot.slane %v576, 5
        %v579 = vsel %vm387, %v574, %v578
        %v581 = vshrl.u32 %v361, 16
        %v583 = vrot.slane %v581, 4
        %v584 = vshll.u32 %v361, 16
        %v586 = vrot.slane %v584, 5
        %v587 = vor.u32 %v583, %v586
        %v588 = vrot.slane %v587, 4
        %v590 = vshll.u32 %v362, 16
        %v592 = vrot.slane %v590, 5
        %v593 = vsel %vm387, %v588, %v592
        %v594 = vshrl.u32 %v362, 16
        %v596 = vrot.slane %v594, 4
        %v597 = vor.u32 %v596, %v592
        %v598 = vrot.slane %v597, 4
        %v600 = vshll.u32 %v363, 16
        %v602 = vrot.slane %v600, 5
        %v603 = vsel %vm387, %v598, %v602
        %v605 = vshrl.u32 %v364, 16
        %v607 = vrot.slane %v605, 4
        %v608 = vshll.u32 %v364, 16
        %v610 = vrot.slane %v608, 5
        %v611 = vor.u32 %v607, %v610
        %v612 = vrot.slane %v611, 4
        %v614 = vshll.u32 %v365, 16
        %v616 = vrot.slane %v614, 5
        %v617 = vsel %vm387, %v612, %v616
        %v618 = vshrl.u32 %v365, 16
        %v620 = vrot.slane %v618, 4
        %v621 = vor.u32 %v620, %v616
        %v622 = vrot.slane %v621, 4
        %v624 = vshll.u32 %v366, 16
        %v626 = vrot.slane %v624, 5
        %v627 = vsel %vm387, %v622, %v626
        %v629 = vshrl.u32 %v367, 16
        %v631 = vrot.slane %v629, 4
        %v632 = vshll.u32 %v367, 16
        %v634 = vrot.slane %v632, 5
        %v635 = vor.u32 %v631, %v634
        %v636 = vrot.slane %v635, 4
        %v638 = vshll.u32 %v368, 16
        %v640 = vrot.slane %v638, 5
        %v641 = vsel %vm387, %v636, %v640
        %v642 = vshrl.u32 %v368, 16
        %v644 = vrot.slane %v642, 4
        %v645 = vor.u32 %v644, %v640
        %v646 = vrot.slane %v645, 4
        %v648 = vshll.u32 %v369, 16
        %v650 = vrot.slane %v648, 5
        %v651 = vsel %vm387, %v646, %v650
        %v653 = vshrl.u32 %v370, 16
        %v655 = vrot.slane %v653, 4
        %v656 = vshll.u32 %v370, 16
        %v658 = vrot.slane %v656, 5
        %v659 = vor.u32 %v655, %v658
        %v660 = vrot.slane %v659, 4
        %v662 = vshll.u32 %v371, 16
        %v664 = vrot.slane %v662, 5
        %v665 = vsel %vm387, %v660, %v664
        %v666 = vshrl.u32 %v371, 16
        %v668 = vrot.slane %v666, 4
        %v669 = vor.u32 %v668, %v664
        %v670 = vrot.slane %v669, 4
        %v672 = vshll.u32 %v372, 16
        %v674 = vrot.slane %v672, 5
        %v675 = vsel %vm387, %v670, %v674
        %v677 = vshrl.u32 %v373, 16
        %v679 = vrot.slane %v677, 4
        %v680 = vshll.u32 %v373, 16
        %v682 = vrot.slane %v680, 5
        %v683 = vor.u32 %v679, %v682
        %v684 = vrot.slane %v683, 4
        %v686 = vshll.u32 %v374, 16
        %v688 = vrot.slane %v686, 5
        %v689 = vsel %vm387, %v684, %v688
        %v690 = vshrl.u32 %v374, 16
        %v692 = vrot.slane %v690, 4
        %v693 = vor.u32 %v692, %v688
        %v694 = vrot.slane %v693, 4
        %v696 = vshll.u32 %v375, 16
        %v698 = vrot.slane %v696, 5
        %v699 = vsel %vm387, %v694, %v698
        %v701 = vshrl.u32 %v376, 16
        %v703 = vrot.slane %v701, 4
        %v704 = vshll.u32 %v376, 16
        %v706 = vrot.slane %v704, 5
        %v707 = vor.u32 %v703, %v706
        %v708 = vrot.slane %v707, 4
        %v710 = vshll.u32 %v377, 16
        %v712 = vrot.slane %v710, 5
        %v713 = vsel %vm387, %v708, %v712
        %v714 = vshrl.u32 %v377, 16
        %v716 = vrot.slane %v714, 4
        %v717 = vor.u32 %v716, %v712
        %v718 = vrot.slane %v717, 4
        %v720 = vshll.u32 %v378, 16
        %v722 = vrot.slane %v720, 5
        %v723 = vsel %vm387, %v718, %v722
        %v725 = vshrl.u32 %v379, 16
        %v727 = vrot.slane %v725, 4
        %v728 = vshll.u32 %v379, 16
        %v730 = vrot.slane %v728, 5
        %v731 = vor.u32 %v727, %v730
        %v732 = vrot.slane %v731, 4
        %v734 = vshll.u32 %v380, 16
        %v736 = vrot.slane %v734, 5
        %v737 = vsel %vm387, %v732, %v736
        %v738 = vshrl.u32 %v380, 16
        %v740 = vrot.slane %v738, 4
        %v741 = vor.u32 %v740, %v736
        %v742 = vrot.slane %v741, 4
        %v744 = vshll.u32 %v381, 16
        %v746 = vrot.slane %v744, 5
        %v747 = vsel %vm387, %v742, %v746
        %v749 = vshrl.u32 %v382, 16
        %v751 = vrot.slane %v749, 4
        %v752 = vshll.u32 %v382, 16
        %v754 = vrot.slane %v752, 5
        %v755 = vor.u32 %v751, %v754
        %v756 = vrot.slane %v755, 4
        %v758 = vshll.u32 %v383, 16
        %v760 = vrot.slane %v758, 5
        %v761 = vsel %vm387, %v756, %v760
        %v762 = vshrl.u32 %v383, 16
        %v764 = vrot.slane %v762, 4
        %v765 = vor.u32 %v764, %v760
        %v766 = vrot.slane %v765, 4
        %v768 = vshll.u32 %v384, 16
        %v770 = vrot.slane %v768, 5
        %v771 = vsel %vm387, %v766, %v770
        %772 = vrot.lane.b32.xlu0 %v401, 4
        %v773 = vpop.permute.xlu0 %772
        %774 = vrot.lane.b32.xlu0 %v411, 4
        %v775 = vpop.permute.xlu0 %774
        %776 = vrot.lane.b32.xlu0 %v425, 4
        %v777 = vpop.permute.xlu0 %776
        %778 = vrot.lane.b32.xlu0 %v435, 4
        %v779 = vpop.permute.xlu0 %778
        %780 = vrot.lane.b32.xlu0 %v449, 4
        %v781 = vpop.permute.xlu0 %780
        %782 = vrot.lane.b32.xlu0 %v459, 4
        %v783 = vpop.permute.xlu0 %782
        %784 = vrot.lane.b32.xlu0 %v473, 4
        %v785 = vpop.permute.xlu0 %784
        %786 = vrot.lane.b32.xlu0 %v483, 4
        %v787 = vpop.permute.xlu0 %786
        %788 = vrot.lane.b32.xlu0 %v497, 4
        %v789 = vpop.permute.xlu0 %788
        %790 = vrot.lane.b32.xlu0 %v507, 4
        %v791 = vpop.permute.xlu0 %790
        %792 = vrot.lane.b32.xlu0 %v521, 4
        %v793 = vpop.permute.xlu0 %792
        %794 = vrot.lane.b32.xlu0 %v531, 4
        %v795 = vpop.permute.xlu0 %794
        %796 = vrot.lane.b32.xlu0 %v545, 4
        %v797 = vpop.permute.xlu0 %796
        %798 = vrot.lane.b32.xlu0 %v555, 4
        %v799 = vpop.permute.xlu0 %798
        %800 = vrot.lane.b32.xlu0 %v569, 4
        %v801 = vpop.permute.xlu0 %800
        %802 = vrot.lane.b32.xlu0 %v579, 4
        %v803 = vpop.permute.xlu0 %802
        %804 = vrot.lane.b32.xlu0 %v593, 4
        %v805 = vpop.permute.xlu0 %804
        %806 = vrot.lane.b32.xlu0 %v603, 4
        %v807 = vpop.permute.xlu0 %806
        %808 = vrot.lane.b32.xlu0 %v617, 4
        %v809 = vpop.permute.xlu0 %808
        %810 = vrot.lane.b32.xlu0 %v627, 4
        %v811 = vpop.permute.xlu0 %810
        %812 = vrot.lane.b32.xlu0 %v641, 4
        %v813 = vpop.permute.xlu0 %812
        %814 = vrot.lane.b32.xlu0 %v651, 4
        %v815 = vpop.permute.xlu0 %814
        %816 = vrot.lane.b32.xlu0 %v665, 4
        %v817 = vpop.permute.xlu0 %816
        %818 = vrot.lane.b32.xlu0 %v675, 4
        %v819 = vpop.permute.xlu0 %818
        %820 = vrot.lane.b32.xlu0 %v689, 4
        %v821 = vpop.permute.xlu0 %820
        %822 = vrot.lane.b32.xlu0 %v699, 4
        %v823 = vpop.permute.xlu0 %822
        %824 = vrot.lane.b32.xlu0 %v713, 4
        %v825 = vpop.permute.xlu0 %824
        %826 = vrot.lane.b32.xlu0 %v723, 4
        %v827 = vpop.permute.xlu0 %826
        %828 = vrot.lane.b32.xlu0 %v737, 4
        %v829 = vpop.permute.xlu0 %828
        %830 = vrot.lane.b32.xlu0 %v747, 4
        %v831 = vpop.permute.xlu0 %830
        %832 = vrot.lane.b32.xlu0 %v761, 4
        %v833 = vpop.permute.xlu0 %832
        %834 = vrot.lane.b32.xlu0 %v771, 4
        %v835 = vpop.permute.xlu0 %834
        %vm868 = vcmask 60448
        %869 = vst.msk [vmem:[#allocation2] sm:$0xf] %vm868, %v773
        %870 = vst.msk [vmem:[#allocation2 + $0x4] sm:$0xf] %vm868, %v775
        %871 = vst.msk [vmem:[#allocation2 + $0x8] sm:$0xf] %vm868, %v777
        %872 = vst.msk [vmem:[#allocation2 + $0xc] sm:$0xf] %vm868, %v779
        %873 = vst.msk [vmem:[#allocation2 + $0x10] sm:$0xf] %vm868, %v781
        %874 = vst.msk [vmem:[#allocation2 + $0x14] sm:$0xf] %vm868, %v783
        %875 = vst.msk [vmem:[#allocation2 + $0x18] sm:$0xf] %vm868, %v785
        %876 = vst.msk [vmem:[#allocation2 + $0x1c] sm:$0xf] %vm868, %v787
        %877 = vst.msk [vmem:[#allocation2 + $0x20] sm:$0xf] %vm868, %v789
        %878 = vst.msk [vmem:[#allocation2 + $0x24] sm:$0xf] %vm868, %v791
        %879 = vst.msk [vmem:[#allocation2 + $0x28] sm:$0xf] %vm868, %v793
        %880 = vst.msk [vmem:[#allocation2 + $0x2c] sm:$0xf] %vm868, %v795
        %881 = vst.msk [vmem:[#allocation2 + $0x30] sm:$0xf] %vm868, %v797
        %882 = vst.msk [vmem:[#allocation2 + $0x34] sm:$0xf] %vm868, %v799
        %883 = vst.msk [vmem:[#allocation2 + $0x38] sm:$0xf] %vm868, %v801
        %884 = vst.msk [vmem:[#allocation2 + $0x3c] sm:$0xf] %vm868, %v803
        %885 = vst.msk [vmem:[#allocation2 + $0x40] sm:$0xf] %vm868, %v805
        %886 = vst.msk [vmem:[#allocation2 + $0x44] sm:$0xf] %vm868, %v807
        %887 = vst.msk [vmem:[#allocation2 + $0x48] sm:$0xf] %vm868, %v809
        %888 = vst.msk [vmem:[#allocation2 + $0x4c] sm:$0xf] %vm868, %v811
        %889 = vst.msk [vmem:[#allocation2 + $0x50] sm:$0xf] %vm868, %v813
        %890 = vst.msk [vmem:[#allocation2 + $0x54] sm:$0xf] %vm868, %v815
        %891 = vst.msk [vmem:[#allocation2 + $0x58] sm:$0xf] %vm868, %v817
        %892 = vst.msk [vmem:[#allocation2 + $0x5c] sm:$0xf] %vm868, %v819
        %893 = vst.msk [vmem:[#allocation2 + $0x60] sm:$0xf] %vm868, %v821
        %894 = vst.msk [vmem:[#allocation2 + $0x64] sm:$0xf] %vm868, %v823
        %895 = vst.msk [vmem:[#allocation2 + $0x68] sm:$0xf] %vm868, %v825
        %896 = vst.msk [vmem:[#allocation2 + $0x6c] sm:$0xf] %vm868, %v827
        %897 = vst.msk [vmem:[#allocation2 + $0x70] sm:$0xf] %vm868, %v829
        %898 = vst.msk [vmem:[#allocation2 + $0x74] sm:$0xf] %vm868, %v831
        %899 = vst.msk [vmem:[#allocation2 + $0x78] sm:$0xf] %vm868, %v833
        %900 = vst.msk [vmem:[#allocation2 + $0x7c] sm:$0xf] %vm868, %v835
        %v901 = vld [vmem:[%s271] sm:$0xe]
        %v902 = vld [vmem:[%s271 + $0x4] sm:$0xf]
        %v903 = vld [vmem:[%s271 + $0x8] sm:$0x1]
        %v904 = vld [vmem:[%s271 + $0xc] sm:$0xe]
        %v905 = vld [vmem:[%s271 + $0x10] sm:$0xf]
        %v906 = vld [vmem:[%s271 + $0x14] sm:$0x1]
        %v907 = vld [vmem:[%s271 + $0x18] sm:$0xe]
        %v908 = vld [vmem:[%s271 + $0x1c] sm:$0xf]
        %v909 = vld [vmem:[%s271 + $0x20] sm:$0x1]
        %v910 = vld [vmem:[%s271 + $0x24] sm:$0xe]
        %v911 = vld [vmem:[%s271 + $0x28] sm:$0xf]
        %v912 = vld [vmem:[%s271 + $0x2c] sm:$0x1]
        %v913 = vld [vmem:[%s271 + $0x30] sm:$0xe]
        %v914 = vld [vmem:[%s271 + $0x34] sm:$0xf]
        %v915 = vld [vmem:[%s271 + $0x38] sm:$0x1]
        %v916 = vld [vmem:[%s271 + $0x3c] sm:$0xe]
        %v917 = vld [vmem:[%s271 + $0x40] sm:$0xf]
        %v918 = vld [vmem:[%s271 + $0x44] sm:$0x1]
        %v919 = vld [vmem:[%s271 + $0x48] sm:$0xe]
        %v920 = vld [vmem:[%s271 + $0x4c] sm:$0xf]
        %v921 = vld [vmem:[%s271 + $0x50] sm:$0x1]
        %v922 = vld [vmem:[%s271 + $0x54] sm:$0xe]
        %v923 = vld [vmem:[%s271 + $0x58] sm:$0xf]
        %v924 = vld [vmem:[%s271 + $0x5c] sm:$0x1]
        %v925 = vld [vmem:[%s271 + $0x60] sm:$0xe]
        %v926 = vld [vmem:[%s271 + $0x64] sm:$0xf]
        %v927 = vld [vmem:[%s271 + $0x68] sm:$0x1]
        %v928 = vld [vmem:[%s271 + $0x6c] sm:$0xe]
        %v929 = vld [vmem:[%s271 + $0x70] sm:$0xf]
        %v930 = vld [vmem:[%s271 + $0x74] sm:$0x1]
        %v931 = vld [vmem:[%s271 + $0x78] sm:$0xe]
        %v932 = vld [vmem:[%s271 + $0x7c] sm:$0xf]
        %v933 = vld [vmem:[%s271 + $0x80] sm:$0x1]
        %v934 = vld [vmem:[%s271 + $0x84] sm:$0xe]
        %v935 = vld [vmem:[%s271 + $0x88] sm:$0xf]
        %v936 = vld [vmem:[%s271 + $0x8c] sm:$0x1]
        %v937 = vld [vmem:[%s271 + $0x90] sm:$0xe]
        %v938 = vld [vmem:[%s271 + $0x94] sm:$0xf]
        %v939 = vld [vmem:[%s271 + $0x98] sm:$0x1]
        %v940 = vld [vmem:[%s271 + $0x9c] sm:$0xe]
        %v941 = vld [vmem:[%s271 + $0xa0] sm:$0xf]
        %v942 = vld [vmem:[%s271 + $0xa4] sm:$0x1]
        %v943 = vld [vmem:[%s271 + $0xa8] sm:$0xe]
        %v944 = vld [vmem:[%s271 + $0xac] sm:$0xf]
        %v945 = vld [vmem:[%s271 + $0xb0] sm:$0x1]
        %v946 = vld [vmem:[%s271 + $0xb4] sm:$0xe]
        %v947 = vld [vmem:[%s271 + $0xb8] sm:$0xf]
        %v948 = vld [vmem:[%s271 + $0xbc] sm:$0x1]
        %vm997 = vcmask 1042432
        %vm998 = vcmask 1046532
        %vm999 = vmor %vm997, %vm998
        %v1000 = vrot.slane %v901, 5
        %v1001 = vrot.slane %v1000, 4
        %v1002 = vrot.slane %v902, 5
        %v1003 = vsel %vm999, %v1001, %v1002
        %v1004 = vrot.slane %v1002, 4
        %v1005 = vrot.slane %v903, 5
        %v1006 = vsel %vm999, %v1004, %v1005
        %v1007 = vrot.slane %v904, 5
        %v1008 = vrot.slane %v1007, 4
        %v1009 = vrot.slane %v905, 5
        %v1010 = vsel %vm999, %v1008, %v1009
        %v1011 = vrot.slane %v1009, 4
        %v1012 = vrot.slane %v906, 5
        %v1013 = vsel %vm999, %v1011, %v1012
        %v1014 = vrot.slane %v907, 5
        %v1015 = vrot.slane %v1014, 4
        %v1016 = vrot.slane %v908, 5
        %v1017 = vsel %vm999, %v1015, %v1016
        %v1018 = vrot.slane %v1016, 4
        %v1019 = vrot.slane %v909, 5
        %v1020 = vsel %vm999, %v1018, %v1019
        %v1021 = vrot.slane %v910, 5
        %v1022 = vrot.slane %v1021, 4
        %v1023 = vrot.slane %v911, 5
        %v1024 = vsel %vm999, %v1022, %v1023
        %v1025 = vrot.slane %v1023, 4
        %v1026 = vrot.slane %v912, 5
        %v1027 = vsel %vm999, %v1025, %v1026
        %v1028 = vrot.slane %v913, 5
        %v1029 = vrot.slane %v1028, 4
        %v1030 = vrot.slane %v914, 5
        %v1031 = vsel %vm999, %v1029, %v1030
        %v1032 = vrot.slane %v1030, 4
        %v1033 = vrot.slane %v915, 5
        %v1034 = vsel %vm999, %v1032, %v1033
        %v1035 = vrot.slane %v916, 5
        %v1036 = vrot.slane %v1035, 4
        %v1037 = vrot.slane %v917, 5
        %v1038 = vsel %vm999, %v1036, %v1037
        %v1039 = vrot.slane %v1037, 4
        %v1040 = vrot.slane %v918, 5
        %v1041 = vsel %vm999, %v1039, %v1040
        %v1042 = vrot.slane %v919, 5
        %v1043 = vrot.slane %v1042, 4
        %v1044 = vrot.slane %v920, 5
        %v1045 = vsel %vm999, %v1043, %v1044
        %v1046 = vrot.slane %v1044, 4
        %v1047 = vrot.slane %v921, 5
        %v1048 = vsel %vm999, %v1046, %v1047
        %v1049 = vrot.slane %v922, 5
        %v1050 = vrot.slane %v1049, 4
        %v1051 = vrot.slane %v923, 5
        %v1052 = vsel %vm999, %v1050, %v1051
        %v1053 = vrot.slane %v1051, 4
        %v1054 = vrot.slane %v924, 5
        %v1055 = vsel %vm999, %v1053, %v1054
        %v1056 = vrot.slane %v925, 5
        %v1057 = vrot.slane %v1056, 4
        %v1058 = vrot.slane %v926, 5
        %v1059 = vsel %vm999, %v1057, %v1058
        %v1060 = vrot.slane %v1058, 4
        %v1061 = vrot.slane %v927, 5
        %v1062 = vsel %vm999, %v1060, %v1061
        %v1063 = vrot.slane %v928, 5
        %v1064 = vrot.slane %v1063, 4
        %v1065 = vrot.slane %v929, 5
        %v1066 = vsel %vm999, %v1064, %v1065
        %v1067 = vrot.slane %v1065, 4
        %v1068 = vrot.slane %v930, 5
        %v1069 = vsel %vm999, %v1067, %v1068
        %v1070 = vrot.slane %v931, 5
        %v1071 = vrot.slane %v1070, 4
        %v1072 = vrot.slane %v932, 5
        %v1073 = vsel %vm999, %v1071, %v1072
        %v1074 = vrot.slane %v1072, 4
        %v1075 = vrot.slane %v933, 5
        %v1076 = vsel %vm999, %v1074, %v1075
        %v1077 = vrot.slane %v934, 5
        %v1078 = vrot.slane %v1077, 4
        %v1079 = vrot.slane %v935, 5
        %v1080 = vsel %vm999, %v1078, %v1079
        %v1081 = vrot.slane %v1079, 4
        %v1082 = vrot.slane %v936, 5
        %v1083 = vsel %vm999, %v1081, %v1082
        %v1084 = vrot.slane %v937, 5
        %v1085 = vrot.slane %v1084, 4
        %v1086 = vrot.slane %v938, 5
        %v1087 = vsel %vm999, %v1085, %v1086
        %v1088 = vrot.slane %v1086, 4
        %v1089 = vrot.slane %v939, 5
        %v1090 = vsel %vm999, %v1088, %v1089
        %v1091 = vrot.slane %v940, 5
        %v1092 = vrot.slane %v1091, 4
        %v1093 = vrot.slane %v941, 5
        %v1094 = vsel %vm999, %v1092, %v1093
        %v1095 = vrot.slane %v1093, 4
        %v1096 = vrot.slane %v942, 5
        %v1097 = vsel %vm999, %v1095, %v1096
        %v1098 = vrot.slane %v943, 5
        %v1099 = vrot.slane %v1098, 4
        %v1100 = vrot.slane %v944, 5
        %v1101 = vsel %vm999, %v1099, %v1100
        %v1102 = vrot.slane %v1100, 4
        %v1103 = vrot.slane %v945, 5
        %v1104 = vsel %vm999, %v1102, %v1103
        %v1105 = vrot.slane %v946, 5
        %v1106 = vrot.slane %v1105, 4
        %v1107 = vrot.slane %v947, 5
        %v1108 = vsel %vm999, %v1106, %v1107
        %v1109 = vrot.slane %v1107, 4
        %v1110 = vrot.slane %v948, 5
        %v1111 = vsel %vm999, %v1109, %v1110
        %1112 = vrot.lane.b32.xlu0 %v1003, 8
        %v1113 = vpop.permute.xlu0 %1112
        %1114 = vrot.lane.b32.xlu0 %v1006, 8
        %v1115 = vpop.permute.xlu0 %1114
        %1116 = vrot.lane.b32.xlu0 %v1010, 8
        %v1117 = vpop.permute.xlu0 %1116
        %1118 = vrot.lane.b32.xlu0 %v1013, 8
        %v1119 = vpop.permute.xlu0 %1118
        %1120 = vrot.lane.b32.xlu0 %v1017, 8
        %v1121 = vpop.permute.xlu0 %1120
        %1122 = vrot.lane.b32.xlu0 %v1020, 8
        %v1123 = vpop.permute.xlu0 %1122
        %1124 = vrot.lane.b32.xlu0 %v1024, 8
        %v1125 = vpop.permute.xlu0 %1124
        %1126 = vrot.lane.b32.xlu0 %v1027, 8
        %v1127 = vpop.permute.xlu0 %1126
        %1128 = vrot.lane.b32.xlu0 %v1031, 8
        %v1129 = vpop.permute.xlu0 %1128
        %1130 = vrot.lane.b32.xlu0 %v1034, 8
        %v1131 = vpop.permute.xlu0 %1130
        %1132 = vrot.lane.b32.xlu0 %v1038, 8
        %v1133 = vpop.permute.xlu0 %1132
        %1134 = vrot.lane.b32.xlu0 %v1041, 8
        %v1135 = vpop.permute.xlu0 %1134
        %1136 = vrot.lane.b32.xlu0 %v1045, 8
        %v1137 = vpop.permute.xlu0 %1136
        %1138 = vrot.lane.b32.xlu0 %v1048, 8
        %v1139 = vpop.permute.xlu0 %1138
        %1140 = vrot.lane.b32.xlu0 %v1052, 8
        %v1141 = vpop.permute.xlu0 %1140
        %1142 = vrot.lane.b32.xlu0 %v1055, 8
        %v1143 = vpop.permute.xlu0 %1142
        %1144 = vrot.lane.b32.xlu0 %v1059, 8
        %v1145 = vpop.permute.xlu0 %1144
        %1146 = vrot.lane.b32.xlu0 %v1062, 8
        %v1147 = vpop.permute.xlu0 %1146
        %1148 = vrot.lane.b32.xlu0 %v1066, 8
        %v1149 = vpop.permute.xlu0 %1148
        %1150 = vrot.lane.b32.xlu0 %v1069, 8
        %v1151 = vpop.permute.xlu0 %1150
        %1152 = vrot.lane.b32.xlu0 %v1073, 8
        %v1153 = vpop.permute.xlu0 %1152
        %1154 = vrot.lane.b32.xlu0 %v1076, 8
        %v1155 = vpop.permute.xlu0 %1154
        %1156 = vrot.lane.b32.xlu0 %v1080, 8
        %v1157 = vpop.permute.xlu0 %1156
        %1158 = vrot.lane.b32.xlu0 %v1083, 8
        %v1159 = vpop.permute.xlu0 %1158
        %1160 = vrot.lane.b32.xlu0 %v1087, 8
        %v1161 = vpop.permute.xlu0 %1160
        %1162 = vrot.lane.b32.xlu0 %v1090, 8
        %v1163 = vpop.permute.xlu0 %1162
        %1164 = vrot.lane.b32.xlu0 %v1094, 8
        %v1165 = vpop.permute.xlu0 %1164
        %1166 = vrot.lane.b32.xlu0 %v1097, 8
        %v1167 = vpop.permute.xlu0 %1166
        %1168 = vrot.lane.b32.xlu0 %v1101, 8
        %v1169 = vpop.permute.xlu0 %1168
        %1170 = vrot.lane.b32.xlu0 %v1104, 8
        %v1171 = vpop.permute.xlu0 %1170
        %1172 = vrot.lane.b32.xlu0 %v1108, 8
        %v1173 = vpop.permute.xlu0 %1172
        %1174 = vrot.lane.b32.xlu0 %v1111, 8
        %v1175 = vpop.permute.xlu0 %1174
        %vm1208 = vcmask 93248
        %1209 = vst.msk [vmem:[#allocation2] sm:$0xf] %vm1208, %v1113
        %1210 = vst.msk [vmem:[#allocation2 + $0x4] sm:$0xf] %vm1208, %v1115
        %1211 = vst.msk [vmem:[#allocation2 + $0x8] sm:$0xf] %vm1208, %v1117
        %1212 = vst.msk [vmem:[#allocation2 + $0xc] sm:$0xf] %vm1208, %v1119
        %1213 = vst.msk [vmem:[#allocation2 + $0x10] sm:$0xf] %vm1208, %v1121
        %1214 = vst.msk [vmem:[#allocation2 + $0x14] sm:$0xf] %vm1208, %v1123
        %1215 = vst.msk [vmem:[#allocation2 + $0x18] sm:$0xf] %vm1208, %v1125
        %1216 = vst.msk [vmem:[#allocation2 + $0x1c] sm:$0xf] %vm1208, %v1127
        %1217 = vst.msk [vmem:[#allocation2 + $0x20] sm:$0xf] %vm1208, %v1129
        %1218 = vst.msk [vmem:[#allocation2 + $0x24] sm:$0xf] %vm1208, %v1131
        %1219 = vst.msk [vmem:[#allocation2 + $0x28] sm:$0xf] %vm1208, %v1133
        %1220 = vst.msk [vmem:[#allocation2 + $0x2c] sm:$0xf] %vm1208, %v1135
        %1221 = vst.msk [vmem:[#allocation2 + $0x30] sm:$0xf] %vm1208, %v1137
        %1222 = vst.msk [vmem:[#allocation2 + $0x34] sm:$0xf] %vm1208, %v1139
        %1223 = vst.msk [vmem:[#allocation2 + $0x38] sm:$0xf] %vm1208, %v1141
        %1224 = vst.msk [vmem:[#allocation2 + $0x3c] sm:$0xf] %vm1208, %v1143
        %1225 = vst.msk [vmem:[#allocation2 + $0x40] sm:$0xf] %vm1208, %v1145
        %1226 = vst.msk [vmem:[#allocation2 + $0x44] sm:$0xf] %vm1208, %v1147
        %1227 = vst.msk [vmem:[#allocation2 + $0x48] sm:$0xf] %vm1208, %v1149
        %1228 = vst.msk [vmem:[#allocation2 + $0x4c] sm:$0xf] %vm1208, %v1151
        %1229 = vst.msk [vmem:[#allocation2 + $0x50] sm:$0xf] %vm1208, %v1153
        %1230 = vst.msk [vmem:[#allocation2 + $0x54] sm:$0xf] %vm1208, %v1155
        %1231 = vst.msk [vmem:[#allocation2 + $0x58] sm:$0xf] %vm1208, %v1157
        %1232 = vst.msk [vmem:[#allocation2 + $0x5c] sm:$0xf] %vm1208, %v1159
        %1233 = vst.msk [vmem:[#allocation2 + $0x60] sm:$0xf] %vm1208, %v1161
        %1234 = vst.msk [vmem:[#allocation2 + $0x64] sm:$0xf] %vm1208, %v1163
        %1235 = vst.msk [vmem:[#allocation2 + $0x68] sm:$0xf] %vm1208, %v1165
        %1236 = vst.msk [vmem:[#allocation2 + $0x6c] sm:$0xf] %vm1208, %v1167
        %1237 = vst.msk [vmem:[#allocation2 + $0x70] sm:$0xf] %vm1208, %v1169
        %1238 = vst.msk [vmem:[#allocation2 + $0x74] sm:$0xf] %vm1208, %v1171
        %1239 = vst.msk [vmem:[#allocation2 + $0x78] sm:$0xf] %vm1208, %v1173
        %1240 = vst.msk [vmem:[#allocation2 + $0x7c] sm:$0xf] %vm1208, %v1175
        %s1241 = sadd.s32 %s268, 1
        %s1242 = smul.u32 %s1241, 3
        %s1243 = smul.addr %s1242, 4
        %s1244 = scalar_lea.vmem %s261, %s1243
        %v1245 = vld [vmem:[%s1244] sm:$0xf]
        %v1246 = vld [vmem:[%s1244 + $0x4] sm:$0xf]
        %v1247 = vld [vmem:[%s1244 + $0xc] sm:$0xf]
        %v1248 = vld [vmem:[%s1244 + $0x10] sm:$0xf]
        %v1249 = vld [vmem:[%s1244 + $0x18] sm:$0xf]
        %v1250 = vld [vmem:[%s1244 + $0x1c] sm:$0xf]
        %v1251 = vld [vmem:[%s1244 + $0x24] sm:$0xf]
        %v1252 = vld [vmem:[%s1244 + $0x28] sm:$0xf]
        %v1253 = vld [vmem:[%s1244 + $0x30] sm:$0xf]
        %v1254 = vld [vmem:[%s1244 + $0x34] sm:$0xf]
        %v1255 = vld [vmem:[%s1244 + $0x3c] sm:$0xf]
        %v1256 = vld [vmem:[%s1244 + $0x40] sm:$0xf]
        %v1257 = vld [vmem:[%s1244 + $0x48] sm:$0xf]
        %v1258 = vld [vmem:[%s1244 + $0x4c] sm:$0xf]
        %v1259 = vld [vmem:[%s1244 + $0x54] sm:$0xf]
        %v1260 = vld [vmem:[%s1244 + $0x58] sm:$0xf]
        %v1261 = vld [vmem:[%s1244 + $0x60] sm:$0xf]
        %v1262 = vld [vmem:[%s1244 + $0x64] sm:$0xf]
        %v1263 = vld [vmem:[%s1244 + $0x6c] sm:$0xf]
        %v1264 = vld [vmem:[%s1244 + $0x70] sm:$0xf]
        %v1265 = vld [vmem:[%s1244 + $0x78] sm:$0xf]
        %v1266 = vld [vmem:[%s1244 + $0x7c] sm:$0xf]
        %v1267 = vld [vmem:[%s1244 + $0x84] sm:$0xf]
        %v1268 = vld [vmem:[%s1244 + $0x88] sm:$0xf]
        %v1269 = vld [vmem:[%s1244 + $0x90] sm:$0xf]
        %v1270 = vld [vmem:[%s1244 + $0x94] sm:$0xf]
        %v1271 = vld [vmem:[%s1244 + $0x9c] sm:$0xf]
        %v1272 = vld [vmem:[%s1244 + $0xa0] sm:$0xf]
        %v1273 = vld [vmem:[%s1244 + $0xa8] sm:$0xf]
        %v1274 = vld [vmem:[%s1244 + $0xac] sm:$0xf]
        %v1275 = vld [vmem:[%s1244 + $0xb4] sm:$0xf]
        %v1276 = vld [vmem:[%s1244 + $0xb8] sm:$0xf]
        %1309 = vrot.lane.b32.xlu0 %v1245, 12
        %v1310 = vpop.permute.xlu0 %1309
        %1311 = vrot.lane.b32.xlu0 %v1246, 12
        %v1312 = vpop.permute.xlu0 %1311
        %1313 = vrot.lane.b32.xlu0 %v1247, 12
        %v1314 = vpop.permute.xlu0 %1313
        %1315 = vrot.lane.b32.xlu0 %v1248, 12
        %v1316 = vpop.permute.xlu0 %1315
        %1317 = vrot.lane.b32.xlu0 %v1249, 12
        %v1318 = vpop.permute.xlu0 %1317
        %1319 = vrot.lane.b32.xlu0 %v1250, 12
        %v1320 = vpop.permute.xlu0 %1319
        %1321 = vrot.lane.b32.xlu0 %v1251, 12
        %v1322 = vpop.permute.xlu0 %1321
        %1323 = vrot.lane.b32.xlu0 %v1252, 12
        %v1324 = vpop.permute.xlu0 %1323
        %1325 = vrot.lane.b32.xlu0 %v1253, 12
        %v1326 = vpop.permute.xlu0 %1325
        %1327 = vrot.lane.b32.xlu0 %v1254, 12
        %v1328 = vpop.permute.xlu0 %1327
        %1329 = vrot.lane.b32.xlu0 %v1255, 12
        %v1330 = vpop.permute.xlu0 %1329
        %1331 = vrot.lane.b32.xlu0 %v1256, 12
        %v1332 = vpop.permute.xlu0 %1331
        %1333 = vrot.lane.b32.xlu0 %v1257, 12
        %v1334 = vpop.permute.xlu0 %1333
        %1335 = vrot.lane.b32.xlu0 %v1258, 12
        %v1336 = vpop.permute.xlu0 %1335
        %1337 = vrot.lane.b32.xlu0 %v1259, 12
        %v1338 = vpop.permute.xlu0 %1337
        %1339 = vrot.lane.b32.xlu0 %v1260, 12
        %v1340 = vpop.permute.xlu0 %1339
        %1341 = vrot.lane.b32.xlu0 %v1261, 12
        %v1342 = vpop.permute.xlu0 %1341
        %1343 = vrot.lane.b32.xlu0 %v1262, 12
        %v1344 = vpop.permute.xlu0 %1343
        %1345 = vrot.lane.b32.xlu0 %v1263, 12
        %v1346 = vpop.permute.xlu0 %1345
        %1347 = vrot.lane.b32.xlu0 %v1264, 12
        %v1348 = vpop.permute.xlu0 %1347
        %1349 = vrot.lane.b32.xlu0 %v1265, 12
        %v1350 = vpop.permute.xlu0 %1349
        %1351 = vrot.lane.b32.xlu0 %v1266, 12
        %v1352 = vpop.permute.xlu0 %1351
        %1353 = vrot.lane.b32.xlu0 %v1267, 12
        %v1354 = vpop.permute.xlu0 %1353
        %1355 = vrot.lane.b32.xlu0 %v1268, 12
        %v1356 = vpop.permute.xlu0 %1355
        %1357 = vrot.lane.b32.xlu0 %v1269, 12
        %v1358 = vpop.permute.xlu0 %1357
        %1359 = vrot.lane.b32.xlu0 %v1270, 12
        %v1360 = vpop.permute.xlu0 %1359
        %1361 = vrot.lane.b32.xlu0 %v1271, 12
        %v1362 = vpop.permute.xlu0 %1361
        %1363 = vrot.lane.b32.xlu0 %v1272, 12
        %v1364 = vpop.permute.xlu0 %1363
        %1365 = vrot.lane.b32.xlu0 %v1273, 12
        %v1366 = vpop.permute.xlu0 %1365
        %1367 = vrot.lane.b32.xlu0 %v1274, 12
        %v1368 = vpop.permute.xlu0 %1367
        %1369 = vrot.lane.b32.xlu0 %v1275, 12
        %v1370 = vpop.permute.xlu0 %1369
        %1371 = vrot.lane.b32.xlu0 %v1276, 12
        %v1372 = vpop.permute.xlu0 %1371
        %vm1405 = vcmask 126048
        %1406 = vst.msk [vmem:[#allocation2] sm:$0xf] %vm1405, %v1310
        %1407 = vst.msk [vmem:[#allocation2 + $0x4] sm:$0xf] %vm1405, %v1312
        %1408 = vst.msk [vmem:[#allocation2 + $0x8] sm:$0xf] %vm1405, %v1314
        %1409 = vst.msk [vmem:[#allocation2 + $0xc] sm:$0xf] %vm1405, %v1316
        %1410 = vst.msk [vmem:[#allocation2 + $0x10] sm:$0xf] %vm1405, %v1318
        %1411 = vst.msk [vmem:[#allocation2 + $0x14] sm:$0xf] %vm1405, %v1320
        %1412 = vst.msk [vmem:[#allocation2 + $0x18] sm:$0xf] %vm1405, %v1322
        %1413 = vst.msk [vmem:[#allocation2 + $0x1c] sm:$0xf] %vm1405, %v1324
        %1414 = vst.msk [vmem:[#allocation2 + $0x20] sm:$0xf] %vm1405, %v1326
        %1415 = vst.msk [vmem:[#allocation2 + $0x24] sm:$0xf] %vm1405, %v1328
        %1416 = vst.msk [vmem:[#allocation2 + $0x28] sm:$0xf] %vm1405, %v1330
        %1417 = vst.msk [vmem:[#allocation2 + $0x2c] sm:$0xf] %vm1405, %v1332
        %1418 = vst.msk [vmem:[#allocation2 + $0x30] sm:$0xf] %vm1405, %v1334
        %1419 = vst.msk [vmem:[#allocation2 + $0x34] sm:$0xf] %vm1405, %v1336
        %1420 = vst.msk [vmem:[#allocation2 + $0x38] sm:$0xf] %vm1405, %v1338
        %1421 = vst.msk [vmem:[#allocation2 + $0x3c] sm:$0xf] %vm1405, %v1340
        %1422 = vst.msk [vmem:[#allocation2 + $0x40] sm:$0xf] %vm1405, %v1342
        %1423 = vst.msk [vmem:[#allocation2 + $0x44] sm:$0xf] %vm1405, %v1344
        %1424 = vst.msk [vmem:[#allocation2 + $0x48] sm:$0xf] %vm1405, %v1346
        %1425 = vst.msk [vmem:[#allocation2 + $0x4c] sm:$0xf] %vm1405, %v1348
        %1426 = vst.msk [vmem:[#allocation2 + $0x50] sm:$0xf] %vm1405, %v1350
        %1427 = vst.msk [vmem:[#allocation2 + $0x54] sm:$0xf] %vm1405, %v1352
        %1428 = vst.msk [vmem:[#allocation2 + $0x58] sm:$0xf] %vm1405, %v1354
        %1429 = vst.msk [vmem:[#allocation2 + $0x5c] sm:$0xf] %vm1405, %v1356
        %1430 = vst.msk [vmem:[#allocation2 + $0x60] sm:$0xf] %vm1405, %v1358
        %1431 = vst.msk [vmem:[#allocation2 + $0x64] sm:$0xf] %vm1405, %v1360
        %1432 = vst.msk [vmem:[#allocation2 + $0x68] sm:$0xf] %vm1405, %v1362
        %1433 = vst.msk [vmem:[#allocation2 + $0x6c] sm:$0xf] %vm1405, %v1364
        %1434 = vst.msk [vmem:[#allocation2 + $0x70] sm:$0xf] %vm1405, %v1366
        %1435 = vst.msk [vmem:[#allocation2 + $0x74] sm:$0xf] %vm1405, %v1368
        %1436 = vst.msk [vmem:[#allocation2 + $0x78] sm:$0xf] %vm1405, %v1370
        %1437 = vst.msk [vmem:[#allocation2 + $0x7c] sm:$0xf] %vm1405, %v1372
        %v1438 = vld [vmem:[%s1244] sm:$0xf]
        %v1439 = vld [vmem:[%s1244 + $0x4] sm:$0xf]
        %v1440 = vld [vmem:[%s1244 + $0x8] sm:$0x1]
        %v1441 = vld [vmem:[%s1244 + $0xc] sm:$0xf]
        %v1442 = vld [vmem:[%s1244 + $0x10] sm:$0xf]
        %v1443 = vld [vmem:[%s1244 + $0x14] sm:$0x1]
        %v1444 = vld [vmem:[%s1244 + $0x18] sm:$0xf]
        %v1445 = vld [vmem:[%s1244 + $0x1c] sm:$0xf]
        %v1446 = vld [vmem:[%s1244 + $0x20] sm:$0x1]
        %v1447 = vld [vmem:[%s1244 + $0x24] sm:$0xf]
        %v1448 = vld [vmem:[%s1244 + $0x28] sm:$0xf]
        %v1449 = vld [vmem:[%s1244 + $0x2c] sm:$0x1]
        %v1450 = vld [vmem:[%s1244 + $0x30] sm:$0xf]
        %v1451 = vld [vmem:[%s1244 + $0x34] sm:$0xf]
        %v1452 = vld [vmem:[%s1244 + $0x38] sm:$0x1]
        %v1453 = vld [vmem:[%s1244 + $0x3c] sm:$0xf]
        %v1454 = vld [vmem:[%s1244 + $0x40] sm:$0xf]
        %v1455 = vld [vmem:[%s1244 + $0x44] sm:$0x1]
        %v1456 = vld [vmem:[%s1244 + $0x48] sm:$0xf]
        %v1457 = vld [vmem:[%s1244 + $0x4c] sm:$0xf]
        %v1458 = vld [vmem:[%s1244 + $0x50] sm:$0x1]
        %v1459 = vld [vmem:[%s1244 + $0x54] sm:$0xf]
        %v1460 = vld [vmem:[%s1244 + $0x58] sm:$0xf]
        %v1461 = vld [vmem:[%s1244 + $0x5c] sm:$0x1]
        %v1462 = vld [vmem:[%s1244 + $0x60] sm:$0xf]
        %v1463 = vld [vmem:[%s1244 + $0x64] sm:$0xf]
        %v1464 = vld [vmem:[%s1244 + $0x68] sm:$0x1]
        %v1465 = vld [vmem:[%s1244 + $0x6c] sm:$0xf]
        %v1466 = vld [vmem:[%s1244 + $0x70] sm:$0xf]
        %v1467 = vld [vmem:[%s1244 + $0x74] sm:$0x1]
        %v1468 = vld [vmem:[%s1244 + $0x78] sm:$0xf]
        %v1469 = vld [vmem:[%s1244 + $0x7c] sm:$0xf]
        %v1470 = vld [vmem:[%s1244 + $0x80] sm:$0x1]
        %v1471 = vld [vmem:[%s1244 + $0x84] sm:$0xf]
        %v1472 = vld [vmem:[%s1244 + $0x88] sm:$0xf]
        %v1473 = vld [vmem:[%s1244 + $0x8c] sm:$0x1]
        %v1474 = vld [vmem:[%s1244 + $0x90] sm:$0xf]
        %v1475 = vld [vmem:[%s1244 + $0x94] sm:$0xf]
        %v1476 = vld [vmem:[%s1244 + $0x98] sm:$0x1]
        %v1477 = vld [vmem:[%s1244 + $0x9c] sm:$0xf]
        %v1478 = vld [vmem:[%s1244 + $0xa0] sm:$0xf]
        %v1479 = vld [vmem:[%s1244 + $0xa4] sm:$0x1]
        %v1480 = vld [vmem:[%s1244 + $0xa8] sm:$0xf]
        %v1481 = vld [vmem:[%s1244 + $0xac] sm:$0xf]
        %v1482 = vld [vmem:[%s1244 + $0xb0] sm:$0x1]
        %v1483 = vld [vmem:[%s1244 + $0xb4] sm:$0xf]
        %v1484 = vld [vmem:[%s1244 + $0xb8] sm:$0xf]
        %v1485 = vld [vmem:[%s1244 + $0xbc] sm:$0x1]
        %v1487 = vshrl.u32 %v1438, 16
        %v1489 = vrot.slane %v1487, 4
        %v1490 = vshll.u32 %v1438, 16
        %v1492 = vrot.slane %v1490, 5
        %v1493 = vor.u32 %v1489, %v1492
        %v1494 = vrot.slane %v1493, 4
        %v1496 = vshll.u32 %v1439, 16
        %v1498 = vrot.slane %v1496, 5
        %v1499 = vsel %vm387, %v1494, %v1498
        %v1500 = vshrl.u32 %v1439, 16
        %v1502 = vrot.slane %v1500, 4
        %v1503 = vor.u32 %v1502, %v1498
        %v1504 = vrot.slane %v1503, 4
        %v1506 = vshll.u32 %v1440, 16
        %v1508 = vrot.slane %v1506, 5
        %v1509 = vsel %vm387, %v1504, %v1508
        %v1511 = vshrl.u32 %v1441, 16
        %v1513 = vrot.slane %v1511, 4
        %v1514 = vshll.u32 %v1441, 16
        %v1516 = vrot.slane %v1514, 5
        %v1517 = vor.u32 %v1513, %v1516
        %v1518 = vrot.slane %v1517, 4
        %v1520 = vshll.u32 %v1442, 16
        %v1522 = vrot.slane %v1520, 5
        %v1523 = vsel %vm387, %v1518, %v1522
        %v1524 = vshrl.u32 %v1442, 16
        %v1526 = vrot.slane %v1524, 4
        %v1527 = vor.u32 %v1526, %v1522
        %v1528 = vrot.slane %v1527, 4
        %v1530 = vshll.u32 %v1443, 16
        %v1532 = vrot.slane %v1530, 5
        %v1533 = vsel %vm387, %v1528, %v1532
        %v1535 = vshrl.u32 %v1444, 16
        %v1537 = vrot.slane %v1535, 4
        %v1538 = vshll.u32 %v1444, 16
        %v1540 = vrot.slane %v1538, 5
        %v1541 = vor.u32 %v1537, %v1540
        %v1542 = vrot.slane %v1541, 4
        %v1544 = vshll.u32 %v1445, 16
        %v1546 = vrot.slane %v1544, 5
        %v1547 = vsel %vm387, %v1542, %v1546
        %v1548 = vshrl.u32 %v1445, 16
        %v1550 = vrot.slane %v1548, 4
        %v1551 = vor.u32 %v1550, %v1546
        %v1552 = vrot.slane %v1551, 4
        %v1554 = vshll.u32 %v1446, 16
        %v1556 = vrot.slane %v1554, 5
        %v1557 = vsel %vm387, %v1552, %v1556
        %v1559 = vshrl.u32 %v1447, 16
        %v1561 = vrot.slane %v1559, 4
        %v1562 = vshll.u32 %v1447, 16
        %v1564 = vrot.slane %v1562, 5
        %v1565 = vor.u32 %v1561, %v1564
        %v1566 = vrot.slane %v1565, 4
        %v1568 = vshll.u32 %v1448, 16
        %v1570 = vrot.slane %v1568, 5
        %v1571 = vsel %vm387, %v1566, %v1570
        %v1572 = vshrl.u32 %v1448, 16
        %v1574 = vrot.slane %v1572, 4
        %v1575 = vor.u32 %v1574, %v1570
        %v1576 = vrot.slane %v1575, 4
        %v1578 = vshll.u32 %v1449, 16
        %v1580 = vrot.slane %v1578, 5
        %v1581 = vsel %vm387, %v1576, %v1580
        %v1583 = vshrl.u32 %v1450, 16
        %v1585 = vrot.slane %v1583, 4
        %v1586 = vshll.u32 %v1450, 16
        %v1588 = vrot.slane %v1586, 5
        %v1589 = vor.u32 %v1585, %v1588
        %v1590 = vrot.slane %v1589, 4
        %v1592 = vshll.u32 %v1451, 16
        %v1594 = vrot.slane %v1592, 5
        %v1595 = vsel %vm387, %v1590, %v1594
        %v1596 = vshrl.u32 %v1451, 16
        %v1598 = vrot.slane %v1596, 4
        %v1599 = vor.u32 %v1598, %v1594
        %v1600 = vrot.slane %v1599, 4
        %v1602 = vshll.u32 %v1452, 16
        %v1604 = vrot.slane %v1602, 5
        %v1605 = vsel %vm387, %v1600, %v1604
        %v1607 = vshrl.u32 %v1453, 16
        %v1609 = vrot.slane %v1607, 4
        %v1610 = vshll.u32 %v1453, 16
        %v1612 = vrot.slane %v1610, 5
        %v1613 = vor.u32 %v1609, %v1612
        %v1614 = vrot.slane %v1613, 4
        %v1616 = vshll.u32 %v1454, 16
        %v1618 = vrot.slane %v1616, 5
        %v1619 = vsel %vm387, %v1614, %v1618
        %v1620 = vshrl.u32 %v1454, 16
        %v1622 = vrot.slane %v1620, 4
        %v1623 = vor.u32 %v1622, %v1618
        %v1624 = vrot.slane %v1623, 4
        %v1626 = vshll.u32 %v1455, 16
        %v1628 = vrot.slane %v1626, 5
        %v1629 = vsel %vm387, %v1624, %v1628
        %v1631 = vshrl.u32 %v1456, 16
        %v1633 = vrot.slane %v1631, 4
        %v1634 = vshll.u32 %v1456, 16
        %v1636 = vrot.slane %v1634, 5
        %v1637 = vor.u32 %v1633, %v1636
        %v1638 = vrot.slane %v1637, 4
        %v1640 = vshll.u32 %v1457, 16
        %v1642 = vrot.slane %v1640, 5
        %v1643 = vsel %vm387, %v1638, %v1642
        %v1644 = vshrl.u32 %v1457, 16
        %v1646 = vrot.slane %v1644, 4
        %v1647 = vor.u32 %v1646, %v1642
        %v1648 = vrot.slane %v1647, 4
        %v1650 = vshll.u32 %v1458, 16
        %v1652 = vrot.slane %v1650, 5
        %v1653 = vsel %vm387, %v1648, %v1652
        %v1655 = vshrl.u32 %v1459, 16
        %v1657 = vrot.slane %v1655, 4
        %v1658 = vshll.u32 %v1459, 16
        %v1660 = vrot.slane %v1658, 5
        %v1661 = vor.u32 %v1657, %v1660
        %v1662 = vrot.slane %v1661, 4
        %v1664 = vshll.u32 %v1460, 16
        %v1666 = vrot.slane %v1664, 5
        %v1667 = vsel %vm387, %v1662, %v1666
        %v1668 = vshrl.u32 %v1460, 16
        %v1670 = vrot.slane %v1668, 4
        %v1671 = vor.u32 %v1670, %v1666
        %v1672 = vrot.slane %v1671, 4
        %v1674 = vshll.u32 %v1461, 16
        %v1676 = vrot.slane %v1674, 5
        %v1677 = vsel %vm387, %v1672, %v1676
        %v1679 = vshrl.u32 %v1462, 16
        %v1681 = vrot.slane %v1679, 4
        %v1682 = vshll.u32 %v1462, 16
        %v1684 = vrot.slane %v1682, 5
        %v1685 = vor.u32 %v1681, %v1684
        %v1686 = vrot.slane %v1685, 4
        %v1688 = vshll.u32 %v1463, 16
        %v1690 = vrot.slane %v1688, 5
        %v1691 = vsel %vm387, %v1686, %v1690
        %v1692 = vshrl.u32 %v1463, 16
        %v1694 = vrot.slane %v1692, 4
        %v1695 = vor.u32 %v1694, %v1690
        %v1696 = vrot.slane %v1695, 4
        %v1698 = vshll.u32 %v1464, 16
        %v1700 = vrot.slane %v1698, 5
        %v1701 = vsel %vm387, %v1696, %v1700
        %v1703 = vshrl.u32 %v1465, 16
        %v1705 = vrot.slane %v1703, 4
        %v1706 = vshll.u32 %v1465, 16
        %v1708 = vrot.slane %v1706, 5
        %v1709 = vor.u32 %v1705, %v1708
        %v1710 = vrot.slane %v1709, 4
        %v1712 = vshll.u32 %v1466, 16
        %v1714 = vrot.slane %v1712, 5
        %v1715 = vsel %vm387, %v1710, %v1714
        %v1716 = vshrl.u32 %v1466, 16
        %v1718 = vrot.slane %v1716, 4
        %v1719 = vor.u32 %v1718, %v1714
        %v1720 = vrot.slane %v1719, 4
        %v1722 = vshll.u32 %v1467, 16
        %v1724 = vrot.slane %v1722, 5
        %v1725 = vsel %vm387, %v1720, %v1724
        %v1727 = vshrl.u32 %v1468, 16
        %v1729 = vrot.slane %v1727, 4
        %v1730 = vshll.u32 %v1468, 16
        %v1732 = vrot.slane %v1730, 5
        %v1733 = vor.u32 %v1729, %v1732
        %v1734 = vrot.slane %v1733, 4
        %v1736 = vshll.u32 %v1469, 16
        %v1738 = vrot.slane %v1736, 5
        %v1739 = vsel %vm387, %v1734, %v1738
        %v1740 = vshrl.u32 %v1469, 16
        %v1742 = vrot.slane %v1740, 4
        %v1743 = vor.u32 %v1742, %v1738
        %v1744 = vrot.slane %v1743, 4
        %v1746 = vshll.u32 %v1470, 16
        %v1748 = vrot.slane %v1746, 5
        %v1749 = vsel %vm387, %v1744, %v1748
        %v1751 = vshrl.u32 %v1471, 16
        %v1753 = vrot.slane %v1751, 4
        %v1754 = vshll.u32 %v1471, 16
        %v1756 = vrot.slane %v1754, 5
        %v1757 = vor.u32 %v1753, %v1756
        %v1758 = vrot.slane %v1757, 4
        %v1760 = vshll.u32 %v1472, 16
        %v1762 = vrot.slane %v1760, 5
        %v1763 = vsel %vm387, %v1758, %v1762
        %v1764 = vshrl.u32 %v1472, 16
        %v1766 = vrot.slane %v1764, 4
        %v1767 = vor.u32 %v1766, %v1762
        %v1768 = vrot.slane %v1767, 4
        %v1770 = vshll.u32 %v1473, 16
        %v1772 = vrot.slane %v1770, 5
        %v1773 = vsel %vm387, %v1768, %v1772
        %v1775 = vshrl.u32 %v1474, 16
        %v1777 = vrot.slane %v1775, 4
        %v1778 = vshll.u32 %v1474, 16
        %v1780 = vrot.slane %v1778, 5
        %v1781 = vor.u32 %v1777, %v1780
        %v1782 = vrot.slane %v1781, 4
        %v1784 = vshll.u32 %v1475, 16
        %v1786 = vrot.slane %v1784, 5
        %v1787 = vsel %vm387, %v1782, %v1786
        %v1788 = vshrl.u32 %v1475, 16
        %v1790 = vrot.slane %v1788, 4
        %v1791 = vor.u32 %v1790, %v1786
        %v1792 = vrot.slane %v1791, 4
        %v1794 = vshll.u32 %v1476, 16
        %v1796 = vrot.slane %v1794, 5
        %v1797 = vsel %vm387, %v1792, %v1796
        %v1799 = vshrl.u32 %v1477, 16
        %v1801 = vrot.slane %v1799, 4
        %v1802 = vshll.u32 %v1477, 16
        %v1804 = vrot.slane %v1802, 5
        %v1805 = vor.u32 %v1801, %v1804
        %v1806 = vrot.slane %v1805, 4
        %v1808 = vshll.u32 %v1478, 16
        %v1810 = vrot.slane %v1808, 5
        %v1811 = vsel %vm387, %v1806, %v1810
        %v1812 = vshrl.u32 %v1478, 16
        %v1814 = vrot.slane %v1812, 4
        %v1815 = vor.u32 %v1814, %v1810
        %v1816 = vrot.slane %v1815, 4
        %v1818 = vshll.u32 %v1479, 16
        %v1820 = vrot.slane %v1818, 5
        %v1821 = vsel %vm387, %v1816, %v1820
        %v1823 = vshrl.u32 %v1480, 16
        %v1825 = vrot.slane %v1823, 4
        %v1826 = vshll.u32 %v1480, 16
        %v1828 = vrot.slane %v1826, 5
        %v1829 = vor.u32 %v1825, %v1828
        %v1830 = vrot.slane %v1829, 4
        %v1832 = vshll.u32 %v1481, 16
        %v1834 = vrot.slane %v1832, 5
        %v1835 = vsel %vm387, %v1830, %v1834
        %v1836 = vshrl.u32 %v1481, 16
        %v1838 = vrot.slane %v1836, 4
        %v1839 = vor.u32 %v1838, %v1834
        %v1840 = vrot.slane %v1839, 4
        %v1842 = vshll.u32 %v1482, 16
        %v1844 = vrot.slane %v1842, 5
        %v1845 = vsel %vm387, %v1840, %v1844
        %v1847 = vshrl.u32 %v1483, 16
        %v1849 = vrot.slane %v1847, 4
        %v1850 = vshll.u32 %v1483, 16
        %v1852 = vrot.slane %v1850, 5
        %v1853 = vor.u32 %v1849, %v1852
        %v1854 = vrot.slane %v1853, 4
        %v1856 = vshll.u32 %v1484, 16
        %v1858 = vrot.slane %v1856, 5
        %v1859 = vsel %vm387, %v1854, %v1858
        %v1860 = vshrl.u32 %v1484, 16
        %v1862 = vrot.slane %v1860, 4
        %v1863 = vor.u32 %v1862, %v1858
        %v1864 = vrot.slane %v1863, 4
        %v1866 = vshll.u32 %v1485, 16
        %v1868 = vrot.slane %v1866, 5
        %v1869 = vsel %vm387, %v1864, %v1868
        %1870 = vrot.lane.b32.xlu0 %v1499, 16
        %v1871 = vpop.permute.xlu0 %1870
        %1872 = vrot.lane.b32.xlu0 %v1509, 16
        %v1873 = vpop.permute.xlu0 %1872
        %1874 = vrot.lane.b32.xlu0 %v1523, 16
        %v1875 = vpop.permute.xlu0 %1874
        %1876 = vrot.lane.b32.xlu0 %v1533, 16
        %v1877 = vpop.permute.xlu0 %1876
        %1878 = vrot.lane.b32.xlu0 %v1547, 16
        %v1879 = vpop.permute.xlu0 %1878
        %1880 = vrot.lane.b32.xlu0 %v1557, 16
        %v1881 = vpop.permute.xlu0 %1880
        %1882 = vrot.lane.b32.xlu0 %v1571, 16
        %v1883 = vpop.permute.xlu0 %1882
        %1884 = vrot.lane.b32.xlu0 %v1581, 16
        %v1885 = vpop.permute.xlu0 %1884
        %1886 = vrot.lane.b32.xlu0 %v1595, 16
        %v1887 = vpop.permute.xlu0 %1886
        %1888 = vrot.lane.b32.xlu0 %v1605, 16
        %v1889 = vpop.permute.xlu0 %1888
        %1890 = vrot.lane.b32.xlu0 %v1619, 16
        %v1891 = vpop.permute.xlu0 %1890
        %1892 = vrot.lane.b32.xlu0 %v1629, 16
        %v1893 = vpop.permute.xlu0 %1892
        %1894 = vrot.lane.b32.xlu0 %v1643, 16
        %v1895 = vpop.permute.xlu0 %1894
        %1896 = vrot.lane.b32.xlu0 %v1653, 16
        %v1897 = vpop.permute.xlu0 %1896
        %1898 = vrot.lane.b32.xlu0 %v1667, 16
        %v1899 = vpop.permute.xlu0 %1898
        %1900 = vrot.lane.b32.xlu0 %v1677, 16
        %v1901 = vpop.permute.xlu0 %1900
        %1902 = vrot.lane.b32.xlu0 %v1691, 16
        %v1903 = vpop.permute.xlu0 %1902
        %1904 = vrot.lane.b32.xlu0 %v1701, 16
        %v1905 = vpop.permute.xlu0 %1904
        %1906 = vrot.lane.b32.xlu0 %v1715, 16
        %v1907 = vpop.permute.xlu0 %1906
        %1908 = vrot.lane.b32.xlu0 %v1725, 16
        %v1909 = vpop.permute.xlu0 %1908
        %1910 = vrot.lane.b32.xlu0 %v1739, 16
        %v1911 = vpop.permute.xlu0 %1910
        %1912 = vrot.lane.b32.xlu0 %v1749, 16
        %v1913 = vpop.permute.xlu0 %1912
        %1914 = vrot.lane.b32.xlu0 %v1763, 16
        %v1915 = vpop.permute.xlu0 %1914
        %1916 = vrot.lane.b32.xlu0 %v1773, 16
        %v1917 = vpop.permute.xlu0 %1916
        %1918 = vrot.lane.b32.xlu0 %v1787, 16
        %v1919 = vpop.permute.xlu0 %1918
        %1920 = vrot.lane.b32.xlu0 %v1797, 16
        %v1921 = vpop.permute.xlu0 %1920
        %1922 = vrot.lane.b32.xlu0 %v1811, 16
        %v1923 = vpop.permute.xlu0 %1922
        %1924 = vrot.lane.b32.xlu0 %v1821, 16
        %v1925 = vpop.permute.xlu0 %1924
        %1926 = vrot.lane.b32.xlu0 %v1835, 16
        %v1927 = vpop.permute.xlu0 %1926
        %1928 = vrot.lane.b32.xlu0 %v1845, 16
        %v1929 = vpop.permute.xlu0 %1928
        %1930 = vrot.lane.b32.xlu0 %v1859, 16
        %v1931 = vpop.permute.xlu0 %1930
        %1932 = vrot.lane.b32.xlu0 %v1869, 16
        %v1933 = vpop.permute.xlu0 %1932
        %vm1966 = vcmask 158848
        %1967 = vst.msk [vmem:[#allocation2] sm:$0xf] %vm1966, %v1871
        %1968 = vst.msk [vmem:[#allocation2 + $0x4] sm:$0xf] %vm1966, %v1873
        %1969 = vst.msk [vmem:[#allocation2 + $0x8] sm:$0xf] %vm1966, %v1875
        %1970 = vst.msk [vmem:[#allocation2 + $0xc] sm:$0xf] %vm1966, %v1877
        %1971 = vst.msk [vmem:[#allocation2 + $0x10] sm:$0xf] %vm1966, %v1879
        %1972 = vst.msk [vmem:[#allocation2 + $0x14] sm:$0xf] %vm1966, %v1881
        %1973 = vst.msk [vmem:[#allocation2 + $0x18] sm:$0xf] %vm1966, %v1883
        %1974 = vst.msk [vmem:[#allocation2 + $0x1c] sm:$0xf] %vm1966, %v1885
        %1975 = vst.msk [vmem:[#allocation2 + $0x20] sm:$0xf] %vm1966, %v1887
        %1976 = vst.msk [vmem:[#allocation2 + $0x24] sm:$0xf] %vm1966, %v1889
        %1977 = vst.msk [vmem:[#allocation2 + $0x28] sm:$0xf] %vm1966, %v1891
        %1978 = vst.msk [vmem:[#allocation2 + $0x2c] sm:$0xf] %vm1966, %v1893
        %1979 = vst.msk [vmem:[#allocation2 + $0x30] sm:$0xf] %vm1966, %v1895
        %1980 = vst.msk [vmem:[#allocation2 + $0x34] sm:$0xf] %vm1966, %v1897
        %1981 = vst.msk [vmem:[#allocation2 + $0x38] sm:$0xf] %vm1966, %v1899
        %1982 = vst.msk [vmem:[#allocation2 + $0x3c] sm:$0xf] %vm1966, %v1901
        %1983 = vst.msk [vmem:[#allocation2 + $0x40] sm:$0xf] %vm1966, %v1903
        %1984 = vst.msk [vmem:[#allocation2 + $0x44] sm:$0xf] %vm1966, %v1905
        %1985 = vst.msk [vmem:[#allocation2 + $0x48] sm:$0xf] %vm1966, %v1907
        %1986 = vst.msk [vmem:[#allocation2 + $0x4c] sm:$0xf] %vm1966, %v1909
        %1987 = vst.msk [vmem:[#allocation2 + $0x50] sm:$0xf] %vm1966, %v1911
        %1988 = vst.msk [vmem:[#allocation2 + $0x54] sm:$0xf] %vm1966, %v1913
        %1989 = vst.msk [vmem:[#allocation2 + $0x58] sm:$0xf] %vm1966, %v1915
        %1990 = vst.msk [vmem:[#allocation2 + $0x5c] sm:$0xf] %vm1966, %v1917
        %1991 = vst.msk [vmem:[#allocation2 + $0x60] sm:$0xf] %vm1966, %v1919
        %1992 = vst.msk [vmem:[#allocation2 + $0x64] sm:$0xf] %vm1966, %v1921
        %1993 = vst.msk [vmem:[#allocation2 + $0x68] sm:$0xf] %vm1966, %v1923
        %1994 = vst.msk [vmem:[#allocation2 + $0x6c] sm:$0xf] %vm1966, %v1925
        %1995 = vst.msk [vmem:[#allocation2 + $0x70] sm:$0xf] %vm1966, %v1927
        %1996 = vst.msk [vmem:[#allocation2 + $0x74] sm:$0xf] %vm1966, %v1929
        %1997 = vst.msk [vmem:[#allocation2 + $0x78] sm:$0xf] %vm1966, %v1931
        %1998 = vst.msk [vmem:[#allocation2 + $0x7c] sm:$0xf] %vm1966, %v1933
        %v1999 = vld [vmem:[%s1244] sm:$0xe]
        %v2000 = vld [vmem:[%s1244 + $0x4] sm:$0xf]
        %v2001 = vld [vmem:[%s1244 + $0x8] sm:$0x1]
        %v2002 = vld [vmem:[%s1244 + $0xc] sm:$0xe]
        %v2003 = vld [vmem:[%s1244 + $0x10] sm:$0xf]
        %v2004 = vld [vmem:[%s1244 + $0x14] sm:$0x1]
        %v2005 = vld [vmem:[%s1244 + $0x18] sm:$0xe]
        %v2006 = vld [vmem:[%s1244 + $0x1c] sm:$0xf]
        %v2007 = vld [vmem:[%s1244 + $0x20] sm:$0x1]
        %v2008 = vld [vmem:[%s1244 + $0x24] sm:$0xe]
        %v2009 = vld [vmem:[%s1244 + $0x28] sm:$0xf]
        %v2010 = vld [vmem:[%s1244 + $0x2c] sm:$0x1]
        %v2011 = vld [vmem:[%s1244 + $0x30] sm:$0xe]
        %v2012 = vld [vmem:[%s1244 + $0x34] sm:$0xf]
        %v2013 = vld [vmem:[%s1244 + $0x38] sm:$0x1]
        %v2014 = vld [vmem:[%s1244 + $0x3c] sm:$0xe]
        %v2015 = vld [vmem:[%s1244 + $0x40] sm:$0xf]
        %v2016 = vld [vmem:[%s1244 + $0x44] sm:$0x1]
        %v2017 = vld [vmem:[%s1244 + $0x48] sm:$0xe]
        %v2018 = vld [vmem:[%s1244 + $0x4c] sm:$0xf]
        %v2019 = vld [vmem:[%s1244 + $0x50] sm:$0x1]
        %v2020 = vld [vmem:[%s1244 + $0x54] sm:$0xe]
        %v2021 = vld [vmem:[%s1244 + $0x58] sm:$0xf]
        %v2022 = vld [vmem:[%s1244 + $0x5c] sm:$0x1]
        %v2023 = vld [vmem:[%s1244 + $0x60] sm:$0xe]
        %v2024 = vld [vmem:[%s1244 + $0x64] sm:$0xf]
        %v2025 = vld [vmem:[%s1244 + $0x68] sm:$0x1]
        %v2026 = vld [vmem:[%s1244 + $0x6c] sm:$0xe]
        %v2027 = vld [vmem:[%s1244 + $0x70] sm:$0xf]
        %v2028 = vld [vmem:[%s1244 + $0x74] sm:$0x1]
        %v2029 = vld [vmem:[%s1244 + $0x78] sm:$0xe]
        %v2030 = vld [vmem:[%s1244 + $0x7c] sm:$0xf]
        %v2031 = vld [vmem:[%s1244 + $0x80] sm:$0x1]
        %v2032 = vld [vmem:[%s1244 + $0x84] sm:$0xe]
        %v2033 = vld [vmem:[%s1244 + $0x88] sm:$0xf]
        %v2034 = vld [vmem:[%s1244 + $0x8c] sm:$0x1]
        %v2035 = vld [vmem:[%s1244 + $0x90] sm:$0xe]
        %v2036 = vld [vmem:[%s1244 + $0x94] sm:$0xf]
        %v2037 = vld [vmem:[%s1244 + $0x98] sm:$0x1]
        %v2038 = vld [vmem:[%s1244 + $0x9c] sm:$0xe]
        %v2039 = vld [vmem:[%s1244 + $0xa0] sm:$0xf]
        %v2040 = vld [vmem:[%s1244 + $0xa4] sm:$0x1]
        %v2041 = vld [vmem:[%s1244 + $0xa8] sm:$0xe]
        %v2042 = vld [vmem:[%s1244 + $0xac] sm:$0xf]
        %v2043 = vld [vmem:[%s1244 + $0xb0] sm:$0x1]
        %v2044 = vld [vmem:[%s1244 + $0xb4] sm:$0xe]
        %v2045 = vld [vmem:[%s1244 + $0xb8] sm:$0xf]
        %v2046 = vld [vmem:[%s1244 + $0xbc] sm:$0x1]
        %v2095 = vrot.slane %v1999, 5
        %v2096 = vrot.slane %v2095, 4
        %v2097 = vrot.slane %v2000, 5
        %v2098 = vsel %vm999, %v2096, %v2097
        %v2099 = vrot.slane %v2097, 4
        %v2100 = vrot.slane %v2001, 5
        %v2101 = vsel %vm999, %v2099, %v2100
        %v2102 = vrot.slane %v2002, 5
        %v2103 = vrot.slane %v2102, 4
        %v2104 = vrot.slane %v2003, 5
        %v2105 = vsel %vm999, %v2103, %v2104
        %v2106 = vrot.slane %v2104, 4
        %v2107 = vrot.slane %v2004, 5
        %v2108 = vsel %vm999, %v2106, %v2107
        %v2109 = vrot.slane %v2005, 5
        %v2110 = vrot.slane %v2109, 4
        %v2111 = vrot.slane %v2006, 5
        %v2112 = vsel %vm999, %v2110, %v2111
        %v2113 = vrot.slane %v2111, 4
        %v2114 = vrot.slane %v2007, 5
        %v2115 = vsel %vm999, %v2113, %v2114
        %v2116 = vrot.slane %v2008, 5
        %v2117 = vrot.slane %v2116, 4
        %v2118 = vrot.slane %v2009, 5
        %v2119 = vsel %vm999, %v2117, %v2118
        %v2120 = vrot.slane %v2118, 4
        %v2121 = vrot.slane %v2010, 5
        %v2122 = vsel %vm999, %v2120, %v2121
        %v2123 = vrot.slane %v2011, 5
        %v2124 = vrot.slane %v2123, 4
        %v2125 = vrot.slane %v2012, 5
        %v2126 = vsel %vm999, %v2124, %v2125
        %v2127 = vrot.slane %v2125, 4
        %v2128 = vrot.slane %v2013, 5
        %v2129 = vsel %vm999, %v2127, %v2128
        %v2130 = vrot.slane %v2014, 5
        %v2131 = vrot.slane %v2130, 4
        %v2132 = vrot.slane %v2015, 5
        %v2133 = vsel %vm999, %v2131, %v2132
        %v2134 = vrot.slane %v2132, 4
        %v2135 = vrot.slane %v2016, 5
        %v2136 = vsel %vm999, %v2134, %v2135
        %v2137 = vrot.slane %v2017, 5
        %v2138 = vrot.slane %v2137, 4
        %v2139 = vrot.slane %v2018, 5
        %v2140 = vsel %vm999, %v2138, %v2139
        %v2141 = vrot.slane %v2139, 4
        %v2142 = vrot.slane %v2019, 5
        %v2143 = vsel %vm999, %v2141, %v2142
        %v2144 = vrot.slane %v2020, 5
        %v2145 = vrot.slane %v2144, 4
        %v2146 = vrot.slane %v2021, 5
        %v2147 = vsel %vm999, %v2145, %v2146
        %v2148 = vrot.slane %v2146, 4
        %v2149 = vrot.slane %v2022, 5
        %v2150 = vsel %vm999, %v2148, %v2149
        %v2151 = vrot.slane %v2023, 5
        %v2152 = vrot.slane %v2151, 4
        %v2153 = vrot.slane %v2024, 5
        %v2154 = vsel %vm999, %v2152, %v2153
        %v2155 = vrot.slane %v2153, 4
        %v2156 = vrot.slane %v2025, 5
        %v2157 = vsel %vm999, %v2155, %v2156
        %v2158 = vrot.slane %v2026, 5
        %v2159 = vrot.slane %v2158, 4
        %v2160 = vrot.slane %v2027, 5
        %v2161 = vsel %vm999, %v2159, %v2160
        %v2162 = vrot.slane %v2160, 4
        %v2163 = vrot.slane %v2028, 5
        %v2164 = vsel %vm999, %v2162, %v2163
        %v2165 = vrot.slane %v2029, 5
        %v2166 = vrot.slane %v2165, 4
        %v2167 = vrot.slane %v2030, 5
        %v2168 = vsel %vm999, %v2166, %v2167
        %v2169 = vrot.slane %v2167, 4
        %v2170 = vrot.slane %v2031, 5
        %v2171 = vsel %vm999, %v2169, %v2170
        %v2172 = vrot.slane %v2032, 5
        %v2173 = vrot.slane %v2172, 4
        %v2174 = vrot.slane %v2033, 5
        %v2175 = vsel %vm999, %v2173, %v2174
        %v2176 = vrot.slane %v2174, 4
        %v2177 = vrot.slane %v2034, 5
        %v2178 = vsel %vm999, %v2176, %v2177
        %v2179 = vrot.slane %v2035, 5
        %v2180 = vrot.slane %v2179, 4
        %v2181 = vrot.slane %v2036, 5
        %v2182 = vsel %vm999, %v2180, %v2181
        %v2183 = vrot.slane %v2181, 4
        %v2184 = vrot.slane %v2037, 5
        %v2185 = vsel %vm999, %v2183, %v2184
        %v2186 = vrot.slane %v2038, 5
        %v2187 = vrot.slane %v2186, 4
        %v2188 = vrot.slane %v2039, 5
        %v2189 = vsel %vm999, %v2187, %v2188
        %v2190 = vrot.slane %v2188, 4
        %v2191 = vrot.slane %v2040, 5
        %v2192 = vsel %vm999, %v2190, %v2191
        %v2193 = vrot.slane %v2041, 5
        %v2194 = vrot.slane %v2193, 4
        %v2195 = vrot.slane %v2042, 5
        %v2196 = vsel %vm999, %v2194, %v2195
        %v2197 = vrot.slane %v2195, 4
        %v2198 = vrot.slane %v2043, 5
        %v2199 = vsel %vm999, %v2197, %v2198
        %v2200 = vrot.slane %v2044, 5
        %v2201 = vrot.slane %v2200, 4
        %v2202 = vrot.slane %v2045, 5
        %v2203 = vsel %vm999, %v2201, %v2202
        %v2204 = vrot.slane %v2202, 4
        %v2205 = vrot.slane %v2046, 5
        %v2206 = vsel %vm999, %v2204, %v2205
        %2207 = vrot.lane.b32.xlu0 %v2098, 20
        %v2208 = vpop.permute.xlu0 %2207
        %2209 = vrot.lane.b32.xlu0 %v2101, 20
        %v2210 = vpop.permute.xlu0 %2209
        %2211 = vrot.lane.b32.xlu0 %v2105, 20
        %v2212 = vpop.permute.xlu0 %2211
        %2213 = vrot.lane.b32.xlu0 %v2108, 20
        %v2214 = vpop.permute.xlu0 %2213
        %2215 = vrot.lane.b32.xlu0 %v2112, 20
        %v2216 = vpop.permute.xlu0 %2215
        %2217 = vrot.lane.b32.xlu0 %v2115, 20
        %v2218 = vpop.permute.xlu0 %2217
        %2219 = vrot.lane.b32.xlu0 %v2119, 20
        %v2220 = vpop.permute.xlu0 %2219
        %2221 = vrot.lane.b32.xlu0 %v2122, 20
        %v2222 = vpop.permute.xlu0 %2221
        %2223 = vrot.lane.b32.xlu0 %v2126, 20
        %v2224 = vpop.permute.xlu0 %2223
        %2225 = vrot.lane.b32.xlu0 %v2129, 20
        %v2226 = vpop.permute.xlu0 %2225
        %2227 = vrot.lane.b32.xlu0 %v2133, 20
        %v2228 = vpop.permute.xlu0 %2227
        %2229 = vrot.lane.b32.xlu0 %v2136, 20
        %v2230 = vpop.permute.xlu0 %2229
        %2231 = vrot.lane.b32.xlu0 %v2140, 20
        %v2232 = vpop.permute.xlu0 %2231
        %2233 = vrot.lane.b32.xlu0 %v2143, 20
        %v2234 = vpop.permute.xlu0 %2233
        %2235 = vrot.lane.b32.xlu0 %v2147, 20
        %v2236 = vpop.permute.xlu0 %2235
        %2237 = vrot.lane.b32.xlu0 %v2150, 20
        %v2238 = vpop.permute.xlu0 %2237
        %2239 = vrot.lane.b32.xlu0 %v2154, 20
        %v2240 = vpop.permute.xlu0 %2239
        %2241 = vrot.lane.b32.xlu0 %v2157, 20
        %v2242 = vpop.permute.xlu0 %2241
        %2243 = vrot.lane.b32.xlu0 %v2161, 20
        %v2244 = vpop.permute.xlu0 %2243
        %2245 = vrot.lane.b32.xlu0 %v2164, 20
        %v2246 = vpop.permute.xlu0 %2245
        %2247 = vrot.lane.b32.xlu0 %v2168, 20
        %v2248 = vpop.permute.xlu0 %2247
        %2249 = vrot.lane.b32.xlu0 %v2171, 20
        %v2250 = vpop.permute.xlu0 %2249
        %2251 = vrot.lane.b32.xlu0 %v2175, 20
        %v2252 = vpop.permute.xlu0 %2251
        %2253 = vrot.lane.b32.xlu0 %v2178, 20
        %v2254 = vpop.permute.xlu0 %2253
        %2255 = vrot.lane.b32.xlu0 %v2182, 20
        %v2256 = vpop.permute.xlu0 %2255
        %2257 = vrot.lane.b32.xlu0 %v2185, 20
        %v2258 = vpop.permute.xlu0 %2257
        %2259 = vrot.lane.b32.xlu0 %v2189, 20
        %v2260 = vpop.permute.xlu0 %2259
        %2261 = vrot.lane.b32.xlu0 %v2192, 20
        %v2262 = vpop.permute.xlu0 %2261
        %2263 = vrot.lane.b32.xlu0 %v2196, 20
        %v2264 = vpop.permute.xlu0 %2263
        %2265 = vrot.lane.b32.xlu0 %v2199, 20
        %v2266 = vpop.permute.xlu0 %2265
        %2267 = vrot.lane.b32.xlu0 %v2203, 20
        %v2268 = vpop.permute.xlu0 %2267
        %2269 = vrot.lane.b32.xlu0 %v2206, 20
        %v2270 = vpop.permute.xlu0 %2269
        %vm2303 = vcmask 191648
        %2304 = vst.msk [vmem:[#allocation2] sm:$0xf] %vm2303, %v2208
        %2305 = vst.msk [vmem:[#allocation2 + $0x4] sm:$0xf] %vm2303, %v2210
        %2306 = vst.msk [vmem:[#allocation2 + $0x8] sm:$0xf] %vm2303, %v2212
        %2307 = vst.msk [vmem:[#allocation2 + $0xc] sm:$0xf] %vm2303, %v2214
        %2308 = vst.msk [vmem:[#allocation2 + $0x10] sm:$0xf] %vm2303, %v2216
        %2309 = vst.msk [vmem:[#allocation2 + $0x14] sm:$0xf] %vm2303, %v2218
        %2310 = vst.msk [vmem:[#allocation2 + $0x18] sm:$0xf] %vm2303, %v2220
        %2311 = vst.msk [vmem:[#allocation2 + $0x1c] sm:$0xf] %vm2303, %v2222
        %2312 = vst.msk [vmem:[#allocation2 + $0x20] sm:$0xf] %vm2303, %v2224
        %2313 = vst.msk [vmem:[#allocation2 + $0x24] sm:$0xf] %vm2303, %v2226
        %2314 = vst.msk [vmem:[#allocation2 + $0x28] sm:$0xf] %vm2303, %v2228
        %2315 = vst.msk [vmem:[#allocation2 + $0x2c] sm:$0xf] %vm2303, %v2230
        %2316 = vst.msk [vmem:[#allocation2 + $0x30] sm:$0xf] %vm2303, %v2232
        %2317 = vst.msk [vmem:[#allocation2 + $0x34] sm:$0xf] %vm2303, %v2234
        %2318 = vst.msk [vmem:[#allocation2 + $0x38] sm:$0xf] %vm2303, %v2236
        %2319 = vst.msk [vmem:[#allocation2 + $0x3c] sm:$0xf] %vm2303, %v2238
        %2320 = vst.msk [vmem:[#allocation2 + $0x40] sm:$0xf] %vm2303, %v2240
        %2321 = vst.msk [vmem:[#allocation2 + $0x44] sm:$0xf] %vm2303, %v2242
        %2322 = vst.msk [vmem:[#allocation2 + $0x48] sm:$0xf] %vm2303, %v2244
        %2323 = vst.msk [vmem:[#allocation2 + $0x4c] sm:$0xf] %vm2303, %v2246
        %2324 = vst.msk [vmem:[#allocation2 + $0x50] sm:$0xf] %vm2303, %v2248
        %2325 = vst.msk [vmem:[#allocation2 + $0x54] sm:$0xf] %vm2303, %v2250
        %2326 = vst.msk [vmem:[#allocation2 + $0x58] sm:$0xf] %vm2303, %v2252
        %2327 = vst.msk [vmem:[#allocation2 + $0x5c] sm:$0xf] %vm2303, %v2254
        %2328 = vst.msk [vmem:[#allocation2 + $0x60] sm:$0xf] %vm2303, %v2256
        %2329 = vst.msk [vmem:[#allocation2 + $0x64] sm:$0xf] %vm2303, %v2258
        %2330 = vst.msk [vmem:[#allocation2 + $0x68] sm:$0xf] %vm2303, %v2260
        %2331 = vst.msk [vmem:[#allocation2 + $0x6c] sm:$0xf] %vm2303, %v2262
        %2332 = vst.msk [vmem:[#allocation2 + $0x70] sm:$0xf] %vm2303, %v2264
        %2333 = vst.msk [vmem:[#allocation2 + $0x74] sm:$0xf] %vm2303, %v2266
        %2334 = vst.msk [vmem:[#allocation2 + $0x78] sm:$0xf] %vm2303, %v2268
        %2335 = vst.msk [vmem:[#allocation2 + $0x7c] sm:$0xf] %vm2303, %v2270
        %s2336 = sadd.s32 %s268, 2
        %s2337 = smul.u32 %s2336, 3
        %s2338 = smul.addr %s2337, 4
        %s2339 = scalar_lea.vmem %s261, %s2338
        %v2340 = vld [vmem:[%s2339] sm:$0xf]
        %v2341 = vld [vmem:[%s2339 + $0x4] sm:$0xf]
        %v2342 = vld [vmem:[%s2339 + $0xc] sm:$0xf]
        %v2343 = vld [vmem:[%s2339 + $0x10] sm:$0xf]
        %v2344 = vld [vmem:[%s2339 + $0x18] sm:$0xf]
        %v2345 = vld [vmem:[%s2339 + $0x1c] sm:$0xf]
        %v2346 = vld [vmem:[%s2339 + $0x24] sm:$0xf]
        %v2347 = vld [vmem:[%s2339 + $0x28] sm:$0xf]
        %v2348 = vld [vmem:[%s2339 + $0x30] sm:$0xf]
        %v2349 = vld [vmem:[%s2339 + $0x34] sm:$0xf]
        %v2350 = vld [vmem:[%s2339 + $0x3c] sm:$0xf]
        %v2351 = vld [vmem:[%s2339 + $0x40] sm:$0xf]
        %v2352 = vld [vmem:[%s2339 + $0x48] sm:$0xf]
        %v2353 = vld [vmem:[%s2339 + $0x4c] sm:$0xf]
        %v2354 = vld [vmem:[%s2339 + $0x54] sm:$0xf]
        %v2355 = vld [vmem:[%s2339 + $0x58] sm:$0xf]
        %v2356 = vld [vmem:[%s2339 + $0x60] sm:$0xf]
        %v2357 = vld [vmem:[%s2339 + $0x64] sm:$0xf]
        %v2358 = vld [vmem:[%s2339 + $0x6c] sm:$0xf]
        %v2359 = vld [vmem:[%s2339 + $0x70] sm:$0xf]
        %v2360 = vld [vmem:[%s2339 + $0x78] sm:$0xf]
        %v2361 = vld [vmem:[%s2339 + $0x7c] sm:$0xf]
        %v2362 = vld [vmem:[%s2339 + $0x84] sm:$0xf]
        %v2363 = vld [vmem:[%s2339 + $0x88] sm:$0xf]
        %v2364 = vld [vmem:[%s2339 + $0x90] sm:$0xf]
        %v2365 = vld [vmem:[%s2339 + $0x94] sm:$0xf]
        %v2366 = vld [vmem:[%s2339 + $0x9c] sm:$0xf]
        %v2367 = vld [vmem:[%s2339 + $0xa0] sm:$0xf]
        %v2368 = vld [vmem:[%s2339 + $0xa8] sm:$0xf]
        %v2369 = vld [vmem:[%s2339 + $0xac] sm:$0xf]
        %v2370 = vld [vmem:[%s2339 + $0xb4] sm:$0xf]
        %v2371 = vld [vmem:[%s2339 + $0xb8] sm:$0xf]
        %2404 = vrot.lane.b32.xlu0 %v2340, 24
        %v2405 = vpop.permute.xlu0 %2404
        %2406 = vrot.lane.b32.xlu0 %v2341, 24
        %v2407 = vpop.permute.xlu0 %2406
        %2408 = vrot.lane.b32.xlu0 %v2342, 24
        %v2409 = vpop.permute.xlu0 %2408
        %2410 = vrot.lane.b32.xlu0 %v2343, 24
        %v2411 = vpop.permute.xlu0 %2410
        %2412 = vrot.lane.b32.xlu0 %v2344, 24
        %v2413 = vpop.permute.xlu0 %2412
        %2414 = vrot.lane.b32.xlu0 %v2345, 24
        %v2415 = vpop.permute.xlu0 %2414
        %2416 = vrot.lane.b32.xlu0 %v2346, 24
        %v2417 = vpop.permute.xlu0 %2416
        %2418 = vrot.lane.b32.xlu0 %v2347, 24
        %v2419 = vpop.permute.xlu0 %2418
        %2420 = vrot.lane.b32.xlu0 %v2348, 24
        %v2421 = vpop.permute.xlu0 %2420
        %2422 = vrot.lane.b32.xlu0 %v2349, 24
        %v2423 = vpop.permute.xlu0 %2422
        %2424 = vrot.lane.b32.xlu0 %v2350, 24
        %v2425 = vpop.permute.xlu0 %2424
        %2426 = vrot.lane.b32.xlu0 %v2351, 24
        %v2427 = vpop.permute.xlu0 %2426
        %2428 = vrot.lane.b32.xlu0 %v2352, 24
        %v2429 = vpop.permute.xlu0 %2428
        %2430 = vrot.lane.b32.xlu0 %v2353, 24
        %v2431 = vpop.permute.xlu0 %2430
        %2432 = vrot.lane.b32.xlu0 %v2354, 24
        %v2433 = vpop.permute.xlu0 %2432
        %2434 = vrot.lane.b32.xlu0 %v2355, 24
        %v2435 = vpop.permute.xlu0 %2434
        %2436 = vrot.lane.b32.xlu0 %v2356, 24
        %v2437 = vpop.permute.xlu0 %2436
        %2438 = vrot.lane.b32.xlu0 %v2357, 24
        %v2439 = vpop.permute.xlu0 %2438
        %2440 = vrot.lane.b32.xlu0 %v2358, 24
        %v2441 = vpop.permute.xlu0 %2440
        %2442 = vrot.lane.b32.xlu0 %v2359, 24
        %v2443 = vpop.permute.xlu0 %2442
        %2444 = vrot.lane.b32.xlu0 %v2360, 24
        %v2445 = vpop.permute.xlu0 %2444
        %2446 = vrot.lane.b32.xlu0 %v2361, 24
        %v2447 = vpop.permute.xlu0 %2446
        %2448 = vrot.lane.b32.xlu0 %v2362, 24
        %v2449 = vpop.permute.xlu0 %2448
        %2450 = vrot.lane.b32.xlu0 %v2363, 24
        %v2451 = vpop.permute.xlu0 %2450
        %2452 = vrot.lane.b32.xlu0 %v2364, 24
        %v2453 = vpop.permute.xlu0 %2452
        %2454 = vrot.lane.b32.xlu0 %v2365, 24
        %v2455 = vpop.permute.xlu0 %2454
        %2456 = vrot.lane.b32.xlu0 %v2366, 24
        %v2457 = vpop.permute.xlu0 %2456
        %2458 = vrot.lane.b32.xlu0 %v2367, 24
        %v2459 = vpop.permute.xlu0 %2458
        %2460 = vrot.lane.b32.xlu0 %v2368, 24
        %v2461 = vpop.permute.xlu0 %2460
        %2462 = vrot.lane.b32.xlu0 %v2369, 24
        %v2463 = vpop.permute.xlu0 %2462
        %2464 = vrot.lane.b32.xlu0 %v2370, 24
        %v2465 = vpop.permute.xlu0 %2464
        %2466 = vrot.lane.b32.xlu0 %v2371, 24
        %v2467 = vpop.permute.xlu0 %2466
        %vm2500 = vcmask 224448
        %2501 = vst.msk [vmem:[#allocation2] sm:$0xf] %vm2500, %v2405
        %2502 = vst.msk [vmem:[#allocation2 + $0x4] sm:$0xf] %vm2500, %v2407
        %2503 = vst.msk [vmem:[#allocation2 + $0x8] sm:$0xf] %vm2500, %v2409
        %2504 = vst.msk [vmem:[#allocation2 + $0xc] sm:$0xf] %vm2500, %v2411
        %2505 = vst.msk [vmem:[#allocation2 + $0x10] sm:$0xf] %vm2500, %v2413
        %2506 = vst.msk [vmem:[#allocation2 + $0x14] sm:$0xf] %vm2500, %v2415
        %2507 = vst.msk [vmem:[#allocation2 + $0x18] sm:$0xf] %vm2500, %v2417
        %2508 = vst.msk [vmem:[#allocation2 + $0x1c] sm:$0xf] %vm2500, %v2419
        %2509 = vst.msk [vmem:[#allocation2 + $0x20] sm:$0xf] %vm2500, %v2421
        %2510 = vst.msk [vmem:[#allocation2 + $0x24] sm:$0xf] %vm2500, %v2423
        %2511 = vst.msk [vmem:[#allocation2 + $0x28] sm:$0xf] %vm2500, %v2425
        %2512 = vst.msk [vmem:[#allocation2 + $0x2c] sm:$0xf] %vm2500, %v2427
        %2513 = vst.msk [vmem:[#allocation2 + $0x30] sm:$0xf] %vm2500, %v2429
        %2514 = vst.msk [vmem:[#allocation2 + $0x34] sm:$0xf] %vm2500, %v2431
        %2515 = vst.msk [vmem:[#allocation2 + $0x38] sm:$0xf] %vm2500, %v2433
        %2516 = vst.msk [vmem:[#allocation2 + $0x3c] sm:$0xf] %vm2500, %v2435
        %2517 = vst.msk [vmem:[#allocation2 + $0x40] sm:$0xf] %vm2500, %v2437
        %2518 = vst.msk [vmem:[#allocation2 + $0x44] sm:$0xf] %vm2500, %v2439
        %2519 = vst.msk [vmem:[#allocation2 + $0x48] sm:$0xf] %vm2500, %v2441
        %2520 = vst.msk [vmem:[#allocation2 + $0x4c] sm:$0xf] %vm2500, %v2443
        %2521 = vst.msk [vmem:[#allocation2 + $0x50] sm:$0xf] %vm2500, %v2445
        %2522 = vst.msk [vmem:[#allocation2 + $0x54] sm:$0xf] %vm2500, %v2447
        %2523 = vst.msk [vmem:[#allocation2 + $0x58] sm:$0xf] %vm2500, %v2449
        %2524 = vst.msk [vmem:[#allocation2 + $0x5c] sm:$0xf] %vm2500, %v2451
        %2525 = vst.msk [vmem:[#allocation2 + $0x60] sm:$0xf] %vm2500, %v2453
        %2526 = vst.msk [vmem:[#allocation2 + $0x64] sm:$0xf] %vm2500, %v2455
        %2527 = vst.msk [vmem:[#allocation2 + $0x68] sm:$0xf] %vm2500, %v2457
        %2528 = vst.msk [vmem:[#allocation2 + $0x6c] sm:$0xf] %vm2500, %v2459
        %2529 = vst.msk [vmem:[#allocation2 + $0x70] sm:$0xf] %vm2500, %v2461
        %2530 = vst.msk [vmem:[#allocation2 + $0x74] sm:$0xf] %vm2500, %v2463
        %2531 = vst.msk [vmem:[#allocation2 + $0x78] sm:$0xf] %vm2500, %v2465
        %2532 = vst.msk [vmem:[#allocation2 + $0x7c] sm:$0xf] %vm2500, %v2467
        %v2533 = vld [vmem:[%s2339] sm:$0xf]
        %v2534 = vld [vmem:[%s2339 + $0x4] sm:$0xf]
        %v2535 = vld [vmem:[%s2339 + $0x8] sm:$0x1]
        %v2536 = vld [vmem:[%s2339 + $0xc] sm:$0xf]
        %v2537 = vld [vmem:[%s2339 + $0x10] sm:$0xf]
        %v2538 = vld [vmem:[%s2339 + $0x14] sm:$0x1]
        %v2539 = vld [vmem:[%s2339 + $0x18] sm:$0xf]
        %v2540 = vld [vmem:[%s2339 + $0x1c] sm:$0xf]
        %v2541 = vld [vmem:[%s2339 + $0x20] sm:$0x1]
        %v2542 = vld [vmem:[%s2339 + $0x24] sm:$0xf]
        %v2543 = vld [vmem:[%s2339 + $0x28] sm:$0xf]
        %v2544 = vld [vmem:[%s2339 + $0x2c] sm:$0x1]
        %v2545 = vld [vmem:[%s2339 + $0x30] sm:$0xf]
        %v2546 = vld [vmem:[%s2339 + $0x34] sm:$0xf]
        %v2547 = vld [vmem:[%s2339 + $0x38] sm:$0x1]
        %v2548 = vld [vmem:[%s2339 + $0x3c] sm:$0xf]
        %v2549 = vld [vmem:[%s2339 + $0x40] sm:$0xf]
        %v2550 = vld [vmem:[%s2339 + $0x44] sm:$0x1]
        %v2551 = vld [vmem:[%s2339 + $0x48] sm:$0xf]
        %v2552 = vld [vmem:[%s2339 + $0x4c] sm:$0xf]
        %v2553 = vld [vmem:[%s2339 + $0x50] sm:$0x1]
        %v2554 = vld [vmem:[%s2339 + $0x54] sm:$0xf]
        %v2555 = vld [vmem:[%s2339 + $0x58] sm:$0xf]
        %v2556 = vld [vmem:[%s2339 + $0x5c] sm:$0x1]
        %v2557 = vld [vmem:[%s2339 + $0x60] sm:$0xf]
        %v2558 = vld [vmem:[%s2339 + $0x64] sm:$0xf]
        %v2559 = vld [vmem:[%s2339 + $0x68] sm:$0x1]
        %v2560 = vld [vmem:[%s2339 + $0x6c] sm:$0xf]
        %v2561 = vld [vmem:[%s2339 + $0x70] sm:$0xf]
        %v2562 = vld [vmem:[%s2339 + $0x74] sm:$0x1]
        %v2563 = vld [vmem:[%s2339 + $0x78] sm:$0xf]
        %v2564 = vld [vmem:[%s2339 + $0x7c] sm:$0xf]
        %v2565 = vld [vmem:[%s2339 + $0x80] sm:$0x1]
        %v2566 = vld [vmem:[%s2339 + $0x84] sm:$0xf]
        %v2567 = vld [vmem:[%s2339 + $0x88] sm:$0xf]
        %v2568 = vld [vmem:[%s2339 + $0x8c] sm:$0x1]
        %v2569 = vld [vmem:[%s2339 + $0x90] sm:$0xf]
        %v2570 = vld [vmem:[%s2339 + $0x94] sm:$0xf]
        %v2571 = vld [vmem:[%s2339 + $0x98] sm:$0x1]
        %v2572 = vld [vmem:[%s2339 + $0x9c] sm:$0xf]
        %v2573 = vld [vmem:[%s2339 + $0xa0] sm:$0xf]
        %v2574 = vld [vmem:[%s2339 + $0xa4] sm:$0x1]
        %v2575 = vld [vmem:[%s2339 + $0xa8] sm:$0xf]
        %v2576 = vld [vmem:[%s2339 + $0xac] sm:$0xf]
        %v2577 = vld [vmem:[%s2339 + $0xb0] sm:$0x1]
        %v2578 = vld [vmem:[%s2339 + $0xb4] sm:$0xf]
        %v2579 = vld [vmem:[%s2339 + $0xb8] sm:$0xf]
        %v2580 = vld [vmem:[%s2339 + $0xbc] sm:$0x1]
        %v2582 = vshrl.u32 %v2533, 16
        %v2584 = vrot.slane %v2582, 4
        %v2585 = vshll.u32 %v2533, 16
        %v2587 = vrot.slane %v2585, 5
        %v2588 = vor.u32 %v2584, %v2587
        %v2589 = vrot.slane %v2588, 4
        %v2591 = vshll.u32 %v2534, 16
        %v2593 = vrot.slane %v2591, 5
        %v2594 = vsel %vm387, %v2589, %v2593
        %v2595 = vshrl.u32 %v2534, 16
        %v2597 = vrot.slane %v2595, 4
        %v2598 = vor.u32 %v2597, %v2593
        %v2599 = vrot.slane %v2598, 4
        %v2601 = vshll.u32 %v2535, 16
        %v2603 = vrot.slane %v2601, 5
        %v2604 = vsel %vm387, %v2599, %v2603
        %v2606 = vshrl.u32 %v2536, 16
        %v2608 = vrot.slane %v2606, 4
        %v2609 = vshll.u32 %v2536, 16
        %v2611 = vrot.slane %v2609, 5
        %v2612 = vor.u32 %v2608, %v2611
        %v2613 = vrot.slane %v2612, 4
        %v2615 = vshll.u32 %v2537, 16
        %v2617 = vrot.slane %v2615, 5
        %v2618 = vsel %vm387, %v2613, %v2617
        %v2619 = vshrl.u32 %v2537, 16
        %v2621 = vrot.slane %v2619, 4
        %v2622 = vor.u32 %v2621, %v2617
        %v2623 = vrot.slane %v2622, 4
        %v2625 = vshll.u32 %v2538, 16
        %v2627 = vrot.slane %v2625, 5
        %v2628 = vsel %vm387, %v2623, %v2627
        %v2630 = vshrl.u32 %v2539, 16
        %v2632 = vrot.slane %v2630, 4
        %v2633 = vshll.u32 %v2539, 16
        %v2635 = vrot.slane %v2633, 5
        %v2636 = vor.u32 %v2632, %v2635
        %v2637 = vrot.slane %v2636, 4
        %v2639 = vshll.u32 %v2540, 16
        %v2641 = vrot.slane %v2639, 5
        %v2642 = vsel %vm387, %v2637, %v2641
        %v2643 = vshrl.u32 %v2540, 16
        %v2645 = vrot.slane %v2643, 4
        %v2646 = vor.u32 %v2645, %v2641
        %v2647 = vrot.slane %v2646, 4
        %v2649 = vshll.u32 %v2541, 16
        %v2651 = vrot.slane %v2649, 5
        %v2652 = vsel %vm387, %v2647, %v2651
        %v2654 = vshrl.u32 %v2542, 16
        %v2656 = vrot.slane %v2654, 4
        %v2657 = vshll.u32 %v2542, 16
        %v2659 = vrot.slane %v2657, 5
        %v2660 = vor.u32 %v2656, %v2659
        %v2661 = vrot.slane %v2660, 4
        %v2663 = vshll.u32 %v2543, 16
        %v2665 = vrot.slane %v2663, 5
        %v2666 = vsel %vm387, %v2661, %v2665
        %v2667 = vshrl.u32 %v2543, 16
        %v2669 = vrot.slane %v2667, 4
        %v2670 = vor.u32 %v2669, %v2665
        %v2671 = vrot.slane %v2670, 4
        %v2673 = vshll.u32 %v2544, 16
        %v2675 = vrot.slane %v2673, 5
        %v2676 = vsel %vm387, %v2671, %v2675
        %v2678 = vshrl.u32 %v2545, 16
        %v2680 = vrot.slane %v2678, 4
        %v2681 = vshll.u32 %v2545, 16
        %v2683 = vrot.slane %v2681, 5
        %v2684 = vor.u32 %v2680, %v2683
        %v2685 = vrot.slane %v2684, 4
        %v2687 = vshll.u32 %v2546, 16
        %v2689 = vrot.slane %v2687, 5
        %v2690 = vsel %vm387, %v2685, %v2689
        %v2691 = vshrl.u32 %v2546, 16
        %v2693 = vrot.slane %v2691, 4
        %v2694 = vor.u32 %v2693, %v2689
        %v2695 = vrot.slane %v2694, 4
        %v2697 = vshll.u32 %v2547, 16
        %v2699 = vrot.slane %v2697, 5
        %v2700 = vsel %vm387, %v2695, %v2699
        %v2702 = vshrl.u32 %v2548, 16
        %v2704 = vrot.slane %v2702, 4
        %v2705 = vshll.u32 %v2548, 16
        %v2707 = vrot.slane %v2705, 5
        %v2708 = vor.u32 %v2704, %v2707
        %v2709 = vrot.slane %v2708, 4
        %v2711 = vshll.u32 %v2549, 16
        %v2713 = vrot.slane %v2711, 5
        %v2714 = vsel %vm387, %v2709, %v2713
        %v2715 = vshrl.u32 %v2549, 16
        %v2717 = vrot.slane %v2715, 4
        %v2718 = vor.u32 %v2717, %v2713
        %v2719 = vrot.slane %v2718, 4
        %v2721 = vshll.u32 %v2550, 16
        %v2723 = vrot.slane %v2721, 5
        %v2724 = vsel %vm387, %v2719, %v2723
        %v2726 = vshrl.u32 %v2551, 16
        %v2728 = vrot.slane %v2726, 4
        %v2729 = vshll.u32 %v2551, 16
        %v2731 = vrot.slane %v2729, 5
        %v2732 = vor.u32 %v2728, %v2731
        %v2733 = vrot.slane %v2732, 4
        %v2735 = vshll.u32 %v2552, 16
        %v2737 = vrot.slane %v2735, 5
        %v2738 = vsel %vm387, %v2733, %v2737
        %v2739 = vshrl.u32 %v2552, 16
        %v2741 = vrot.slane %v2739, 4
        %v2742 = vor.u32 %v2741, %v2737
        %v2743 = vrot.slane %v2742, 4
        %v2745 = vshll.u32 %v2553, 16
        %v2747 = vrot.slane %v2745, 5
        %v2748 = vsel %vm387, %v2743, %v2747
        %v2750 = vshrl.u32 %v2554, 16
        %v2752 = vrot.slane %v2750, 4
        %v2753 = vshll.u32 %v2554, 16
        %v2755 = vrot.slane %v2753, 5
        %v2756 = vor.u32 %v2752, %v2755
        %v2757 = vrot.slane %v2756, 4
        %v2759 = vshll.u32 %v2555, 16
        %v2761 = vrot.slane %v2759, 5
        %v2762 = vsel %vm387, %v2757, %v2761
        %v2763 = vshrl.u32 %v2555, 16
        %v2765 = vrot.slane %v2763, 4
        %v2766 = vor.u32 %v2765, %v2761
        %v2767 = vrot.slane %v2766, 4
        %v2769 = vshll.u32 %v2556, 16
        %v2771 = vrot.slane %v2769, 5
        %v2772 = vsel %vm387, %v2767, %v2771
        %v2774 = vshrl.u32 %v2557, 16
        %v2776 = vrot.slane %v2774, 4
        %v2777 = vshll.u32 %v2557, 16
        %v2779 = vrot.slane %v2777, 5
        %v2780 = vor.u32 %v2776, %v2779
        %v2781 = vrot.slane %v2780, 4
        %v2783 = vshll.u32 %v2558, 16
        %v2785 = vrot.slane %v2783, 5
        %v2786 = vsel %vm387, %v2781, %v2785
        %v2787 = vshrl.u32 %v2558, 16
        %v2789 = vrot.slane %v2787, 4
        %v2790 = vor.u32 %v2789, %v2785
        %v2791 = vrot.slane %v2790, 4
        %v2793 = vshll.u32 %v2559, 16
        %v2795 = vrot.slane %v2793, 5
        %v2796 = vsel %vm387, %v2791, %v2795
        %v2798 = vshrl.u32 %v2560, 16
        %v2800 = vrot.slane %v2798, 4
        %v2801 = vshll.u32 %v2560, 16
        %v2803 = vrot.slane %v2801, 5
        %v2804 = vor.u32 %v2800, %v2803
        %v2805 = vrot.slane %v2804, 4
        %v2807 = vshll.u32 %v2561, 16
        %v2809 = vrot.slane %v2807, 5
        %v2810 = vsel %vm387, %v2805, %v2809
        %v2811 = vshrl.u32 %v2561, 16
        %v2813 = vrot.slane %v2811, 4
        %v2814 = vor.u32 %v2813, %v2809
        %v2815 = vrot.slane %v2814, 4
        %v2817 = vshll.u32 %v2562, 16
        %v2819 = vrot.slane %v2817, 5
        %v2820 = vsel %vm387, %v2815, %v2819
        %v2822 = vshrl.u32 %v2563, 16
        %v2824 = vrot.slane %v2822, 4
        %v2825 = vshll.u32 %v2563, 16
        %v2827 = vrot.slane %v2825, 5
        %v2828 = vor.u32 %v2824, %v2827
        %v2829 = vrot.slane %v2828, 4
        %v2831 = vshll.u32 %v2564, 16
        %v2833 = vrot.slane %v2831, 5
        %v2834 = vsel %vm387, %v2829, %v2833
        %v2835 = vshrl.u32 %v2564, 16
        %v2837 = vrot.slane %v2835, 4
        %v2838 = vor.u32 %v2837, %v2833
        %v2839 = vrot.slane %v2838, 4
        %v2841 = vshll.u32 %v2565, 16
        %v2843 = vrot.slane %v2841, 5
        %v2844 = vsel %vm387, %v2839, %v2843
        %v2846 = vshrl.u32 %v2566, 16
        %v2848 = vrot.slane %v2846, 4
        %v2849 = vshll.u32 %v2566, 16
        %v2851 = vrot.slane %v2849, 5
        %v2852 = vor.u32 %v2848, %v2851
        %v2853 = vrot.slane %v2852, 4
        %v2855 = vshll.u32 %v2567, 16
        %v2857 = vrot.slane %v2855, 5
        %v2858 = vsel %vm387, %v2853, %v2857
        %v2859 = vshrl.u32 %v2567, 16
        %v2861 = vrot.slane %v2859, 4
        %v2862 = vor.u32 %v2861, %v2857
        %v2863 = vrot.slane %v2862, 4
        %v2865 = vshll.u32 %v2568, 16
        %v2867 = vrot.slane %v2865, 5
        %v2868 = vsel %vm387, %v2863, %v2867
        %v2870 = vshrl.u32 %v2569, 16
        %v2872 = vrot.slane %v2870, 4
        %v2873 = vshll.u32 %v2569, 16
        %v2875 = vrot.slane %v2873, 5
        %v2876 = vor.u32 %v2872, %v2875
        %v2877 = vrot.slane %v2876, 4
        %v2879 = vshll.u32 %v2570, 16
        %v2881 = vrot.slane %v2879, 5
        %v2882 = vsel %vm387, %v2877, %v2881
        %v2883 = vshrl.u32 %v2570, 16
        %v2885 = vrot.slane %v2883, 4
        %v2886 = vor.u32 %v2885, %v2881
        %v2887 = vrot.slane %v2886, 4
        %v2889 = vshll.u32 %v2571, 16
        %v2891 = vrot.slane %v2889, 5
        %v2892 = vsel %vm387, %v2887, %v2891
        %v2894 = vshrl.u32 %v2572, 16
        %v2896 = vrot.slane %v2894, 4
        %v2897 = vshll.u32 %v2572, 16
        %v2899 = vrot.slane %v2897, 5
        %v2900 = vor.u32 %v2896, %v2899
        %v2901 = vrot.slane %v2900, 4
        %v2903 = vshll.u32 %v2573, 16
        %v2905 = vrot.slane %v2903, 5
        %v2906 = vsel %vm387, %v2901, %v2905
        %v2907 = vshrl.u32 %v2573, 16
        %v2909 = vrot.slane %v2907, 4
        %v2910 = vor.u32 %v2909, %v2905
        %v2911 = vrot.slane %v2910, 4
        %v2913 = vshll.u32 %v2574, 16
        %v2915 = vrot.slane %v2913, 5
        %v2916 = vsel %vm387, %v2911, %v2915
        %v2918 = vshrl.u32 %v2575, 16
        %v2920 = vrot.slane %v2918, 4
        %v2921 = vshll.u32 %v2575, 16
        %v2923 = vrot.slane %v2921, 5
        %v2924 = vor.u32 %v2920, %v2923
        %v2925 = vrot.slane %v2924, 4
        %v2927 = vshll.u32 %v2576, 16
        %v2929 = vrot.slane %v2927, 5
        %v2930 = vsel %vm387, %v2925, %v2929
        %v2931 = vshrl.u32 %v2576, 16
        %v2933 = vrot.slane %v2931, 4
        %v2934 = vor.u32 %v2933, %v2929
        %v2935 = vrot.slane %v2934, 4
        %v2937 = vshll.u32 %v2577, 16
        %v2939 = vrot.slane %v2937, 5
        %v2940 = vsel %vm387, %v2935, %v2939
        %v2942 = vshrl.u32 %v2578, 16
        %v2944 = vrot.slane %v2942, 4
        %v2945 = vshll.u32 %v2578, 16
        %v2947 = vrot.slane %v2945, 5
        %v2948 = vor.u32 %v2944, %v2947
        %v2949 = vrot.slane %v2948, 4
        %v2951 = vshll.u32 %v2579, 16
        %v2953 = vrot.slane %v2951, 5
        %v2954 = vsel %vm387, %v2949, %v2953
        %v2955 = vshrl.u32 %v2579, 16
        %v2957 = vrot.slane %v2955, 4
        %v2958 = vor.u32 %v2957, %v2953
        %v2959 = vrot.slane %v2958, 4
        %v2961 = vshll.u32 %v2580, 16
        %v2963 = vrot.slane %v2961, 5
        %v2964 = vsel %vm387, %v2959, %v2963
        %2965 = vrot.lane.b32.xlu0 %v2594, 28
        %v2966 = vpop.permute.xlu0 %2965
        %2967 = vrot.lane.b32.xlu0 %v2604, 28
        %v2968 = vpop.permute.xlu0 %2967
        %2969 = vrot.lane.b32.xlu0 %v2618, 28
        %v2970 = vpop.permute.xlu0 %2969
        %2971 = vrot.lane.b32.xlu0 %v2628, 28
        %v2972 = vpop.permute.xlu0 %2971
        %2973 = vrot.lane.b32.xlu0 %v2642, 28
        %v2974 = vpop.permute.xlu0 %2973
        %2975 = vrot.lane.b32.xlu0 %v2652, 28
        %v2976 = vpop.permute.xlu0 %2975
        %2977 = vrot.lane.b32.xlu0 %v2666, 28
        %v2978 = vpop.permute.xlu0 %2977
        %2979 = vrot.lane.b32.xlu0 %v2676, 28
        %v2980 = vpop.permute.xlu0 %2979
        %2981 = vrot.lane.b32.xlu0 %v2690, 28
        %v2982 = vpop.permute.xlu0 %2981
        %2983 = vrot.lane.b32.xlu0 %v2700, 28
        %v2984 = vpop.permute.xlu0 %2983
        %2985 = vrot.lane.b32.xlu0 %v2714, 28
        %v2986 = vpop.permute.xlu0 %2985
        %2987 = vrot.lane.b32.xlu0 %v2724, 28
        %v2988 = vpop.permute.xlu0 %2987
        %2989 = vrot.lane.b32.xlu0 %v2738, 28
        %v2990 = vpop.permute.xlu0 %2989
        %2991 = vrot.lane.b32.xlu0 %v2748, 28
        %v2992 = vpop.permute.xlu0 %2991
        %2993 = vrot.lane.b32.xlu0 %v2762, 28
        %v2994 = vpop.permute.xlu0 %2993
        %2995 = vrot.lane.b32.xlu0 %v2772, 28
        %v2996 = vpop.permute.xlu0 %2995
        %2997 = vrot.lane.b32.xlu0 %v2786, 28
        %v2998 = vpop.permute.xlu0 %2997
        %2999 = vrot.lane.b32.xlu0 %v2796, 28
        %v3000 = vpop.permute.xlu0 %2999
        %3001 = vrot.lane.b32.xlu0 %v2810, 28
        %v3002 = vpop.permute.xlu0 %3001
        %3003 = vrot.lane.b32.xlu0 %v2820, 28
        %v3004 = vpop.permute.xlu0 %3003
        %3005 = vrot.lane.b32.xlu0 %v2834, 28
        %v3006 = vpop.permute.xlu0 %3005
        %3007 = vrot.lane.b32.xlu0 %v2844, 28
        %v3008 = vpop.permute.xlu0 %3007
        %3009 = vrot.lane.b32.xlu0 %v2858, 28
        %v3010 = vpop.permute.xlu0 %3009
        %3011 = vrot.lane.b32.xlu0 %v2868, 28
        %v3012 = vpop.permute.xlu0 %3011
        %3013 = vrot.lane.b32.xlu0 %v2882, 28
        %v3014 = vpop.permute.xlu0 %3013
        %3015 = vrot.lane.b32.xlu0 %v2892, 28
        %v3016 = vpop.permute.xlu0 %3015
        %3017 = vrot.lane.b32.xlu0 %v2906, 28
        %v3018 = vpop.permute.xlu0 %3017
        %3019 = vrot.lane.b32.xlu0 %v2916, 28
        %v3020 = vpop.permute.xlu0 %3019
        %3021 = vrot.lane.b32.xlu0 %v2930, 28
        %v3022 = vpop.permute.xlu0 %3021
        %3023 = vrot.lane.b32.xlu0 %v2940, 28
        %v3024 = vpop.permute.xlu0 %3023
        %3025 = vrot.lane.b32.xlu0 %v2954, 28
        %v3026 = vpop.permute.xlu0 %3025
        %3027 = vrot.lane.b32.xlu0 %v2964, 28
        %v3028 = vpop.permute.xlu0 %3027
        %vm3061 = vcmask 257248
        %3062 = vst.msk [vmem:[#allocation2] sm:$0xf] %vm3061, %v2966
        %3063 = vst.msk [vmem:[#allocation2 + $0x4] sm:$0xf] %vm3061, %v2968
        %3064 = vst.msk [vmem:[#allocation2 + $0x8] sm:$0xf] %vm3061, %v2970
        %3065 = vst.msk [vmem:[#allocation2 + $0xc] sm:$0xf] %vm3061, %v2972
        %3066 = vst.msk [vmem:[#allocation2 + $0x10] sm:$0xf] %vm3061, %v2974
        %3067 = vst.msk [vmem:[#allocation2 + $0x14] sm:$0xf] %vm3061, %v2976
        %3068 = vst.msk [vmem:[#allocation2 + $0x18] sm:$0xf] %vm3061, %v2978
        %3069 = vst.msk [vmem:[#allocation2 + $0x1c] sm:$0xf] %vm3061, %v2980
        %3070 = vst.msk [vmem:[#allocation2 + $0x20] sm:$0xf] %vm3061, %v2982
        %3071 = vst.msk [vmem:[#allocation2 + $0x24] sm:$0xf] %vm3061, %v2984
        %3072 = vst.msk [vmem:[#allocation2 + $0x28] sm:$0xf] %vm3061, %v2986
        %3073 = vst.msk [vmem:[#allocation2 + $0x2c] sm:$0xf] %vm3061, %v2988
        %3074 = vst.msk [vmem:[#allocation2 + $0x30] sm:$0xf] %vm3061, %v2990
        %3075 = vst.msk [vmem:[#allocation2 + $0x34] sm:$0xf] %vm3061, %v2992
        %3076 = vst.msk [vmem:[#allocation2 + $0x38] sm:$0xf] %vm3061, %v2994
        %3077 = vst.msk [vmem:[#allocation2 + $0x3c] sm:$0xf] %vm3061, %v2996
        %3078 = vst.msk [vmem:[#allocation2 + $0x40] sm:$0xf] %vm3061, %v2998
        %3079 = vst.msk [vmem:[#allocation2 + $0x44] sm:$0xf] %vm3061, %v3000
        %3080 = vst.msk [vmem:[#allocation2 + $0x48] sm:$0xf] %vm3061, %v3002
        %3081 = vst.msk [vmem:[#allocation2 + $0x4c] sm:$0xf] %vm3061, %v3004
        %3082 = vst.msk [vmem:[#allocation2 + $0x50] sm:$0xf] %vm3061, %v3006
        %3083 = vst.msk [vmem:[#allocation2 + $0x54] sm:$0xf] %vm3061, %v3008
        %3084 = vst.msk [vmem:[#allocation2 + $0x58] sm:$0xf] %vm3061, %v3010
        %3085 = vst.msk [vmem:[#allocation2 + $0x5c] sm:$0xf] %vm3061, %v3012
        %3086 = vst.msk [vmem:[#allocation2 + $0x60] sm:$0xf] %vm3061, %v3014
        %3087 = vst.msk [vmem:[#allocation2 + $0x64] sm:$0xf] %vm3061, %v3016
        %3088 = vst.msk [vmem:[#allocation2 + $0x68] sm:$0xf] %vm3061, %v3018
        %3089 = vst.msk [vmem:[#allocation2 + $0x6c] sm:$0xf] %vm3061, %v3020
        %3090 = vst.msk [vmem:[#allocation2 + $0x70] sm:$0xf] %vm3061, %v3022
        %3091 = vst.msk [vmem:[#allocation2 + $0x74] sm:$0xf] %vm3061, %v3024
        %3092 = vst.msk [vmem:[#allocation2 + $0x78] sm:$0xf] %vm3061, %v3026
        %3093 = vst.msk [vmem:[#allocation2 + $0x7c] sm:$0xf] %vm3061, %v3028
        %v3094 = vld [vmem:[%s2339] sm:$0xe]
        %v3095 = vld [vmem:[%s2339 + $0x4] sm:$0xf]
        %v3096 = vld [vmem:[%s2339 + $0x8] sm:$0x1]
        %v3097 = vld [vmem:[%s2339 + $0xc] sm:$0xe]
        %v3098 = vld [vmem:[%s2339 + $0x10] sm:$0xf]
        %v3099 = vld [vmem:[%s2339 + $0x14] sm:$0x1]
        %v3100 = vld [vmem:[%s2339 + $0x18] sm:$0xe]
        %v3101 = vld [vmem:[%s2339 + $0x1c] sm:$0xf]
        %v3102 = vld [vmem:[%s2339 + $0x20] sm:$0x1]
        %v3103 = vld [vmem:[%s2339 + $0x24] sm:$0xe]
        %v3104 = vld [vmem:[%s2339 + $0x28] sm:$0xf]
        %v3105 = vld [vmem:[%s2339 + $0x2c] sm:$0x1]
        %v3106 = vld [vmem:[%s2339 + $0x30] sm:$0xe]
        %v3107 = vld [vmem:[%s2339 + $0x34] sm:$0xf]
        %v3108 = vld [vmem:[%s2339 + $0x38] sm:$0x1]
        %v3109 = vld [vmem:[%s2339 + $0x3c] sm:$0xe]
        %v3110 = vld [vmem:[%s2339 + $0x40] sm:$0xf]
        %v3111 = vld [vmem:[%s2339 + $0x44] sm:$0x1]
        %v3112 = vld [vmem:[%s2339 + $0x48] sm:$0xe]
        %v3113 = vld [vmem:[%s2339 + $0x4c] sm:$0xf]
        %v3114 = vld [vmem:[%s2339 + $0x50] sm:$0x1]
        %v3115 = vld [vmem:[%s2339 + $0x54] sm:$0xe]
        %v3116 = vld [vmem:[%s2339 + $0x58] sm:$0xf]
        %v3117 = vld [vmem:[%s2339 + $0x5c] sm:$0x1]
        %v3118 = vld [vmem:[%s2339 + $0x60] sm:$0xe]
        %v3119 = vld [vmem:[%s2339 + $0x64] sm:$0xf]
        %v3120 = vld [vmem:[%s2339 + $0x68] sm:$0x1]
        %v3121 = vld [vmem:[%s2339 + $0x6c] sm:$0xe]
        %v3122 = vld [vmem:[%s2339 + $0x70] sm:$0xf]
        %v3123 = vld [vmem:[%s2339 + $0x74] sm:$0x1]
        %v3124 = vld [vmem:[%s2339 + $0x78] sm:$0xe]
        %v3125 = vld [vmem:[%s2339 + $0x7c] sm:$0xf]
        %v3126 = vld [vmem:[%s2339 + $0x80] sm:$0x1]
        %v3127 = vld [vmem:[%s2339 + $0x84] sm:$0xe]
        %v3128 = vld [vmem:[%s2339 + $0x88] sm:$0xf]
        %v3129 = vld [vmem:[%s2339 + $0x8c] sm:$0x1]
        %v3130 = vld [vmem:[%s2339 + $0x90] sm:$0xe]
        %v3131 = vld [vmem:[%s2339 + $0x94] sm:$0xf]
        %v3132 = vld [vmem:[%s2339 + $0x98] sm:$0x1]
        %v3133 = vld [vmem:[%s2339 + $0x9c] sm:$0xe]
        %v3134 = vld [vmem:[%s2339 + $0xa0] sm:$0xf]
        %v3135 = vld [vmem:[%s2339 + $0xa4] sm:$0x1]
        %v3136 = vld [vmem:[%s2339 + $0xa8] sm:$0xe]
        %v3137 = vld [vmem:[%s2339 + $0xac] sm:$0xf]
        %v3138 = vld [vmem:[%s2339 + $0xb0] sm:$0x1]
        %v3139 = vld [vmem:[%s2339 + $0xb4] sm:$0xe]
        %v3140 = vld [vmem:[%s2339 + $0xb8] sm:$0xf]
        %v3141 = vld [vmem:[%s2339 + $0xbc] sm:$0x1]
        %v3190 = vrot.slane %v3094, 5
        %v3191 = vrot.slane %v3190, 4
        %v3192 = vrot.slane %v3095, 5
        %v3193 = vsel %vm999, %v3191, %v3192
        %v3194 = vrot.slane %v3192, 4
        %v3195 = vrot.slane %v3096, 5
        %v3196 = vsel %vm999, %v3194, %v3195
        %v3197 = vrot.slane %v3097, 5
        %v3198 = vrot.slane %v3197, 4
        %v3199 = vrot.slane %v3098, 5
        %v3200 = vsel %vm999, %v3198, %v3199
        %v3201 = vrot.slane %v3199, 4
        %v3202 = vrot.slane %v3099, 5
        %v3203 = vsel %vm999, %v3201, %v3202
        %v3204 = vrot.slane %v3100, 5
        %v3205 = vrot.slane %v3204, 4
        %v3206 = vrot.slane %v3101, 5
        %v3207 = vsel %vm999, %v3205, %v3206
        %v3208 = vrot.slane %v3206, 4
        %v3209 = vrot.slane %v3102, 5
        %v3210 = vsel %vm999, %v3208, %v3209
        %v3211 = vrot.slane %v3103, 5
        %v3212 = vrot.slane %v3211, 4
        %v3213 = vrot.slane %v3104, 5
        %v3214 = vsel %vm999, %v3212, %v3213
        %v3215 = vrot.slane %v3213, 4
        %v3216 = vrot.slane %v3105, 5
        %v3217 = vsel %vm999, %v3215, %v3216
        %v3218 = vrot.slane %v3106, 5
        %v3219 = vrot.slane %v3218, 4
        %v3220 = vrot.slane %v3107, 5
        %v3221 = vsel %vm999, %v3219, %v3220
        %v3222 = vrot.slane %v3220, 4
        %v3223 = vrot.slane %v3108, 5
        %v3224 = vsel %vm999, %v3222, %v3223
        %v3225 = vrot.slane %v3109, 5
        %v3226 = vrot.slane %v3225, 4
        %v3227 = vrot.slane %v3110, 5
        %v3228 = vsel %vm999, %v3226, %v3227
        %v3229 = vrot.slane %v3227, 4
        %v3230 = vrot.slane %v3111, 5
        %v3231 = vsel %vm999, %v3229, %v3230
        %v3232 = vrot.slane %v3112, 5
        %v3233 = vrot.slane %v3232, 4
        %v3234 = vrot.slane %v3113, 5
        %v3235 = vsel %vm999, %v3233, %v3234
        %v3236 = vrot.slane %v3234, 4
        %v3237 = vrot.slane %v3114, 5
        %v3238 = vsel %vm999, %v3236, %v3237
        %v3239 = vrot.slane %v3115, 5
        %v3240 = vrot.slane %v3239, 4
        %v3241 = vrot.slane %v3116, 5
        %v3242 = vsel %vm999, %v3240, %v3241
        %v3243 = vrot.slane %v3241, 4
        %v3244 = vrot.slane %v3117, 5
        %v3245 = vsel %vm999, %v3243, %v3244
        %v3246 = vrot.slane %v3118, 5
        %v3247 = vrot.slane %v3246, 4
        %v3248 = vrot.slane %v3119, 5
        %v3249 = vsel %vm999, %v3247, %v3248
        %v3250 = vrot.slane %v3248, 4
        %v3251 = vrot.slane %v3120, 5
        %v3252 = vsel %vm999, %v3250, %v3251
        %v3253 = vrot.slane %v3121, 5
        %v3254 = vrot.slane %v3253, 4
        %v3255 = vrot.slane %v3122, 5
        %v3256 = vsel %vm999, %v3254, %v3255
        %v3257 = vrot.slane %v3255, 4
        %v3258 = vrot.slane %v3123, 5
        %v3259 = vsel %vm999, %v3257, %v3258
        %v3260 = vrot.slane %v3124, 5
        %v3261 = vrot.slane %v3260, 4
        %v3262 = vrot.slane %v3125, 5
        %v3263 = vsel %vm999, %v3261, %v3262
        %v3264 = vrot.slane %v3262, 4
        %v3265 = vrot.slane %v3126, 5
        %v3266 = vsel %vm999, %v3264, %v3265
        %v3267 = vrot.slane %v3127, 5
        %v3268 = vrot.slane %v3267, 4
        %v3269 = vrot.slane %v3128, 5
        %v3270 = vsel %vm999, %v3268, %v3269
        %v3271 = vrot.slane %v3269, 4
        %v3272 = vrot.slane %v3129, 5
        %v3273 = vsel %vm999, %v3271, %v3272
        %v3274 = vrot.slane %v3130, 5
        %v3275 = vrot.slane %v3274, 4
        %v3276 = vrot.slane %v3131, 5
        %v3277 = vsel %vm999, %v3275, %v3276
        %v3278 = vrot.slane %v3276, 4
        %v3279 = vrot.slane %v3132, 5
        %v3280 = vsel %vm999, %v3278, %v3279
        %v3281 = vrot.slane %v3133, 5
        %v3282 = vrot.slane %v3281, 4
        %v3283 = vrot.slane %v3134, 5
        %v3284 = vsel %vm999, %v3282, %v3283
        %v3285 = vrot.slane %v3283, 4
        %v3286 = vrot.slane %v3135, 5
        %v3287 = vsel %vm999, %v3285, %v3286
        %v3288 = vrot.slane %v3136, 5
        %v3289 = vrot.slane %v3288, 4
        %v3290 = vrot.slane %v3137, 5
        %v3291 = vsel %vm999, %v3289, %v3290
        %v3292 = vrot.slane %v3290, 4
        %v3293 = vrot.slane %v3138, 5
        %v3294 = vsel %vm999, %v3292, %v3293
        %v3295 = vrot.slane %v3139, 5
        %v3296 = vrot.slane %v3295, 4
        %v3297 = vrot.slane %v3140, 5
        %v3298 = vsel %vm999, %v3296, %v3297
        %v3299 = vrot.slane %v3297, 4
        %v3300 = vrot.slane %v3141, 5
        %v3301 = vsel %vm999, %v3299, %v3300
        %3302 = vrot.lane.b32.xlu0 %v3193, 32
        %v3303 = vpop.permute.xlu0 %3302
        %3304 = vrot.lane.b32.xlu0 %v3196, 32
        %v3305 = vpop.permute.xlu0 %3304
        %3306 = vrot.lane.b32.xlu0 %v3200, 32
        %v3307 = vpop.permute.xlu0 %3306
        %3308 = vrot.lane.b32.xlu0 %v3203, 32
        %v3309 = vpop.permute.xlu0 %3308
        %3310 = vrot.lane.b32.xlu0 %v3207, 32
        %v3311 = vpop.permute.xlu0 %3310
        %3312 = vrot.lane.b32.xlu0 %v3210, 32
        %v3313 = vpop.permute.xlu0 %3312
        %3314 = vrot.lane.b32.xlu0 %v3214, 32
        %v3315 = vpop.permute.xlu0 %3314
        %3316 = vrot.lane.b32.xlu0 %v3217, 32
        %v3317 = vpop.permute.xlu0 %3316
        %3318 = vrot.lane.b32.xlu0 %v3221, 32
        %v3319 = vpop.permute.xlu0 %3318
        %3320 = vrot.lane.b32.xlu0 %v3224, 32
        %v3321 = vpop.permute.xlu0 %3320
        %3322 = vrot.lane.b32.xlu0 %v3228, 32
        %v3323 = vpop.permute.xlu0 %3322
        %3324 = vrot.lane.b32.xlu0 %v3231, 32
        %v3325 = vpop.permute.xlu0 %3324
        %3326 = vrot.lane.b32.xlu0 %v3235, 32
        %v3327 = vpop.permute.xlu0 %3326
        %3328 = vrot.lane.b32.xlu0 %v3238, 32
        %v3329 = vpop.permute.xlu0 %3328
        %3330 = vrot.lane.b32.xlu0 %v3242, 32
        %v3331 = vpop.permute.xlu0 %3330
        %3332 = vrot.lane.b32.xlu0 %v3245, 32
        %v3333 = vpop.permute.xlu0 %3332
        %3334 = vrot.lane.b32.xlu0 %v3249, 32
        %v3335 = vpop.permute.xlu0 %3334
        %3336 = vrot.lane.b32.xlu0 %v3252, 32
        %v3337 = vpop.permute.xlu0 %3336
        %3338 = vrot.lane.b32.xlu0 %v3256, 32
        %v3339 = vpop.permute.xlu0 %3338
        %3340 = vrot.lane.b32.xlu0 %v3259, 32
        %v3341 = vpop.permute.xlu0 %3340
        %3342 = vrot.lane.b32.xlu0 %v3263, 32
        %v3343 = vpop.permute.xlu0 %3342
        %3344 = vrot.lane.b32.xlu0 %v3266, 32
        %v3345 = vpop.permute.xlu0 %3344
        %3346 = vrot.lane.b32.xlu0 %v3270, 32
        %v3347 = vpop.permute.xlu0 %3346
        %3348 = vrot.lane.b32.xlu0 %v3273, 32
        %v3349 = vpop.permute.xlu0 %3348
        %3350 = vrot.lane.b32.xlu0 %v3277, 32
        %v3351 = vpop.permute.xlu0 %3350
        %3352 = vrot.lane.b32.xlu0 %v3280, 32
        %v3353 = vpop.permute.xlu0 %3352
        %3354 = vrot.lane.b32.xlu0 %v3284, 32
        %v3355 = vpop.permute.xlu0 %3354
        %3356 = vrot.lane.b32.xlu0 %v3287, 32
        %v3357 = vpop.permute.xlu0 %3356
        %3358 = vrot.lane.b32.xlu0 %v3291, 32
        %v3359 = vpop.permute.xlu0 %3358
        %3360 = vrot.lane.b32.xlu0 %v3294, 32
        %v3361 = vpop.permute.xlu0 %3360
        %3362 = vrot.lane.b32.xlu0 %v3298, 32
        %v3363 = vpop.permute.xlu0 %3362
        %3364 = vrot.lane.b32.xlu0 %v3301, 32
        %v3365 = vpop.permute.xlu0 %3364
        %vm3398 = vcmask 290048
        %3399 = vst.msk [vmem:[#allocation2] sm:$0xf] %vm3398, %v3303
        %3400 = vst.msk [vmem:[#allocation2 + $0x4] sm:$0xf] %vm3398, %v3305
        %3401 = vst.msk [vmem:[#allocation2 + $0x8] sm:$0xf] %vm3398, %v3307
        %3402 = vst.msk [vmem:[#allocation2 + $0xc] sm:$0xf] %vm3398, %v3309
        %3403 = vst.msk [vmem:[#allocation2 + $0x10] sm:$0xf] %vm3398, %v3311
        %3404 = vst.msk [vmem:[#allocation2 + $0x14] sm:$0xf] %vm3398, %v3313
        %3405 = vst.msk [vmem:[#allocation2 + $0x18] sm:$0xf] %vm3398, %v3315
        %3406 = vst.msk [vmem:[#allocation2 + $0x1c] sm:$0xf] %vm3398, %v3317
        %3407 = vst.msk [vmem:[#allocation2 + $0x20] sm:$0xf] %vm3398, %v3319
        %3408 = vst.msk [vmem:[#allocation2 + $0x24] sm:$0xf] %vm3398, %v3321
        %3409 = vst.msk [vmem:[#allocation2 + $0x28] sm:$0xf] %vm3398, %v3323
        %3410 = vst.msk [vmem:[#allocation2 + $0x2c] sm:$0xf] %vm3398, %v3325
        %3411 = vst.msk [vmem:[#allocation2 + $0x30] sm:$0xf] %vm3398, %v3327
        %3412 = vst.msk [vmem:[#allocation2 + $0x34] sm:$0xf] %vm3398, %v3329
        %3413 = vst.msk [vmem:[#allocation2 + $0x38] sm:$0xf] %vm3398, %v3331
        %3414 = vst.msk [vmem:[#allocation2 + $0x3c] sm:$0xf] %vm3398, %v3333
        %3415 = vst.msk [vmem:[#allocation2 + $0x40] sm:$0xf] %vm3398, %v3335
        %3416 = vst.msk [vmem:[#allocation2 + $0x44] sm:$0xf] %vm3398, %v3337
        %3417 = vst.msk [vmem:[#allocation2 + $0x48] sm:$0xf] %vm3398, %v3339
        %3418 = vst.msk [vmem:[#allocation2 + $0x4c] sm:$0xf] %vm3398, %v3341
        %3419 = vst.msk [vmem:[#allocation2 + $0x50] sm:$0xf] %vm3398, %v3343
        %3420 = vst.msk [vmem:[#allocation2 + $0x54] sm:$0xf] %vm3398, %v3345
        %3421 = vst.msk [vmem:[#allocation2 + $0x58] sm:$0xf] %vm3398, %v3347
        %3422 = vst.msk [vmem:[#allocation2 + $0x5c] sm:$0xf] %vm3398, %v3349
        %3423 = vst.msk [vmem:[#allocation2 + $0x60] sm:$0xf] %vm3398, %v3351
        %3424 = vst.msk [vmem:[#allocation2 + $0x64] sm:$0xf] %vm3398, %v3353
        %3425 = vst.msk [vmem:[#allocation2 + $0x68] sm:$0xf] %vm3398, %v3355
        %3426 = vst.msk [vmem:[#allocation2 + $0x6c] sm:$0xf] %vm3398, %v3357
        %3427 = vst.msk [vmem:[#allocation2 + $0x70] sm:$0xf] %vm3398, %v3359
        %3428 = vst.msk [vmem:[#allocation2 + $0x74] sm:$0xf] %vm3398, %v3361
        %3429 = vst.msk [vmem:[#allocation2 + $0x78] sm:$0xf] %vm3398, %v3363
        %3430 = vst.msk [vmem:[#allocation2 + $0x7c] sm:$0xf] %vm3398, %v3365
        %v3431 = vld [vmem:[#allocation2] sm:$0xf]
        %v3432 = vld [vmem:[#allocation2 + $0x4] sm:$0xf]
        %v3433 = vld [vmem:[#allocation2 + $0x8] sm:$0xf]
        %v3434 = vld [vmem:[#allocation2 + $0xc] sm:$0xf]
        %v3435 = vld [vmem:[#allocation2 + $0x10] sm:$0xf]
        %v3436 = vld [vmem:[#allocation2 + $0x14] sm:$0xf]
        %v3437 = vld [vmem:[#allocation2 + $0x18] sm:$0xf]
        %v3438 = vld [vmem:[#allocation2 + $0x1c] sm:$0xf]
        %v3439 = vld [vmem:[#allocation2 + $0x20] sm:$0xf]
        %v3440 = vld [vmem:[#allocation2 + $0x24] sm:$0xf]
        %v3441 = vld [vmem:[#allocation2 + $0x28] sm:$0xf]
        %v3442 = vld [vmem:[#allocation2 + $0x2c] sm:$0xf]
        %v3443 = vld [vmem:[#allocation2 + $0x30] sm:$0xf]
        %v3444 = vld [vmem:[#allocation2 + $0x34] sm:$0xf]
        %v3445 = vld [vmem:[#allocation2 + $0x38] sm:$0xf]
        %v3446 = vld [vmem:[#allocation2 + $0x3c] sm:$0xf]
        %v3447 = vld [vmem:[#allocation2 + $0x40] sm:$0xf]
        %v3448 = vld [vmem:[#allocation2 + $0x44] sm:$0xf]
        %v3449 = vld [vmem:[#allocation2 + $0x48] sm:$0xf]
        %v3450 = vld [vmem:[#allocation2 + $0x4c] sm:$0xf]
        %v3451 = vld [vmem:[#allocation2 + $0x50] sm:$0xf]
        %v3452 = vld [vmem:[#allocation2 + $0x54] sm:$0xf]
        %v3453 = vld [vmem:[#allocation2 + $0x58] sm:$0xf]
        %v3454 = vld [vmem:[#allocation2 + $0x5c] sm:$0xf]
        %v3455 = vld [vmem:[#allocation2 + $0x60] sm:$0xf]
        %v3456 = vld [vmem:[#allocation2 + $0x64] sm:$0xf]
        %v3457 = vld [vmem:[#allocation2 + $0x68] sm:$0xf]
        %v3458 = vld [vmem:[#allocation2 + $0x6c] sm:$0xf]
        %v3459 = vld [vmem:[#allocation2 + $0x70] sm:$0xf]
        %v3460 = vld [vmem:[#allocation2 + $0x74] sm:$0xf]
        %v3461 = vld [vmem:[#allocation2 + $0x78] sm:$0xf]
        %v3462 = vld [vmem:[#allocation2 + $0x7c] sm:$0xf]
        %v3463 = vld [vmem:[%s1] sm:$0xf]
        %v3464 = vld [vmem:[%s1 + $0x4] sm:$0xf]
        %v3465 = vld [vmem:[%s1 + $0x8] sm:$0xf]
        %v3466 = vld [vmem:[%s1 + $0xc] sm:$0xf]
        %v3467 = vld [vmem:[%s1 + $0x10] sm:$0x3]
        %v3468 = vld [vmem:[%s2] sm:$0x1]
        %v3470 = vperm.slane %v3468, 0
        %v3504 = vunpack.c.l.b16 %v3431
        %v3505 = vunpack.c.l.b16 %v3432
        %v3506 = vunpack.c.l.b16 %v3433
        %v3507 = vunpack.c.l.b16 %v3434
        %v3508 = vunpack.c.l.b16 %v3435
        %v3509 = vunpack.c.l.b16 %v3436
        %v3510 = vunpack.c.l.b16 %v3437
        %v3511 = vunpack.c.l.b16 %v3438
        %v3512 = vunpack.c.l.b16 %v3439
        %v3513 = vunpack.c.l.b16 %v3440
        %v3514 = vunpack.c.l.b16 %v3441
        %v3515 = vunpack.c.l.b16 %v3442
        %v3516 = vunpack.c.l.b16 %v3443
        %v3517 = vunpack.c.l.b16 %v3444
        %v3518 = vunpack.c.l.b16 %v3445
        %v3519 = vunpack.c.l.b16 %v3446
        %v3520 = vunpack.c.l.b16 %v3447
        %v3521 = vunpack.c.l.b16 %v3448
        %v3522 = vunpack.c.l.b16 %v3449
        %v3523 = vunpack.c.l.b16 %v3450
        %v3524 = vunpack.c.l.b16 %v3451
        %v3525 = vunpack.c.l.b16 %v3452
        %v3526 = vunpack.c.l.b16 %v3453
        %v3527 = vunpack.c.l.b16 %v3454
        %v3528 = vunpack.c.l.b16 %v3455
        %v3529 = vunpack.c.l.b16 %v3456
        %v3530 = vunpack.c.l.b16 %v3457
        %v3531 = vunpack.c.l.b16 %v3458
        %v3532 = vunpack.c.l.b16 %v3459
        %v3533 = vunpack.c.l.b16 %v3460
        %v3534 = vunpack.c.l.b16 %v3461
        %v3535 = vunpack.c.l.b16 %v3462
        %v3536 = vpack.c.b16 %v3505, %v3504
        %v3537 = vpack.c.b16 %v3507, %v3506
        %v3538 = vpack.c.b16 %v3509, %v3508
        %v3539 = vpack.c.b16 %v3511, %v3510
        %v3540 = vpack.c.b16 %v3513, %v3512
        %v3541 = vpack.c.b16 %v3515, %v3514
        %v3542 = vpack.c.b16 %v3517, %v3516
        %v3543 = vpack.c.b16 %v3519, %v3518
        %v3544 = vpack.c.b16 %v3521, %v3520
        %v3545 = vpack.c.b16 %v3523, %v3522
        %v3546 = vpack.c.b16 %v3525, %v3524
        %v3547 = vpack.c.b16 %v3527, %v3526
        %v3548 = vpack.c.b16 %v3529, %v3528
        %v3549 = vpack.c.b16 %v3531, %v3530
        %v3550 = vpack.c.b16 %v3533, %v3532
        %v3551 = vpack.c.b16 %v3535, %v3534
        %v3557 = vunpack.c.l.b16 %v3463
        %v3558 = vunpack.c.l.b16 %v3464
        %v3559 = vunpack.c.l.b16 %v3465
        %v3560 = vunpack.c.l.b16 %v3466
        %v3561 = vunpack.c.l.b16 %v3467
        %v3562 = vpack.c.b16 %v3558, %v3557
        %v3563 = vpack.c.b16 %v3560, %v3559
        %v3564 = vpack.c.b16 %v3561, %v3561
        %vm3567 = vcmask 293888
        %v3569 = vsel %vm3567, %v3536, 0
        %v3572 = vsel %vm3567, %v3537, 0
        %v3575 = vsel %vm3567, %v3538, 0
        %v3578 = vsel %vm3567, %v3539, 0
        %v3581 = vsel %vm3567, %v3540, 0
        %v3584 = vsel %vm3567, %v3541, 0
        %v3587 = vsel %vm3567, %v3542, 0
        %v3590 = vsel %vm3567, %v3543, 0
        %v3593 = vsel %vm3567, %v3544, 0
        %v3596 = vsel %vm3567, %v3545, 0
        %v3599 = vsel %vm3567, %v3546, 0
        %v3602 = vsel %vm3567, %v3547, 0
        %v3605 = vsel %vm3567, %v3548, 0
        %v3608 = vsel %vm3567, %v3549, 0
        %v3611 = vsel %vm3567, %v3550, 0
        %v3614 = vsel %vm3567, %v3551, 0
        %vm3616 = vcmask 1041408
        %v3618 = vsel %vm3616, %v3564, 0
        %3620 = vmatpush.bf16.msra.mxu0 0
        %3621 = vmatpush.bf16.msra.mxu0 0
        %3622 = vmatpush.bf16.msra.mxu0 0
        %3623 = vmatpush.bf16.msra.mxu0 0
        %3624 = vmatpush.bf16.msra.mxu0 0
        %3625 = vmatpush.bf16.msra.mxu0 %v3618
        %3626 = vmatpush.bf16.msra.mxu0 %v3563
        %3627 = vmatpush.bf16.msra.mxu0 %v3562
        %3628 = vmatmul.bf16.gmra.mxu0 %v3569
        %v3629 = vpop.f32.mrf.mxu0
        %v3630 = vadd.f32 %v3470, %v3629
        %v3631 = vpop.f32.mrf.mxu0
        %v3632 = vadd.f32 %v3470, %v3631
        %3633 = vmatmul.bf16.gmra.mxu0 %v3572
        %v3634 = vpop.f32.mrf.mxu0
        %v3635 = vadd.f32 %v3470, %v3634
        %v3636 = vpop.f32.mrf.mxu0
        %v3637 = vadd.f32 %v3470, %v3636
        %3638 = vmatmul.bf16.gmra.mxu0 %v3575
        %v3639 = vpop.f32.mrf.mxu0
        %v3640 = vadd.f32 %v3470, %v3639
        %v3641 = vpop.f32.mrf.mxu0
        %v3642 = vadd.f32 %v3470, %v3641
        %3643 = vmatmul.bf16.gmra.mxu0 %v3578
        %v3644 = vpop.f32.mrf.mxu0
        %v3645 = vadd.f32 %v3470, %v3644
        %v3646 = vpop.f32.mrf.mxu0
        %v3647 = vadd.f32 %v3470, %v3646
        %3648 = vmatmul.bf16.gmra.mxu0 %v3581
        %v3649 = vpop.f32.mrf.mxu0
        %v3650 = vadd.f32 %v3470, %v3649
        %v3651 = vpop.f32.mrf.mxu0
        %v3652 = vadd.f32 %v3470, %v3651
        %3653 = vmatmul.bf16.gmra.mxu0 %v3584
        %v3654 = vpop.f32.mrf.mxu0
        %v3655 = vadd.f32 %v3470, %v3654
        %v3656 = vpop.f32.mrf.mxu0
        %v3657 = vadd.f32 %v3470, %v3656
        %3658 = vmatmul.bf16.gmra.mxu0 %v3587
        %v3659 = vpop.f32.mrf.mxu0
        %v3660 = vadd.f32 %v3470, %v3659
        %v3661 = vpop.f32.mrf.mxu0
        %v3662 = vadd.f32 %v3470, %v3661
        %3663 = vmatmul.bf16.gmra.mxu0 %v3590
        %v3664 = vpop.f32.mrf.mxu0
        %v3665 = vadd.f32 %v3470, %v3664
        %v3666 = vpop.f32.mrf.mxu0
        %v3667 = vadd.f32 %v3470, %v3666
        %3668 = vmatmul.bf16.gmra.mxu0 %v3593
        %v3669 = vpop.f32.mrf.mxu0
        %v3670 = vadd.f32 %v3470, %v3669
        %v3671 = vpop.f32.mrf.mxu0
        %v3672 = vadd.f32 %v3470, %v3671
        %3673 = vmatmul.bf16.gmra.mxu0 %v3596
        %v3674 = vpop.f32.mrf.mxu0
        %v3675 = vadd.f32 %v3470, %v3674
        %v3676 = vpop.f32.mrf.mxu0
        %v3677 = vadd.f32 %v3470, %v3676
        %3678 = vmatmul.bf16.gmra.mxu0 %v3599
        %v3679 = vpop.f32.mrf.mxu0
        %v3680 = vadd.f32 %v3470, %v3679
        %v3681 = vpop.f32.mrf.mxu0
        %v3682 = vadd.f32 %v3470, %v3681
        %3683 = vmatmul.bf16.gmra.mxu0 %v3602
        %v3684 = vpop.f32.mrf.mxu0
        %v3685 = vadd.f32 %v3470, %v3684
        %v3686 = vpop.f32.mrf.mxu0
        %v3687 = vadd.f32 %v3470, %v3686
        %3688 = vmatmul.bf16.gmra.mxu0 %v3605
        %v3689 = vpop.f32.mrf.mxu0
        %v3690 = vadd.f32 %v3470, %v3689
        %v3691 = vpop.f32.mrf.mxu0
        %v3692 = vadd.f32 %v3470, %v3691
        %3693 = vmatmul.bf16.gmra.mxu0 %v3608
        %v3694 = vpop.f32.mrf.mxu0
        %v3695 = vadd.f32 %v3470, %v3694
        %v3696 = vpop.f32.mrf.mxu0
        %v3697 = vadd.f32 %v3470, %v3696
        %3698 = vmatmul.bf16.gmra.mxu0 %v3611
        %v3699 = vpop.f32.mrf.mxu0
        %v3700 = vadd.f32 %v3470, %v3699
        %v3701 = vpop.f32.mrf.mxu0
        %v3702 = vadd.f32 %v3470, %v3701
        %3703 = vmatmul.bf16.gmra.mxu0 %v3614
        %v3704 = vpop.f32.mrf.mxu0
        %v3705 = vadd.f32 %v3470, %v3704
        %v3706 = vpop.f32.mrf.mxu0
        %v3707 = vadd.f32 %v3470, %v3706
        %3708 = vdwg.mxu0
        %s3709 = smul.u32 %s25, 256
        %s3710 = scalar_lea.vmem %s256, %s3709 [#allocation4]
        %3711 = vst [vmem:[%s3710] sm:$0xff] %v3630
        %3712 = vst [vmem:[%s3710 + $0x8] sm:$0xff] %v3632
        %3713 = vst [vmem:[%s3710 + $0x10] sm:$0xff] %v3635
        %3714 = vst [vmem:[%s3710 + $0x18] sm:$0xff] %v3637
        %3715 = vst [vmem:[%s3710 + $0x20] sm:$0xff] %v3640
        %3716 = vst [vmem:[%s3710 + $0x28] sm:$0xff] %v3642
        %3717 = vst [vmem:[%s3710 + $0x30] sm:$0xff] %v3645
        %3718 = vst [vmem:[%s3710 + $0x38] sm:$0xff] %v3647
        %3719 = vst [vmem:[%s3710 + $0x40] sm:$0xff] %v3650
        %3720 = vst [vmem:[%s3710 + $0x48] sm:$0xff] %v3652
        %3721 = vst [vmem:[%s3710 + $0x50] sm:$0xff] %v3655
        %3722 = vst [vmem:[%s3710 + $0x58] sm:$0xff] %v3657
        %3723 = vst [vmem:[%s3710 + $0x60] sm:$0xff] %v3660
        %3724 = vst [vmem:[%s3710 + $0x68] sm:$0xff] %v3662
        %3725 = vst [vmem:[%s3710 + $0x70] sm:$0xff] %v3665
        %3726 = vst [vmem:[%s3710 + $0x78] sm:$0xff] %v3667
        %3727 = vst [vmem:[%s3710 + $0x80] sm:$0xff] %v3670
        %3728 = vst [vmem:[%s3710 + $0x88] sm:$0xff] %v3672
        %3729 = vst [vmem:[%s3710 + $0x90] sm:$0xff] %v3675
        %3730 = vst [vmem:[%s3710 + $0x98] sm:$0xff] %v3677
        %3731 = vst [vmem:[%s3710 + $0xa0] sm:$0xff] %v3680
        %3732 = vst [vmem:[%s3710 + $0xa8] sm:$0xff] %v3682
        %3733 = vst [vmem:[%s3710 + $0xb0] sm:$0xff] %v3685
        %3734 = vst [vmem:[%s3710 + $0xb8] sm:$0xff] %v3687
        %3735 = vst [vmem:[%s3710 + $0xc0] sm:$0xff] %v3690
        %3736 = vst [vmem:[%s3710 + $0xc8] sm:$0xff] %v3692
        %3737 = vst [vmem:[%s3710 + $0xd0] sm:$0xff] %v3695
        %3738 = vst [vmem:[%s3710 + $0xd8] sm:$0xff] %v3697
        %3739 = vst [vmem:[%s3710 + $0xe0] sm:$0xff] %v3700
        %3740 = vst [vmem:[%s3710 + $0xe8] sm:$0xff] %v3702
        %3741 = vst [vmem:[%s3710 + $0xf0] sm:$0xff] %v3705
        %3742 = vst [vmem:[%s3710 + $0xf8] sm:$0xff] %v3707
        %v3743 = vld [vmem:[#allocation3] sm:$0x1]
        %v3744 = vmul.f32 %v3630, %v3630
        %v3745 = vmul.f32 %v3632, %v3632
        %v3746 = vmul.f32 %v3635, %v3635
        %v3747 = vmul.f32 %v3637, %v3637
        %v3748 = vmul.f32 %v3640, %v3640
        %v3749 = vmul.f32 %v3642, %v3642
        %v3750 = vmul.f32 %v3645, %v3645
        %v3751 = vmul.f32 %v3647, %v3647
        %v3752 = vmul.f32 %v3650, %v3650
        %v3753 = vmul.f32 %v3652, %v3652
        %v3754 = vmul.f32 %v3655, %v3655
        %v3755 = vmul.f32 %v3657, %v3657
        %v3756 = vmul.f32 %v3660, %v3660
        %v3757 = vmul.f32 %v3662, %v3662
        %v3758 = vmul.f32 %v3665, %v3665
        %v3759 = vmul.f32 %v3667, %v3667
        %v3760 = vmul.f32 %v3670, %v3670
        %v3761 = vmul.f32 %v3672, %v3672
        %v3762 = vmul.f32 %v3675, %v3675
        %v3763 = vmul.f32 %v3677, %v3677
        %v3764 = vmul.f32 %v3680, %v3680
        %v3765 = vmul.f32 %v3682, %v3682
        %v3766 = vmul.f32 %v3685, %v3685
        %v3767 = vmul.f32 %v3687, %v3687
        %v3768 = vmul.f32 %v3690, %v3690
        %v3769 = vmul.f32 %v3692, %v3692
        %v3770 = vmul.f32 %v3695, %v3695
        %v3771 = vmul.f32 %v3697, %v3697
        %v3772 = vmul.f32 %v3700, %v3700
        %v3773 = vmul.f32 %v3702, %v3702
        %v3774 = vmul.f32 %v3705, %v3705
        %v3775 = vmul.f32 %v3707, %v3707
        %v3776 = vadd.f32 %v3744, %v3745
        %v3777 = vadd.f32 %v3776, %v3746
        %v3778 = vadd.f32 %v3777, %v3747
        %v3779 = vadd.f32 %v3778, %v3748
        %v3780 = vadd.f32 %v3779, %v3749
        %v3781 = vadd.f32 %v3780, %v3750
        %v3782 = vadd.f32 %v3781, %v3751
        %v3783 = vadd.f32 %v3782, %v3752
        %v3784 = vadd.f32 %v3783, %v3753
        %v3785 = vadd.f32 %v3784, %v3754
        %v3786 = vadd.f32 %v3785, %v3755
        %v3787 = vadd.f32 %v3786, %v3756
        %v3788 = vadd.f32 %v3787, %v3757
        %v3789 = vadd.f32 %v3788, %v3758
        %v3790 = vadd.f32 %v3789, %v3759
        %v3791 = vadd.f32 %v3790, %v3760
        %v3792 = vadd.f32 %v3791, %v3761
        %v3793 = vadd.f32 %v3792, %v3762
        %v3794 = vadd.f32 %v3793, %v3763
        %v3795 = vadd.f32 %v3794, %v3764
        %v3796 = vadd.f32 %v3795, %v3765
        %v3797 = vadd.f32 %v3796, %v3766
        %v3798 = vadd.f32 %v3797, %v3767
        %v3799 = vadd.f32 %v3798, %v3768
        %v3800 = vadd.f32 %v3799, %v3769
        %v3801 = vadd.f32 %v3800, %v3770
        %v3802 = vadd.f32 %v3801, %v3771
        %v3803 = vadd.f32 %v3802, %v3772
        %v3804 = vadd.f32 %v3803, %v3773
        %v3805 = vadd.f32 %v3804, %v3774
        %v3806 = vadd.f32 %v3805, %v3775
        %v3807 = vrot.slane %v3806, 4
        %v3808 = vadd.f32 %v3806, %v3807
        %v3809 = vrot.slane %v3808, 2
        %v3810 = vadd.f32 %v3808, %v3809
        %v3811 = vrot.slane %v3810, 1
        %v3812 = vadd.f32 %v3810, %v3811
        %v3813 = vadd.f32 %v3743, %v3812
        %3814 = vst [vmem:[#allocation3] sm:$0x1] %v3813
        // Predicated region
        $region49: #{conv_inst_relu.1} parent=43 // pred_check
          %p3815 = pneg %p263
        $region50: #{conv_inst_relu.1} parent=43 // pred_check_branch
          %3817 = sbr.rel (%p3815) target = $region52
        $region51: #{conv_inst_relu.1} parent=43 // pred_region
          %v3818 = vld [vmem:[%s3] sm:$0x1]
          %v3819 = vld [vmem:[#allocation3] sm:$0x1]
          %v3820 = vmul.f32 %v3819, 0.00390625
          %v3821 = vadd.f32 %v3820, 1e-06
          %v3822 = vrsqrt.pop %v3821
          %v3823 = vmul.f32 %v3822, %v3821
          %v3824 = vmul.f32 %v3823, %v3822
          %v3825 = vmul.f32 0.5, %v3824
          %v3826 = vsub.f32 1.5, %v3825
          %v3827 = vmul.f32 %v3822, %v3826
          %vm3828 = vweird.f32 %v3821
          %vm3829 = vweird.f32 %v3822
          %vm3830 = vmor %vm3828, %vm3829
          %v3831 = vsel %vm3830, %v3822, %v3827
          %v3832 = vmul.f32 %v3818, %v3831
          %v3833 = vld [vmem:[%s4] sm:$0x1]
          %v3834 = vld [vmem:[%s5] sm:$0x1]
          %v3835 = vld [vmem:[%s256] sm:$0xff]
          %v3836 = vld [vmem:[%s256 + $0x8] sm:$0xff]
          %v3837 = vld [vmem:[%s256 + $0x10] sm:$0xff]
          %v3838 = vld [vmem:[%s256 + $0x18] sm:$0xff]
          %v3839 = vld [vmem:[%s256 + $0x20] sm:$0xff]
          %v3840 = vld [vmem:[%s256 + $0x28] sm:$0xff]
          %v3841 = vld [vmem:[%s256 + $0x30] sm:$0xff]
          %v3842 = vld [vmem:[%s256 + $0x38] sm:$0xff]
          %v3843 = vld [vmem:[%s256 + $0x40] sm:$0xff]
          %v3844 = vld [vmem:[%s256 + $0x48] sm:$0xff]
          %v3845 = vld [vmem:[%s256 + $0x50] sm:$0xff]
          %v3846 = vld [vmem:[%s256 + $0x58] sm:$0xff]
          %v3847 = vld [vmem:[%s256 + $0x60] sm:$0xff]
          %v3848 = vld [vmem:[%s256 + $0x68] sm:$0xff]
          %v3849 = vld [vmem:[%s256 + $0x70] sm:$0xff]
          %v3850 = vld [vmem:[%s256 + $0x78] sm:$0xff]
          %v3851 = vld [vmem:[%s256 + $0x80] sm:$0xff]
          %v3852 = vld [vmem:[%s256 + $0x88] sm:$0xff]
          %v3853 = vld [vmem:[%s256 + $0x90] sm:$0xff]
          %v3854 = vld [vmem:[%s256 + $0x98] sm:$0xff]
          %v3855 = vld [vmem:[%s256 + $0xa0] sm:$0xff]
          %v3856 = vld [vmem:[%s256 + $0xa8] sm:$0xff]
          %v3857 = vld [vmem:[%s256 + $0xb0] sm:$0xff]
          %v3858 = vld [vmem:[%s256 + $0xb8] sm:$0xff]
          %v3859 = vld [vmem:[%s256 + $0xc0] sm:$0xff]
          %v3860 = vld [vmem:[%s256 + $0xc8] sm:$0xff]
          %v3861 = vld [vmem:[%s256 + $0xd0] sm:$0xff]
          %v3862 = vld [vmem:[%s256 + $0xd8] sm:$0xff]
          %v3863 = vld [vmem:[%s256 + $0xe0] sm:$0xff]
          %v3864 = vld [vmem:[%s256 + $0xe8] sm:$0xff]
          %v3865 = vld [vmem:[%s256 + $0xf0] sm:$0xff]
          %v3866 = vld [vmem:[%s256 + $0xf8] sm:$0xff]
          %v3868 = vperm.slane %v3832, 0
          %v3870 = vmul.f32 %v3835, %v3868
          %v3871 = vmul.f32 %v3836, %v3868
          %v3872 = vmul.f32 %v3837, %v3868
          %v3873 = vmul.f32 %v3838, %v3868
          %v3874 = vmul.f32 %v3839, %v3868
          %v3875 = vmul.f32 %v3840, %v3868
          %v3876 = vmul.f32 %v3841, %v3868
          %v3877 = vmul.f32 %v3842, %v3868
          %v3878 = vmul.f32 %v3843, %v3868
          %v3879 = vmul.f32 %v3844, %v3868
          %v3880 = vmul.f32 %v3845, %v3868
          %v3881 = vmul.f32 %v3846, %v3868
          %v3882 = vmul.f32 %v3847, %v3868
          %v3883 = vmul.f32 %v3848, %v3868
          %v3884 = vmul.f32 %v3849, %v3868
          %v3885 = vmul.f32 %v3850, %v3868
          %v3886 = vmul.f32 %v3851, %v3868
          %v3887 = vmul.f32 %v3852, %v3868
          %v3888 = vmul.f32 %v3853, %v3868
          %v3889 = vmul.f32 %v3854, %v3868
          %v3890 = vmul.f32 %v3855, %v3868
          %v3891 = vmul.f32 %v3856, %v3868
          %v3892 = vmul.f32 %v3857, %v3868
          %v3893 = vmul.f32 %v3858, %v3868
          %v3894 = vmul.f32 %v3859, %v3868
          %v3895 = vmul.f32 %v3860, %v3868
          %v3896 = vmul.f32 %v3861, %v3868
          %v3897 = vmul.f32 %v3862, %v3868
          %v3898 = vmul.f32 %v3863, %v3868
          %v3899 = vmul.f32 %v3864, %v3868
          %v3900 = vmul.f32 %v3865, %v3868
          %v3901 = vmul.f32 %v3866, %v3868
          %v3903 = vperm.slane %v3833, 0
          %v3905 = vadd.f32 %v3870, %v3903
          %v3906 = vadd.f32 %v3871, %v3903
          %v3907 = vadd.f32 %v3872, %v3903
          %v3908 = vadd.f32 %v3873, %v3903
          %v3909 = vadd.f32 %v3874, %v3903
          %v3910 = vadd.f32 %v3875, %v3903
          %v3911 = vadd.f32 %v3876, %v3903
          %v3912 = vadd.f32 %v3877, %v3903
          %v3913 = vadd.f32 %v3878, %v3903
          %v3914 = vadd.f32 %v3879, %v3903
          %v3915 = vadd.f32 %v3880, %v3903
          %v3916 = vadd.f32 %v3881, %v3903
          %v3917 = vadd.f32 %v3882, %v3903
          %v3918 = vadd.f32 %v3883, %v3903
          %v3919 = vadd.f32 %v3884, %v3903
          %v3920 = vadd.f32 %v3885, %v3903
          %v3921 = vadd.f32 %v3886, %v3903
          %v3922 = vadd.f32 %v3887, %v3903
          %v3923 = vadd.f32 %v3888, %v3903
          %v3924 = vadd.f32 %v3889, %v3903
          %v3925 = vadd.f32 %v3890, %v3903
          %v3926 = vadd.f32 %v3891, %v3903
          %v3927 = vadd.f32 %v3892, %v3903
          %v3928 = vadd.f32 %v3893, %v3903
          %v3929 = vadd.f32 %v3894, %v3903
          %v3930 = vadd.f32 %v3895, %v3903
          %v3931 = vadd.f32 %v3896, %v3903
          %v3932 = vadd.f32 %v3897, %v3903
          %v3933 = vadd.f32 %v3898, %v3903
          %v3934 = vadd.f32 %v3899, %v3903
          %v3935 = vadd.f32 %v3900, %v3903
          %v3936 = vadd.f32 %v3901, %v3903
          %v3938 = vperm.slane %v3834, 0
          %v3940 = vmax.f32 %v3905, %v3938
          %v3941 = vmax.f32 %v3906, %v3938
          %v3942 = vmax.f32 %v3907, %v3938
          %v3943 = vmax.f32 %v3908, %v3938
          %v3944 = vmax.f32 %v3909, %v3938
          %v3945 = vmax.f32 %v3910, %v3938
          %v3946 = vmax.f32 %v3911, %v3938
          %v3947 = vmax.f32 %v3912, %v3938
          %v3948 = vmax.f32 %v3913, %v3938
          %v3949 = vmax.f32 %v3914, %v3938
          %v3950 = vmax.f32 %v3915, %v3938
          %v3951 = vmax.f32 %v3916, %v3938
          %v3952 = vmax.f32 %v3917, %v3938
          %v3953 = vmax.f32 %v3918, %v3938
          %v3954 = vmax.f32 %v3919, %v3938
          %v3955 = vmax.f32 %v3920, %v3938
          %v3956 = vmax.f32 %v3921, %v3938
          %v3957 = vmax.f32 %v3922, %v3938
          %v3958 = vmax.f32 %v3923, %v3938
          %v3959 = vmax.f32 %v3924, %v3938
          %v3960 = vmax.f32 %v3925, %v3938
          %v3961 = vmax.f32 %v3926, %v3938
          %v3962 = vmax.f32 %v3927, %v3938
          %v3963 = vmax.f32 %v3928, %v3938
          %v3964 = vmax.f32 %v3929, %v3938
          %v3965 = vmax.f32 %v3930, %v3938
          %v3966 = vmax.f32 %v3931, %v3938
          %v3967 = vmax.f32 %v3932, %v3938
          %v3968 = vmax.f32 %v3933, %v3938
          %v3969 = vmax.f32 %v3934, %v3938
          %v3970 = vmax.f32 %v3935, %v3938
          %v3971 = vmax.f32 %v3936, %v3938
          %3972 = vst [vmem:[%s256] sm:$0xff] %v3940
          %3973 = vst [vmem:[%s256 + $0x8] sm:$0xff] %v3941
          %3974 = vst [vmem:[%s256 + $0x10] sm:$0xff] %v3942
          %3975 = vst [vmem:[%s256 + $0x18] sm:$0xff] %v3943
          %3976 = vst [vmem:[%s256 + $0x20] sm:$0xff] %v3944
          %3977 = vst [vmem:[%s256 + $0x28] sm:$0xff] %v3945
          %3978 = vst [vmem:[%s256 + $0x30] sm:$0xff] %v3946
          %3979 = vst [vmem:[%s256 + $0x38] sm:$0xff] %v3947
          %3980 = vst [vmem:[%s256 + $0x40] sm:$0xff] %v3948
          %3981 = vst [vmem:[%s256 + $0x48] sm:$0xff] %v3949
          %3982 = vst [vmem:[%s256 + $0x50] sm:$0xff] %v3950
          %3983 = vst [vmem:[%s256 + $0x58] sm:$0xff] %v3951
          %3984 = vst [vmem:[%s256 + $0x60] sm:$0xff] %v3952
          %3985 = vst [vmem:[%s256 + $0x68] sm:$0xff] %v3953
          %3986 = vst [vmem:[%s256 + $0x70] sm:$0xff] %v3954
          %3987 = vst [vmem:[%s256 + $0x78] sm:$0xff] %v3955
          %3988 = vst [vmem:[%s256 + $0x80] sm:$0xff] %v3956
          %3989 = vst [vmem:[%s256 + $0x88] sm:$0xff] %v3957
          %3990 = vst [vmem:[%s256 + $0x90] sm:$0xff] %v3958
          %3991 = vst [vmem:[%s256 + $0x98] sm:$0xff] %v3959
          %3992 = vst [vmem:[%s256 + $0xa0] sm:$0xff] %v3960
          %3993 = vst [vmem:[%s256 + $0xa8] sm:$0xff] %v3961
          %3994 = vst [vmem:[%s256 + $0xb0] sm:$0xff] %v3962
          %3995 = vst [vmem:[%s256 + $0xb8] sm:$0xff] %v3963
          %3996 = vst [vmem:[%s256 + $0xc0] sm:$0xff] %v3964
          %3997 = vst [vmem:[%s256 + $0xc8] sm:$0xff] %v3965
          %3998 = vst [vmem:[%s256 + $0xd0] sm:$0xff] %v3966
          %3999 = vst [vmem:[%s256 + $0xd8] sm:$0xff] %v3967
          %4000 = vst [vmem:[%s256 + $0xe0] sm:$0xff] %v3968
          %4001 = vst [vmem:[%s256 + $0xe8] sm:$0xff] %v3969
          %4002 = vst [vmem:[%s256 + $0xf0] sm:$0xff] %v3970
          %4003 = vst [vmem:[%s256 + $0xf8] sm:$0xff] %v3971
        $region52: #{conv_inst_relu.1} parent=43 // pred_fallthru
          _
        %s4004 = sand.u32 %s171, 1
        %s4005 = scalar_lea.sflag [#allocation5], %s4004
        %s4006 = sand.u32 %s171, 1
        %s4007 = smul.addr %s4006, 256
        %s4008 = scalar_lea.vmem [#allocation4], %s4007
        // Predicated region
        $region53: #{conv_inst_relu.1} parent=43 // pred_check
          %p4009 = pneg %p181
        $region54: #{conv_inst_relu.1} parent=43 // pred_check_branch
          %4011 = sbr.rel (%p4009) target = $region56
        $region55: #{conv_inst_relu.1} parent=43 // pred_region
          %4013 = vsyncadd %s4005, 0
          %s4014 = smul.addr %s24, 32
          %s4015 = smul.addr %s4014, 8
          %s4016 = scalar_lea.hbm %s6, %s4015
          %s4017 = sshll.u32 %s4008, 4
          %s4018 = int_to_ptr.vmem [resolvable:$true] %s4017
          %s4019 = sshll.u32 %s4016, 4
          %s4020 = int_to_ptr.hbm [resolvable:$true] %s4019
          %4025 = dma.vmem_to_hbm [thread:$0]  %s4018, 4096, %s4020, %s4005, 128, 128, 8
        $region56: #{conv_inst_relu.1} parent=43 // pred_fallthru
          _
      $region44: #{conv_inst_relu.1} parent=5 // pred_fallthru
        _
      %p4026 = scmp.le.s32.totalorder 2, %s15
      // Predicated region
      $region57: #{conv_inst_relu.1} parent=5 // pred_check
        %p4027 = pneg %p4026
      $region58: #{conv_inst_relu.1} parent=5 // pred_check_branch
        %4029 = sbr.rel (%p4027) target = $region60
      $region59: #{conv_inst_relu.1} parent=5 // pred_region
        %s4030 = ssub.s32 %s15, 2
        // Predicated region
        $region61: #{conv_inst_relu.1} parent=59 // pred_check
          %p4031 = pneg %p187
        $region62: #{conv_inst_relu.1} parent=59 // pred_check_branch
          %4033 = sbr.rel (%p4031) target = $region64
        $region63: #{conv_inst_relu.1} parent=59 // pred_region
          %s4034 = sand.u32 %s172, 1
          %s4035 = scalar_lea.sflag [#allocation5], %s4034
          %s4036 = sand.u32 %s172, 1
          %s4037 = smul.addr %s4036, 256
          %s4038 = scalar_lea.vmem [#allocation4], %s4037
          %4040 = dma.done %s4035, 4096
        $region64: #{conv_inst_relu.1} parent=59 // pred_fallthru
          _
      $region60: #{conv_inst_relu.1} parent=5 // pred_fallthru
        _
    $region6: #{conv_inst_relu.1} parent=1 // loop_footer
      %s19 = sadd.s32 1, %s15
    $region7: #{conv_inst_relu.1} parent=1 // loop_footer_branch
      %14 = sbr.rel target = $region3
    $region8: #{conv_inst_relu.1} parent=1 // loop_exit
      _
    %4041 = vsyncpa [#allocation5], 1
    %s4042 = scalar_lea.sflag [#allocation5], 1
    %4043 = vsyncpa %s4042, 1

</llo_original>
